<compile_context>
chip_gen: v7x
topology: tpu7x:2x2x1
jax: 0.10.0
libtpu: 0.0.40
codegen_flags: <defaults>
</compile_context>

<pallas_src>
import functools

import jax
import jax.numpy as jnp
from jax.experimental import pallas as pl
from jax.experimental.pallas import tpu as pltpu


_VMEM_LIMIT = 32 * 1024 * 1024  # safe on v5e / v6e / v7x; working set is ~3 MB


# ----------------------------------------------------------------------------
# Kernel 1: fused conv1 (as matmul) + bias + 2x2 max-pool + ReLU
# ----------------------------------------------------------------------------
def _conv_pool_relu_kernel(p0_ref, p1_ref, p2_ref, p3_ref, w_ref, b_ref, o_ref):
    """Each p*_ref is the (TM, 25) patch matrix of one 2x2-pool-window slot.

    y = relu(max_s(P_s @ W) + b)   (bias commutes with the max).
    """
    w = w_ref[...]
    y = jnp.dot(p0_ref[...], w, preferred_element_type=jnp.float32)
    y = jnp.maximum(y, jnp.dot(p1_ref[...], w, preferred_element_type=jnp.float32))
    y = jnp.maximum(y, jnp.dot(p2_ref[...], w, preferred_element_type=jnp.float32))
    y = jnp.maximum(y, jnp.dot(p3_ref[...], w, preferred_element_type=jnp.float32))
    o_ref[...] = jnp.maximum(y + b_ref[...], 0.0)


def conv_pool_relu(p_list, w_pad, b_pad, *, tm=512):
    M, K = p_list[0].shape
    N = w_pad.shape[1]  # 128 (lane-dense, zero-padded channels)
    tm = min(tm, M)
    grid = (pl.cdiv(M, tm),)
    in_specs = [pl.BlockSpec((tm, K), lambda i: (i, 0)) for _ in range(4)]
    in_specs += [
        pl.BlockSpec((K, N), lambda i: (0, 0)),
        pl.BlockSpec((1, N), lambda i: (0, 0)),
    ]
    return pl.pallas_call(
        _conv_pool_relu_kernel,
        out_shape=jax.ShapeDtypeStruct((M, N), jnp.float32),
        grid=grid,
        in_specs=in_specs,
        out_specs=pl.BlockSpec((tm, N), lambda i: (i, 0)),
        compiler_params=pltpu.CompilerParams(
            dimension_semantics=("parallel",),
            vmem_limit_bytes=_VMEM_LIMIT,
        ),
    )(*p_list, w_pad, b_pad)


# ----------------------------------------------------------------------------
# Kernel 2: fused fc1 + ReLU + fc2 + ReLU + fc3 + log_softmax
# ----------------------------------------------------------------------------
def _fc_tail_kernel(x_ref, w1_ref, b1_ref, w2_ref, b2_ref, w3_ref, b3_ref, o_ref):
    h = jnp.dot(x_ref[...], w1_ref[...], preferred_element_type=jnp.float32)
    h = jnp.maximum(h + b1_ref[...], 0.0)
    # TODO(synk): F.dropout is identity here (inference / eval semantics).
    h = jnp.dot(h, w2_ref[...], preferred_element_type=jnp.float32)
    h = jnp.maximum(h + b2_ref[...], 0.0)
    y = jnp.dot(h, w3_ref[...], preferred_element_type=jnp.float32) + b3_ref[...]
    # log_softmax over the lane axis; padded lanes carry bias=-1e30 so they
    # contribute nothing to max/sum.
    m = jnp.max(y, axis=-1, keepdims=True)
    s = y - m
    o_ref[...] = s - jnp.log(jnp.sum(jnp.exp(s), axis=-1, keepdims=True))


def fc_tail(x, w1, b1, w2, b2, w3, b3, *, tb=256):
    B, K = x.shape
    tb = min(tb, B)
    grid = (pl.cdiv(B, tb),)
    return pl.pallas_call(
        _fc_tail_kernel,
        out_shape=jax.ShapeDtypeStruct((B, w3.shape[1]), jnp.float32),
        grid=grid,
        in_specs=[
            pl.BlockSpec((tb, K), lambda i: (i, 0)),
            pl.BlockSpec(w1.shape, lambda i: (0, 0)),
            pl.BlockSpec(b1.shape, lambda i: (0, 0)),
            pl.BlockSpec(w2.shape, lambda i: (0, 0)),
            pl.BlockSpec(b2.shape, lambda i: (0, 0)),
            pl.BlockSpec(w3.shape, lambda i: (0, 0)),
            pl.BlockSpec(b3.shape, lambda i: (0, 0)),
        ],
        out_specs=pl.BlockSpec((tb, w3.shape[1]), lambda i: (i, 0)),
        compiler_params=pltpu.CompilerParams(
            dimension_semantics=("parallel",),
            vmem_limit_bytes=_VMEM_LIMIT,
        ),
    )(x, w1, b1, w2, b2, w3, b3)


# ----------------------------------------------------------------------------
# Glue: patch extraction, weight reshaping/padding, parameter init
# ----------------------------------------------------------------------------
def im2col_1ch(x, k):
    """x: (B, H, W) single channel -> (B, Ho, Wo, k*k), patch index = dy*k+dx."""
    B, H, W = x.shape
    Ho, Wo = H - k + 1, W - k + 1
    cols = [x[:, dy:dy + Ho, dx:dx + Wo] for dy in range(k) for dx in range(k)]
    return jnp.stack(cols, axis=-1)


def conv_w_to_mat(w):
    """PyTorch conv weight (Cout, 1, kh, kw) -> (kh*kw, Cout) matching im2col."""
    Cout, Cin, kh, kw = w.shape
    return jnp.transpose(w, (2, 3, 1, 0)).reshape(kh * kw * Cin, Cout)


def _uniform(key, shape, bound):
    return jax.random.uniform(key, shape, jnp.float32, -bound, bound)


def init_params(key):
    """PyTorch-default-style init: uniform(+-1/sqrt(fan_in))."""
    ks = jax.random.split(key, 8)
    p = {}
    b = 1.0 / (1 * 5 * 5) ** 0.5
    p["conv1_w"] = _uniform(ks[0], (10, 1, 5, 5), b)
    p["conv1_b"] = _uniform(ks[1], (10,), b)
    b = 1.0 / 1440 ** 0.5
    p["fc1_w"] = _uniform(ks[2], (320, 1440), b)
    p["fc1_b"] = _uniform(ks[3], (320,), b)
    b = 1.0 / 320 ** 0.5
    p["fc2_w"] = _uniform(ks[4], (50, 320), b)
    p["fc2_b"] = _uniform(ks[5], (50,), b)
    b = 1.0 / 50 ** 0.5
    p["fc3_w"] = _uniform(ks[6], (10, 50), b)
    p["fc3_b"] = _uniform(ks[7], (10,), b)
    return p


# ----------------------------------------------------------------------------
# Forward pass (mirrors Net1.forward, inference semantics)
# ----------------------------------------------------------------------------
def net1_forward(params, x_nchw):
    B = x_nchw.shape[0]
    x = x_nchw.reshape(B, 28, 28).astype(jnp.float32)      # Cin == 1 squeeze

    # --- conv1 + maxpool(2) + relu, fused in Pallas ------------------------
    cols = im2col_1ch(x, 5)                                 # (B, 24, 24, 25)
    # 4 patch matrices, one per position inside each 2x2 pooling window,
    # rows ordered (b, ph, pw) with ph, pw in [0, 12).
    p_list = [cols[:, di::2, dj::2, :].reshape(B * 144, 25)
              for di in (0, 1) for dj in (0, 1)]
    wc = conv_w_to_mat(params["conv1_w"])                   # (25, 10)
    wc_pad = jnp.pad(wc, ((0, 0), (0, 128 - 10)))           # lane-dense N=128
    bc_pad = jnp.pad(params["conv1_b"].reshape(1, 10), ((0, 0), (0, 128 - 10)))
    y = conv_pool_relu(p_list, wc_pad, bc_pad)              # (B*144, 128)

    # flatten (padded channels are exactly 0; drop them) -> (B, 1440) in
    # (ph, pw, c) order; the (c, ph, pw) PyTorch order is absorbed into w1.
    act = y.reshape(B, 144, 128)[:, :, :10].reshape(B, 1440)

    # --- fc1 -> relu -> fc2 -> relu -> fc3 -> log_softmax, fused -----------
    w1 = (params["fc1_w"].reshape(320, 10, 144)             # [n, c, s]
          .transpose(0, 2, 1).reshape(320, 1440).T)         # [(s*10+c), n]
    b1 = params["fc1_b"].reshape(1, 320)
    w2 = params["fc2_w"].T                                  # (320, 50)
    b2 = params["fc2_b"].reshape(1, 50)
    w3 = jnp.pad(params["fc3_w"].T, ((0, 0), (0, 128 - 10)))  # (50, 128)
    b3 = jnp.concatenate(
        [params["fc3_b"].reshape(1, 10),
         jnp.full((1, 128 - 10), -1e30, jnp.float32)], axis=1)

    out = fc_tail(act, w1, b1, w2, b2, w3, b3)              # (B, 128)
    return out[:, :10]                                      # (B, 10) log-probs


# ----------------------------------------------------------------------------
# Pure-JAX reference for correctness checking
# ----------------------------------------------------------------------------
def net1_reference(params, x_nchw):
    B = x_nchw.shape[0]
    x = x_nchw.astype(jnp.float32)
    y = jax.lax.conv_general_dilated(
        x, params["conv1_w"], window_strides=(1, 1), padding="VALID",
        dimension_numbers=("NCHW", "OIHW", "NCHW"),
        precision=jax.lax.Precision.HIGHEST)
    y = y + params["conv1_b"][None, :, None, None]          # (B, 10, 24, 24)
    y = y.reshape(B, 10, 12, 2, 12, 2).max(axis=(3, 5))     # 2x2 max-pool
    y = jnp.maximum(y, 0.0).reshape(B, 1440)
    dot = functools.partial(jnp.dot, precision=jax.lax.Precision.HIGHEST)
    h = jnp.maximum(dot(y, params["fc1_w"].T) + params["fc1_b"], 0.0)
    h = jnp.maximum(dot(h, params["fc2_w"].T) + params["fc2_b"], 0.0)
    o = dot(h, params["fc3_w"].T) + params["fc3_b"]
    return jax.nn.log_softmax(o, axis=-1)


if __name__ == "__main__":
    key = jax.random.PRNGKey(0)
    pkey, xkey = jax.random.split(key)
    params = init_params(pkey)
    x = jax.random.normal(xkey, (2, 1, 28, 28), jnp.float32)

    out = jax.jit(net1_forward)(params, x)
    out = jax.block_until_ready(out)

    assert out.shape == (2, 10) and out.dtype == jnp.float32
    assert bool(jnp.all(jnp.isfinite(out)))
    # log_softmax rows must exponentiate-sum to ~1
    assert bool(jnp.all(jnp.abs(jnp.exp(out).sum(axis=-1) - 1.0) < 1e-4))
    # compare against pure-JAX reference
    ref = net1_reference(params, x)
    assert bool(jnp.allclose(out, ref, atol=1e-2, rtol=1e-2))
    print("KERNEL_OK")
</pallas_src>

<mosaic_0001>
module attributes {stable_mosaic.version = 11 : i64} {
  func.func @_conv_pool_relu_kernel(%arg0: i32, %arg1: memref<288x25xf32, #tpu.memory_space<vmem>>, %arg2: memref<288x25xf32, #tpu.memory_space<vmem>>, %arg3: memref<288x25xf32, #tpu.memory_space<vmem>>, %arg4: memref<288x25xf32, #tpu.memory_space<vmem>>, %arg5: memref<25x128xf32, #tpu.memory_space<vmem>>, %arg6: memref<1x128xf32, #tpu.memory_space<vmem>>, %arg7: memref<288x128xf32, #tpu.memory_space<vmem>>) attributes {dimension_semantics = [#tpu.dimension_semantics<parallel>], iteration_bounds = array<i64: 1>, scalar_prefetch = 0 : i64, scratch_operands = 0 : i64, tpu.core_type = #tpu.core_type<tc>, window_params = [{transform_indices = @transform_0, window_bounds = array<i64: 288, 25>}, {transform_indices = @transform_1, window_bounds = array<i64: 288, 25>}, {transform_indices = @transform_2, window_bounds = array<i64: 288, 25>}, {transform_indices = @transform_3, window_bounds = array<i64: 288, 25>}, {pipeline_mode = #tpu.pipeline_mode<synchronous>, transform_indices = @transform_4, window_bounds = array<i64: 25, 128>}, {pipeline_mode = #tpu.pipeline_mode<synchronous>, transform_indices = @transform_5, window_bounds = array<i64: 1, 128>}, {transform_indices = @transform_6, window_bounds = array<i64: 288, 128>}]} {
    %c0 = arith.constant 0 : index
    %c0_0 = arith.constant 0 : index
    %0 = vector.load %arg5[%c0, %c0_0] : memref<25x128xf32, #tpu.memory_space<vmem>>, vector<25x128xf32>
    %c0_1 = arith.constant 0 : index
    %c0_2 = arith.constant 0 : index
    %1 = vector.load %arg1[%c0_1, %c0_2] : memref<288x25xf32, #tpu.memory_space<vmem>>, vector<288x25xf32>
    %cst = arith.constant dense<0.000000e+00> : vector<288x128xf32>
    %2 = tpu.matmul %1, %0, %cst {dimension_numbers = #tpu.dot_dimension_numbers<[1], [0], [0], [1], [0, 0, 1, 1], [], []>} : vector<288x25xf32>, vector<25x128xf32>, vector<288x128xf32> -> vector<288x128xf32>
    %c0_3 = arith.constant 0 : index
    %c0_4 = arith.constant 0 : index
    %3 = vector.load %arg2[%c0_3, %c0_4] : memref<288x25xf32, #tpu.memory_space<vmem>>, vector<288x25xf32>
    %cst_5 = arith.constant dense<0.000000e+00> : vector<288x128xf32>
    %4 = tpu.matmul %3, %0, %cst_5 {dimension_numbers = #tpu.dot_dimension_numbers<[1], [0], [0], [1], [0, 0, 1, 1], [], []>} : vector<288x25xf32>, vector<25x128xf32>, vector<288x128xf32> -> vector<288x128xf32>
    %5 = arith.maximumf %2, %4 : vector<288x128xf32>
    %c0_6 = arith.constant 0 : index
    %c0_7 = arith.constant 0 : index
    %6 = vector.load %arg3[%c0_6, %c0_7] : memref<288x25xf32, #tpu.memory_space<vmem>>, vector<288x25xf32>
    %cst_8 = arith.constant dense<0.000000e+00> : vector<288x128xf32>
    %7 = tpu.matmul %6, %0, %cst_8 {dimension_numbers = #tpu.dot_dimension_numbers<[1], [0], [0], [1], [0, 0, 1, 1], [], []>} : vector<288x25xf32>, vector<25x128xf32>, vector<288x128xf32> -> vector<288x128xf32>
    %8 = arith.maximumf %5, %7 : vector<288x128xf32>
    %c0_9 = arith.constant 0 : index
    %c0_10 = arith.constant 0 : index
    %9 = vector.load %arg4[%c0_9, %c0_10] : memref<288x25xf32, #tpu.memory_space<vmem>>, vector<288x25xf32>
    %cst_11 = arith.constant dense<0.000000e+00> : vector<288x128xf32>
    %10 = tpu.matmul %9, %0, %cst_11 {dimension_numbers = #tpu.dot_dimension_numbers<[1], [0], [0], [1], [0, 0, 1, 1], [], []>} : vector<288x25xf32>, vector<25x128xf32>, vector<288x128xf32> -> vector<288x128xf32>
    %11 = arith.maximumf %8, %10 : vector<288x128xf32>
    %c0_12 = arith.constant 0 : index
    %c0_13 = arith.constant 0 : index
    %12 = vector.load %arg6[%c0_12, %c0_13] : memref<1x128xf32, #tpu.memory_space<vmem>>, vector<1x128xf32>
    %13 = vector.broadcast %12 : vector<1x128xf32> to vector<288x128xf32>
    %14 = arith.addf %11, %13 : vector<288x128xf32>
    %cst_14 = arith.constant 0.000000e+00 : f32
    %15 = vector.broadcast %cst_14 : f32 to vector<288x128xf32>
    %16 = arith.maximumf %14, %15 : vector<288x128xf32>
    %c0_15 = arith.constant 0 : index
    %c0_16 = arith.constant 0 : index
    %17 = vector.load %arg7[%c0_15, %c0_16] : memref<288x128xf32, #tpu.memory_space<vmem>>, vector<288x128xf32>
    tpu.vector_store %arg7[%c0_15, %c0_16], %16 {strides = array<i32>} : memref<288x128xf32, #tpu.memory_space<vmem>>, vector<288x128xf32>,
    return
  }
  func.func @transform_0(%arg0: i32) -> (i32, i32) {
    %c0_i32 = arith.constant 0 : i32
    %c0_i32_0 = arith.constant 0 : i32
    return %arg0, %c0_i32 : i32, i32
  }
  func.func @transform_1(%arg0: i32) -> (i32, i32) {
    %c0_i32 = arith.constant 0 : i32
    %c0_i32_0 = arith.constant 0 : i32
    return %arg0, %c0_i32 : i32, i32
  }
  func.func @transform_2(%arg0: i32) -> (i32, i32) {
    %c0_i32 = arith.constant 0 : i32
    %c0_i32_0 = arith.constant 0 : i32
    return %arg0, %c0_i32 : i32, i32
  }
  func.func @transform_3(%arg0: i32) -> (i32, i32) {
    %c0_i32 = arith.constant 0 : i32
    %c0_i32_0 = arith.constant 0 : i32
    return %arg0, %c0_i32 : i32, i32
  }
  func.func @transform_4(%arg0: i32) -> (i32, i32) {
    %c0_i32 = arith.constant 0 : i32
    %c0_i32_0 = arith.constant 0 : i32
    %c0_i32_1 = arith.constant 0 : i32
    return %c0_i32, %c0_i32_0 : i32, i32
  }
  func.func @transform_5(%arg0: i32) -> (i32, i32) {
    %c0_i32 = arith.constant 0 : i32
    %c0_i32_0 = arith.constant 0 : i32
    %c0_i32_1 = arith.constant 0 : i32
    return %c0_i32, %c0_i32_0 : i32, i32
  }
  func.func @transform_6(%arg0: i32) -> (i32, i32) {
    %c0_i32 = arith.constant 0 : i32
    %c0_i32_0 = arith.constant 0 : i32
    return %arg0, %c0_i32 : i32, i32
  }
}

module attributes {stable_mosaic.version = 11 : i64} {
  func.func @_fc_tail_kernel(%arg0: i32, %arg1: memref<2x1440xf32, #tpu.memory_space<vmem>>, %arg2: memref<1440x320xf32, #tpu.memory_space<vmem>>, %arg3: memref<1x320xf32, #tpu.memory_space<vmem>>, %arg4: memref<320x50xf32, #tpu.memory_space<vmem>>, %arg5: memref<1x50xf32, #tpu.memory_space<vmem>>, %arg6: memref<50x128xf32, #tpu.memory_space<vmem>>, %arg7: memref<1x128xf32, #tpu.memory_space<vmem>>, %arg8: memref<2x128xf32, #tpu.memory_space<vmem>>) attributes {dimension_semantics = [#tpu.dimension_semantics<parallel>], iteration_bounds = array<i64: 1>, scalar_prefetch = 0 : i64, scratch_operands = 0 : i64, tpu.core_type = #tpu.core_type<tc>, window_params = [{transform_indices = @transform_0, window_bounds = array<i64: 2, 1440>}, {pipeline_mode = #tpu.pipeline_mode<synchronous>, transform_indices = @transform_1, window_bounds = array<i64: 1440, 320>}, {pipeline_mode = #tpu.pipeline_mode<synchronous>, transform_indices = @transform_2, window_bounds = array<i64: 1, 320>}, {pipeline_mode = #tpu.pipeline_mode<synchronous>, transform_indices = @transform_3, window_bounds = array<i64: 320, 50>}, {pipeline_mode = #tpu.pipeline_mode<synchronous>, transform_indices = @transform_4, window_bounds = array<i64: 1, 50>}, {pipeline_mode = #tpu.pipeline_mode<synchronous>, transform_indices = @transform_5, window_bounds = array<i64: 50, 128>}, {pipeline_mode = #tpu.pipeline_mode<synchronous>, transform_indices = @transform_6, window_bounds = array<i64: 1, 128>}, {transform_indices = @transform_7, window_bounds = array<i64: 2, 128>}]} {
    %c0 = arith.constant 0 : index
    %c0_0 = arith.constant 0 : index
    %0 = vector.load %arg1[%c0, %c0_0] : memref<2x1440xf32, #tpu.memory_space<vmem>>, vector<2x1440xf32>
    %c0_1 = arith.constant 0 : index
    %c0_2 = arith.constant 0 : index
    %1 = vector.load %arg2[%c0_1, %c0_2] : memref<1440x320xf32, #tpu.memory_space<vmem>>, vector<1440x320xf32>
    %cst = arith.constant dense<0.000000e+00> : vector<2x320xf32>
    %2 = tpu.matmul %0, %1, %cst {dimension_numbers = #tpu.dot_dimension_numbers<[1], [0], [0], [1], [0, 0, 1, 1], [], []>} : vector<2x1440xf32>, vector<1440x320xf32>, vector<2x320xf32> -> vector<2x320xf32>
    %c0_3 = arith.constant 0 : index
    %c0_4 = arith.constant 0 : index
    %3 = vector.load %arg3[%c0_3, %c0_4] : memref<1x320xf32, #tpu.memory_space<vmem>>, vector<1x320xf32>
    %4 = vector.broadcast %3 : vector<1x320xf32> to vector<2x320xf32>
    %5 = arith.addf %2, %4 : vector<2x320xf32>
    %cst_5 = arith.constant 0.000000e+00 : f32
    %6 = vector.broadcast %cst_5 : f32 to vector<2x320xf32>
    %7 = arith.maximumf %5, %6 : vector<2x320xf32>
    %c0_6 = arith.constant 0 : index
    %c0_7 = arith.constant 0 : index
    %8 = vector.load %arg4[%c0_6, %c0_7] : memref<320x50xf32, #tpu.memory_space<vmem>>, vector<320x50xf32>
    %cst_8 = arith.constant dense<0.000000e+00> : vector<2x50xf32>
    %9 = tpu.matmul %7, %8, %cst_8 {dimension_numbers = #tpu.dot_dimension_numbers<[1], [0], [0], [1], [0, 0, 1, 1], [], []>} : vector<2x320xf32>, vector<320x50xf32>, vector<2x50xf32> -> vector<2x50xf32>
    %c0_9 = arith.constant 0 : index
    %c0_10 = arith.constant 0 : index
    %10 = vector.load %arg5[%c0_9, %c0_10] : memref<1x50xf32, #tpu.memory_space<vmem>>, vector<1x50xf32>
    %11 = vector.broadcast %10 : vector<1x50xf32> to vector<2x50xf32>
    %12 = arith.addf %9, %11 : vector<2x50xf32>
    %cst_11 = arith.constant 0.000000e+00 : f32
    %13 = vector.broadcast %cst_11 : f32 to vector<2x50xf32>
    %14 = arith.maximumf %12, %13 : vector<2x50xf32>
    %c0_12 = arith.constant 0 : index
    %c0_13 = arith.constant 0 : index
    %15 = vector.load %arg6[%c0_12, %c0_13] : memref<50x128xf32, #tpu.memory_space<vmem>>, vector<50x128xf32>
    %cst_14 = arith.constant dense<0.000000e+00> : vector<2x128xf32>
    %16 = tpu.matmul %14, %15, %cst_14 {dimension_numbers = #tpu.dot_dimension_numbers<[1], [0], [0], [1], [0, 0, 1, 1], [], []>} : vector<2x50xf32>, vector<50x128xf32>, vector<2x128xf32> -> vector<2x128xf32>
    %c0_15 = arith.constant 0 : index
    %c0_16 = arith.constant 0 : index
    %17 = vector.load %arg7[%c0_15, %c0_16] : memref<1x128xf32, #tpu.memory_space<vmem>>, vector<1x128xf32>
    %18 = vector.broadcast %17 : vector<1x128xf32> to vector<2x128xf32>
    %19 = arith.addf %16, %18 : vector<2x128xf32>
    %cst_17 = arith.constant dense<0xFF800000> : vector<2xf32>
    %20 = vector.multi_reduction <maximumf>, %19, %cst_17 [1] : vector<2x128xf32> to vector<2xf32>
    %21 = vector.shape_cast %20 : vector<2xf32> to vector<2x1xf32>
    %22 = vector.broadcast %21 : vector<2x1xf32> to vector<2x128xf32>
    %23 = arith.subf %19, %22 : vector<2x128xf32>
    %24 = math.exp %23 : vector<2x128xf32>
    %cst_18 = arith.constant dense<0.000000e+00> : vector<2xf32>
    %25 = vector.multi_reduction <add>, %24, %cst_18 [1] : vector<2x128xf32> to vector<2xf32>
    %26 = vector.shape_cast %25 : vector<2xf32> to vector<2x1xf32>
    %27 = math.log %26 : vector<2x1xf32>
    %28 = vector.broadcast %27 : vector<2x1xf32> to vector<2x128xf32>
    %29 = arith.subf %23, %28 : vector<2x128xf32>
    %c0_19 = arith.constant 0 : index
    %c0_20 = arith.constant 0 : index
    %30 = vector.load %arg8[%c0_19, %c0_20] : memref<2x128xf32, #tpu.memory_space<vmem>>, vector<2x128xf32>
    tpu.vector_store %arg8[%c0_19, %c0_20], %29 {strides = array<i32>} : memref<2x128xf32, #tpu.memory_space<vmem>>, vector<2x128xf32>,
    return
  }
  func.func @transform_0(%arg0: i32) -> (i32, i32) {
    %c0_i32 = arith.constant 0 : i32
    %c0_i32_0 = arith.constant 0 : i32
    return %arg0, %c0_i32 : i32, i32
  }
  func.func @transform_1(%arg0: i32) -> (i32, i32) {
    %c0_i32 = arith.constant 0 : i32
    %c0_i32_0 = arith.constant 0 : i32
    %c0_i32_1 = arith.constant 0 : i32
    return %c0_i32, %c0_i32_0 : i32, i32
  }
  func.func @transform_2(%arg0: i32) -> (i32, i32) {
    %c0_i32 = arith.constant 0 : i32
    %c0_i32_0 = arith.constant 0 : i32
    %c0_i32_1 = arith.constant 0 : i32
    return %c0_i32, %c0_i32_0 : i32, i32
  }
  func.func @transform_3(%arg0: i32) -> (i32, i32) {
    %c0_i32 = arith.constant 0 : i32
    %c0_i32_0 = arith.constant 0 : i32
    %c0_i32_1 = arith.constant 0 : i32
    return %c0_i32, %c0_i32_0 : i32, i32
  }
  func.func @transform_4(%arg0: i32) -> (i32, i32) {
    %c0_i32 = arith.constant 0 : i32
    %c0_i32_0 = arith.constant 0 : i32
    %c0_i32_1 = arith.constant 0 : i32
    return %c0_i32, %c0_i32_0 : i32, i32
  }
  func.func @transform_5(%arg0: i32) -> (i32, i32) {
    %c0_i32 = arith.constant 0 : i32
    %c0_i32_0 = arith.constant 0 : i32
    %c0_i32_1 = arith.constant 0 : i32
    return %c0_i32, %c0_i32_0 : i32, i32
  }
  func.func @transform_6(%arg0: i32) -> (i32, i32) {
    %c0_i32 = arith.constant 0 : i32
    %c0_i32_0 = arith.constant 0 : i32
    %c0_i32_1 = arith.constant 0 : i32
    return %c0_i32, %c0_i32_0 : i32, i32
  }
  func.func @transform_7(%arg0: i32) -> (i32, i32) {
    %c0_i32 = arith.constant 0 : i32
    %c0_i32_0 = arith.constant 0 : i32
    return %arg0, %c0_i32 : i32, i32
  }
}

</mosaic_0001>

<llo_original>
// kernel: net1_forward.2
$region0: #{net1_forward.2}
  #allocation0 [shape = 'u32[]', space=smem, size = 0x4, offset = 0x4, fixed_abs, tag = 'smem constant byte address 0x4 - core index']
  #allocation1 [shape = 'u32[144,128]{1,0:T(1,128)}', space=vmem, size = 0x12000, scoped, tag = 'internal scratch']
  %s0 = inlined_call_operand.vmem [shape: f32[288,25], index: 0, kind: input, shape index: {}]
  %s1 = inlined_call_operand.vmem [shape: f32[288,25], index: 1, kind: input, shape index: {}]
  %s2 = inlined_call_operand.vmem [shape: f32[288,25], index: 2, kind: input, shape index: {}]
  %s3 = inlined_call_operand.vmem [shape: f32[288,25], index: 3, kind: input, shape index: {}]
  %s4 = inlined_call_operand.vmem [shape: f32[25,128], index: 4, kind: input, shape index: {}]
  %s5 = inlined_call_operand.vmem [shape: f32[1,128], index: 5, kind: input, shape index: {}]
  %s6 = inlined_call_operand.vmem [shape: f32[288,128], index: 6, kind: output, shape index: {}]
  %s7 = sld [smem:[#allocation0]]
  $region34: #{net1_forward.2} parent=0
    _
  %s9 = ssub.s32 1, %s7
  %s10 = scalar_select 0, %s9, %s7
  // Predicated region
  $region2: #{net1_forward.2} parent=0 // pred_check
    _
  $region3: #{net1_forward.2} parent=0 // pred_check_branch
    %12 = sbr.rel (0) target = $region5
  $region4: #{net1_forward.2} parent=0 // pred_region
    _
  $region5: #{net1_forward.2} parent=0 // pred_fallthru
    _
  // Predicated region
  $region6: #{net1_forward.2} parent=0 // pred_check
    _
  $region7: #{net1_forward.2} parent=0 // pred_check_branch
    %14 = sbr.rel (0) target = $region9
  $region8: #{net1_forward.2} parent=0 // pred_region
    _
  $region9: #{net1_forward.2} parent=0 // pred_fallthru
    _
  // Predicated region
  $region10: #{net1_forward.2} parent=0 // pred_check
    _
  $region11: #{net1_forward.2} parent=0 // pred_check_branch
    %16 = sbr.rel (0) target = $region13
  $region12: #{net1_forward.2} parent=0 // pred_region
    _
  $region13: #{net1_forward.2} parent=0 // pred_fallthru
    _
  // Predicated region
  $region14: #{net1_forward.2} parent=0 // pred_check
    _
  $region15: #{net1_forward.2} parent=0 // pred_check_branch
    %18 = sbr.rel (0) target = $region17
  $region16: #{net1_forward.2} parent=0 // pred_region
    _
  $region17: #{net1_forward.2} parent=0 // pred_fallthru
    _
  // Predicated region
  $region18: #{net1_forward.2} parent=0 // pred_check
    _
  $region19: #{net1_forward.2} parent=0 // pred_check_branch
    %20 = sbr.rel (0) target = $region21
  $region20: #{net1_forward.2} parent=0 // pred_region
    _
  $region21: #{net1_forward.2} parent=0 // pred_fallthru
    _
  // Predicated region
  $region22: #{net1_forward.2} parent=0 // pred_check
    _
  $region23: #{net1_forward.2} parent=0 // pred_check_branch
    %22 = sbr.rel (0) target = $region25
  $region24: #{net1_forward.2} parent=0 // pred_region
    _
  $region25: #{net1_forward.2} parent=0 // pred_fallthru
    _
  %v23 = vld [vmem:[%s4] sm:$0xff]
  %v24 = vld [vmem:[%s4 + $0x8] sm:$0xff]
  %v25 = vld [vmem:[%s4 + $0x10] sm:$0xff]
  %v26 = vld [vmem:[%s4 + $0x18] sm:$0x1]
  %v27 = vld [vmem:[%s0] sm:$0xff]
  %v28 = vld [vmem:[%s0 + $0x8] sm:$0xff]
  %v29 = vld [vmem:[%s0 + $0x10] sm:$0xff]
  %v30 = vld [vmem:[%s0 + $0x18] sm:$0xff]
  %v31 = vld [vmem:[%s0 + $0x20] sm:$0xff]
  %v32 = vld [vmem:[%s0 + $0x28] sm:$0xff]
  %v33 = vld [vmem:[%s0 + $0x30] sm:$0xff]
  %v34 = vld [vmem:[%s0 + $0x38] sm:$0xff]
  %v35 = vld [vmem:[%s0 + $0x40] sm:$0xff]
  %v36 = vld [vmem:[%s0 + $0x48] sm:$0xff]
  %v37 = vld [vmem:[%s0 + $0x50] sm:$0xff]
  %v38 = vld [vmem:[%s0 + $0x58] sm:$0xff]
  %v39 = vld [vmem:[%s0 + $0x60] sm:$0xff]
  %v40 = vld [vmem:[%s0 + $0x68] sm:$0xff]
  %v41 = vld [vmem:[%s0 + $0x70] sm:$0xff]
  %v42 = vld [vmem:[%s0 + $0x78] sm:$0xff]
  %v43 = vld [vmem:[%s0 + $0x80] sm:$0xff]
  %v44 = vld [vmem:[%s0 + $0x88] sm:$0xff]
  %v45 = vld [vmem:[%s0 + $0x90] sm:$0xff]
  %v46 = vld [vmem:[%s0 + $0x98] sm:$0xff]
  %v47 = vld [vmem:[%s0 + $0xa0] sm:$0xff]
  %v48 = vld [vmem:[%s0 + $0xa8] sm:$0xff]
  %v49 = vld [vmem:[%s0 + $0xb0] sm:$0xff]
  %v50 = vld [vmem:[%s0 + $0xb8] sm:$0xff]
  %v51 = vld [vmem:[%s0 + $0xc0] sm:$0xff]
  %v52 = vld [vmem:[%s0 + $0xc8] sm:$0xff]
  %v53 = vld [vmem:[%s0 + $0xd0] sm:$0xff]
  %v54 = vld [vmem:[%s0 + $0xd8] sm:$0xff]
  %v55 = vld [vmem:[%s0 + $0xe0] sm:$0xff]
  %v56 = vld [vmem:[%s0 + $0xe8] sm:$0xff]
  %v57 = vld [vmem:[%s0 + $0xf0] sm:$0xff]
  %v58 = vld [vmem:[%s0 + $0xf8] sm:$0xff]
  %v59 = vld [vmem:[%s0 + $0x100] sm:$0xff]
  %v60 = vld [vmem:[%s0 + $0x108] sm:$0xff]
  %v61 = vld [vmem:[%s0 + $0x110] sm:$0xff]
  %v62 = vld [vmem:[%s0 + $0x118] sm:$0xff]
  %vm63 = vcmask 203776
  %v65 = vsel %vm63, %v27, 0
  %v68 = vsel %vm63, %v28, 0
  %v71 = vsel %vm63, %v29, 0
  %v74 = vsel %vm63, %v30, 0
  %v77 = vsel %vm63, %v31, 0
  %v80 = vsel %vm63, %v32, 0
  %v83 = vsel %vm63, %v33, 0
  %v86 = vsel %vm63, %v34, 0
  %v89 = vsel %vm63, %v35, 0
  %v92 = vsel %vm63, %v36, 0
  %v95 = vsel %vm63, %v37, 0
  %v98 = vsel %vm63, %v38, 0
  %v101 = vsel %vm63, %v39, 0
  %v104 = vsel %vm63, %v40, 0
  %v107 = vsel %vm63, %v41, 0
  %v110 = vsel %vm63, %v42, 0
  %v113 = vsel %vm63, %v43, 0
  %v116 = vsel %vm63, %v44, 0
  %v119 = vsel %vm63, %v45, 0
  %v122 = vsel %vm63, %v46, 0
  %v125 = vsel %vm63, %v47, 0
  %v128 = vsel %vm63, %v48, 0
  %v131 = vsel %vm63, %v49, 0
  %v134 = vsel %vm63, %v50, 0
  %v137 = vsel %vm63, %v51, 0
  %v140 = vsel %vm63, %v52, 0
  %v143 = vsel %vm63, %v53, 0
  %v146 = vsel %vm63, %v54, 0
  %v149 = vsel %vm63, %v55, 0
  %v152 = vsel %vm63, %v56, 0
  %v155 = vsel %vm63, %v57, 0
  %v158 = vsel %vm63, %v58, 0
  %v161 = vsel %vm63, %v59, 0
  %v164 = vsel %vm63, %v60, 0
  %v167 = vsel %vm63, %v61, 0
  %v170 = vsel %vm63, %v62, 0
  %vm172 = vcmask 1040384
  %v174 = vsel %vm172, %v26, 0
  %176 = vmatprep.subr.mxu0 0.0
  %177 = vmatpush1.msra.mxu0 %v23
  %178 = vmatprep.subr.mxu0 0.0
  %179 = vmatpush1.msra.mxu0 %v24
  %180 = vmatprep.subr.mxu0 0.0
  %181 = vmatpush1.msra.mxu0 %v25
  %182 = vmatprep.subr.mxu0 0.0
  %183 = vmatpush1.msra.mxu0 %v174
  %184 = vmatprep.subr.mxu0 0.0
  %185 = vmatpush1.msra.mxu0 0.0
  %186 = vmatprep.subr.mxu0 0.0
  %187 = vmatpush1.msra.mxu0 0.0
  %188 = vmatprep.subr.mxu0 0.0
  %189 = vmatpush1.msra.mxu0 0.0
  %190 = vmatprep.subr.mxu0 0.0
  %191 = vmatpush1.msra.mxu0 0.0
  %192 = vmatprep.subr.mxu0 0.0
  %193 = vmatpush1.msra.mxu0 0.0
  %194 = vmatprep.subr.mxu0 0.0
  %195 = vmatpush1.msra.mxu0 0.0
  %196 = vmatprep.subr.mxu0 0.0
  %197 = vmatpush1.msra.mxu0 0.0
  %198 = vmatprep.subr.mxu0 0.0
  %199 = vmatpush1.msra.mxu0 0.0
  %200 = vmatprep.subr.mxu0 0.0
  %201 = vmatpush1.msra.mxu0 0.0
  %202 = vmatprep.subr.mxu0 0.0
  %203 = vmatpush1.msra.mxu0 0.0
  %204 = vmatprep.subr.mxu0 0.0
  %205 = vmatpush1.msra.mxu0 0.0
  %206 = vmatprep.subr.mxu0 0.0
  %207 = vmatpush1.msra.mxu0 0.0
  %208 = vmatprep.subr.mxu0 0.0
  %209 = vmatpush1.msra.mxu0 0.0
  %210 = vmatprep.subr.mxu0 0.0
  %211 = vmatpush1.msra.mxu0 0.0
  %212 = vmatprep.subr.mxu0 0.0
  %213 = vmatpush1.msra.mxu0 0.0
  %214 = vmatprep.subr.mxu0 0.0
  %215 = vmatpush1.msra.mxu0 0.0
  %216 = vmatprep.subr.mxu0 0.0
  %217 = vmatpush1.msra.mxu0 0.0
  %218 = vmatprep.subr.mxu0 0.0
  %219 = vmatpush1.msra.mxu0 0.0
  %220 = vmatprep.subr.mxu0 0.0
  %221 = vmatpush1.msra.mxu0 0.0
  %222 = vmatprep.subr.mxu0 0.0
  %223 = vmatpush1.msra.mxu0 0.0
  %224 = vmatprep.subr.mxu0 0.0
  %225 = vmatpush1.msra.mxu0 0.0
  %226 = vmatprep.subr.mxu0 0.0
  %227 = vmatpush1.msra.mxu0 0.0
  %228 = vmatprep.subr.mxu0 0.0
  %229 = vmatpush1.msra.mxu0 0.0
  %230 = vmatprep.subr.mxu0 0.0
  %231 = vmatpush1.msra.mxu0 0.0
  %232 = vmatprep.subr.mxu0 0.0
  %233 = vmatpush1.msra.mxu0 0.0
  %234 = vmatprep.subr.mxu0 0.0
  %235 = vmatpush1.msra.mxu0 0.0
  %236 = vmatprep.subr.mxu0 0.0
  %237 = vmatpush1.msra.mxu0 0.0
  %238 = vmatprep.subr.mxu0 0.0
  %239 = vmatpush1.msra.mxu0 0.0
  %240 = vmatprep.mubr.f32.mxu0 0.0
  %241 = vmatmul.mubr.f32.gmra.mrb[0].mxu0 %v65
  %v242 = vpop.f32.mrb[0].mxu0
  %v243 = vadd.f32 0.0, %v242
  %v244 = vpop.f32.mrb[0].mxu0
  %245 = vmatprep.mubr.f32.mxu0 0.0
  %246 = vmatmul.mubr.f32.gmra.mrb[0].mxu0 %v68
  %v247 = vpop.f32.mrb[0].mxu0
  %v248 = vadd.f32 0.0, %v247
  %v249 = vpop.f32.mrb[0].mxu0
  %250 = vmatprep.mubr.f32.mxu0 0.0
  %251 = vmatmul.mubr.f32.gmra.mrb[0].mxu0 %v71
  %v252 = vpop.f32.mrb[0].mxu0
  %v253 = vadd.f32 0.0, %v252
  %v254 = vpop.f32.mrb[0].mxu0
  %255 = vmatprep.mubr.f32.mxu0 0.0
  %256 = vmatmul.mubr.f32.gmra.mrb[0].mxu0 %v74
  %v257 = vpop.f32.mrb[0].mxu0
  %v258 = vadd.f32 0.0, %v257
  %v259 = vpop.f32.mrb[0].mxu0
  %260 = vmatprep.mubr.f32.mxu0 0.0
  %261 = vmatmul.mubr.f32.gmra.mrb[0].mxu0 %v77
  %v262 = vpop.f32.mrb[0].mxu0
  %v263 = vadd.f32 0.0, %v262
  %v264 = vpop.f32.mrb[0].mxu0
  %265 = vmatprep.mubr.f32.mxu0 0.0
  %266 = vmatmul.mubr.f32.gmra.mrb[0].mxu0 %v80
  %v267 = vpop.f32.mrb[0].mxu0
  %v268 = vadd.f32 0.0, %v267
  %v269 = vpop.f32.mrb[0].mxu0
  %270 = vmatprep.mubr.f32.mxu0 0.0
  %271 = vmatmul.mubr.f32.gmra.mrb[0].mxu0 %v83
  %v272 = vpop.f32.mrb[0].mxu0
  %v273 = vadd.f32 0.0, %v272
  %v274 = vpop.f32.mrb[0].mxu0
  %275 = vmatprep.mubr.f32.mxu0 0.0
  %276 = vmatmul.mubr.f32.gmra.mrb[0].mxu0 %v86
  %v277 = vpop.f32.mrb[0].mxu0
  %v278 = vadd.f32 0.0, %v277
  %v279 = vpop.f32.mrb[0].mxu0
  %280 = vmatprep.mubr.f32.mxu0 0.0
  %281 = vmatmul.mubr.f32.gmra.mrb[0].mxu0 %v89
  %v282 = vpop.f32.mrb[0].mxu0
  %v283 = vadd.f32 0.0, %v282
  %v284 = vpop.f32.mrb[0].mxu0
  %285 = vmatprep.mubr.f32.mxu0 0.0
  %286 = vmatmul.mubr.f32.gmra.mrb[0].mxu0 %v92
  %v287 = vpop.f32.mrb[0].mxu0
  %v288 = vadd.f32 0.0, %v287
  %v289 = vpop.f32.mrb[0].mxu0
  %290 = vmatprep.mubr.f32.mxu0 0.0
  %291 = vmatmul.mubr.f32.gmra.mrb[0].mxu0 %v95
  %v292 = vpop.f32.mrb[0].mxu0
  %v293 = vadd.f32 0.0, %v292
  %v294 = vpop.f32.mrb[0].mxu0
  %295 = vmatprep.mubr.f32.mxu0 0.0
  %296 = vmatmul.mubr.f32.gmra.mrb[0].mxu0 %v98
  %v297 = vpop.f32.mrb[0].mxu0
  %v298 = vadd.f32 0.0, %v297
  %v299 = vpop.f32.mrb[0].mxu0
  %300 = vmatprep.mubr.f32.mxu0 0.0
  %301 = vmatmul.mubr.f32.gmra.mrb[0].mxu0 %v101
  %v302 = vpop.f32.mrb[0].mxu0
  %v303 = vadd.f32 0.0, %v302
  %v304 = vpop.f32.mrb[0].mxu0
  %305 = vmatprep.mubr.f32.mxu0 0.0
  %306 = vmatmul.mubr.f32.gmra.mrb[0].mxu0 %v104
  %v307 = vpop.f32.mrb[0].mxu0
  %v308 = vadd.f32 0.0, %v307
  %v309 = vpop.f32.mrb[0].mxu0
  %310 = vmatprep.mubr.f32.mxu0 0.0
  %311 = vmatmul.mubr.f32.gmra.mrb[0].mxu0 %v107
  %v312 = vpop.f32.mrb[0].mxu0
  %v313 = vadd.f32 0.0, %v312
  %v314 = vpop.f32.mrb[0].mxu0
  %315 = vmatprep.mubr.f32.mxu0 0.0
  %316 = vmatmul.mubr.f32.gmra.mrb[0].mxu0 %v110
  %v317 = vpop.f32.mrb[0].mxu0
  %v318 = vadd.f32 0.0, %v317
  %v319 = vpop.f32.mrb[0].mxu0
  %320 = vmatprep.mubr.f32.mxu0 0.0
  %321 = vmatmul.mubr.f32.gmra.mrb[0].mxu0 %v113
  %v322 = vpop.f32.mrb[0].mxu0
  %v323 = vadd.f32 0.0, %v322
  %v324 = vpop.f32.mrb[0].mxu0
  %325 = vmatprep.mubr.f32.mxu0 0.0
  %326 = vmatmul.mubr.f32.gmra.mrb[0].mxu0 %v116
  %v327 = vpop.f32.mrb[0].mxu0
  %v328 = vadd.f32 0.0, %v327
  %v329 = vpop.f32.mrb[0].mxu0
  %330 = vmatprep.mubr.f32.mxu0 0.0
  %331 = vmatmul.mubr.f32.gmra.mrb[0].mxu0 %v119
  %v332 = vpop.f32.mrb[0].mxu0
  %v333 = vadd.f32 0.0, %v332
  %v334 = vpop.f32.mrb[0].mxu0
  %335 = vmatprep.mubr.f32.mxu0 0.0
  %336 = vmatmul.mubr.f32.gmra.mrb[0].mxu0 %v122
  %v337 = vpop.f32.mrb[0].mxu0
  %v338 = vadd.f32 0.0, %v337
  %v339 = vpop.f32.mrb[0].mxu0
  %340 = vmatprep.mubr.f32.mxu0 0.0
  %341 = vmatmul.mubr.f32.gmra.mrb[0].mxu0 %v125
  %v342 = vpop.f32.mrb[0].mxu0
  %v343 = vadd.f32 0.0, %v342
  %v344 = vpop.f32.mrb[0].mxu0
  %345 = vmatprep.mubr.f32.mxu0 0.0
  %346 = vmatmul.mubr.f32.gmra.mrb[0].mxu0 %v128
  %v347 = vpop.f32.mrb[0].mxu0
  %v348 = vadd.f32 0.0, %v347
  %v349 = vpop.f32.mrb[0].mxu0
  %350 = vmatprep.mubr.f32.mxu0 0.0
  %351 = vmatmul.mubr.f32.gmra.mrb[0].mxu0 %v131
  %v352 = vpop.f32.mrb[0].mxu0
  %v353 = vadd.f32 0.0, %v352
  %v354 = vpop.f32.mrb[0].mxu0
  %355 = vmatprep.mubr.f32.mxu0 0.0
  %356 = vmatmul.mubr.f32.gmra.mrb[0].mxu0 %v134
  %v357 = vpop.f32.mrb[0].mxu0
  %v358 = vadd.f32 0.0, %v357
  %v359 = vpop.f32.mrb[0].mxu0
  %360 = vmatprep.mubr.f32.mxu0 0.0
  %361 = vmatmul.mubr.f32.gmra.mrb[0].mxu0 %v137
  %v362 = vpop.f32.mrb[0].mxu0
  %v363 = vadd.f32 0.0, %v362
  %v364 = vpop.f32.mrb[0].mxu0
  %365 = vmatprep.mubr.f32.mxu0 0.0
  %366 = vmatmul.mubr.f32.gmra.mrb[0].mxu0 %v140
  %v367 = vpop.f32.mrb[0].mxu0
  %v368 = vadd.f32 0.0, %v367
  %v369 = vpop.f32.mrb[0].mxu0
  %370 = vmatprep.mubr.f32.mxu0 0.0
  %371 = vmatmul.mubr.f32.gmra.mrb[0].mxu0 %v143
  %v372 = vpop.f32.mrb[0].mxu0
  %v373 = vadd.f32 0.0, %v372
  %v374 = vpop.f32.mrb[0].mxu0
  %375 = vmatprep.mubr.f32.mxu0 0.0
  %376 = vmatmul.mubr.f32.gmra.mrb[0].mxu0 %v146
  %v377 = vpop.f32.mrb[0].mxu0
  %v378 = vadd.f32 0.0, %v377
  %v379 = vpop.f32.mrb[0].mxu0
  %380 = vmatprep.mubr.f32.mxu0 0.0
  %381 = vmatmul.mubr.f32.gmra.mrb[0].mxu0 %v149
  %v382 = vpop.f32.mrb[0].mxu0
  %v383 = vadd.f32 0.0, %v382
  %v384 = vpop.f32.mrb[0].mxu0
  %385 = vmatprep.mubr.f32.mxu0 0.0
  %386 = vmatmul.mubr.f32.gmra.mrb[0].mxu0 %v152
  %v387 = vpop.f32.mrb[0].mxu0
  %v388 = vadd.f32 0.0, %v387
  %v389 = vpop.f32.mrb[0].mxu0
  %390 = vmatprep.mubr.f32.mxu0 0.0
  %391 = vmatmul.mubr.f32.gmra.mrb[0].mxu0 %v155
  %v392 = vpop.f32.mrb[0].mxu0
  %v393 = vadd.f32 0.0, %v392
  %v394 = vpop.f32.mrb[0].mxu0
  %395 = vmatprep.mubr.f32.mxu0 0.0
  %396 = vmatmul.mubr.f32.gmra.mrb[0].mxu0 %v158
  %v397 = vpop.f32.mrb[0].mxu0
  %v398 = vadd.f32 0.0, %v397
  %v399 = vpop.f32.mrb[0].mxu0
  %400 = vmatprep.mubr.f32.mxu0 0.0
  %401 = vmatmul.mubr.f32.gmra.mrb[0].mxu0 %v161
  %v402 = vpop.f32.mrb[0].mxu0
  %v403 = vadd.f32 0.0, %v402
  %v404 = vpop.f32.mrb[0].mxu0
  %405 = vmatprep.mubr.f32.mxu0 0.0
  %406 = vmatmul.mubr.f32.gmra.mrb[0].mxu0 %v164
  %v407 = vpop.f32.mrb[0].mxu0
  %v408 = vadd.f32 0.0, %v407
  %v409 = vpop.f32.mrb[0].mxu0
  %410 = vmatprep.mubr.f32.mxu0 0.0
  %411 = vmatmul.mubr.f32.gmra.mrb[0].mxu0 %v167
  %v412 = vpop.f32.mrb[0].mxu0
  %v413 = vadd.f32 0.0, %v412
  %v414 = vpop.f32.mrb[0].mxu0
  %415 = vmatprep.mubr.f32.mxu0 0.0
  %416 = vmatmul.mubr.f32.gmra.mrb[0].mxu0 %v170
  %v417 = vpop.f32.mrb[0].mxu0
  %v418 = vadd.f32 0.0, %v417
  %v419 = vpop.f32.mrb[0].mxu0
  %420 = vdwg.mxu0
  %v421 = vld [vmem:[%s1] sm:$0xff]
  %v422 = vld [vmem:[%s1 + $0x8] sm:$0xff]
  %v423 = vld [vmem:[%s1 + $0x10] sm:$0xff]
  %v424 = vld [vmem:[%s1 + $0x18] sm:$0xff]
  %v425 = vld [vmem:[%s1 + $0x20] sm:$0xff]
  %v426 = vld [vmem:[%s1 + $0x28] sm:$0xff]
  %v427 = vld [vmem:[%s1 + $0x30] sm:$0xff]
  %v428 = vld [vmem:[%s1 + $0x38] sm:$0xff]
  %v429 = vld [vmem:[%s1 + $0x40] sm:$0xff]
  %v430 = vld [vmem:[%s1 + $0x48] sm:$0xff]
  %v431 = vld [vmem:[%s1 + $0x50] sm:$0xff]
  %v432 = vld [vmem:[%s1 + $0x58] sm:$0xff]
  %v433 = vld [vmem:[%s1 + $0x60] sm:$0xff]
  %v434 = vld [vmem:[%s1 + $0x68] sm:$0xff]
  %v435 = vld [vmem:[%s1 + $0x70] sm:$0xff]
  %v436 = vld [vmem:[%s1 + $0x78] sm:$0xff]
  %v437 = vld [vmem:[%s1 + $0x80] sm:$0xff]
  %v438 = vld [vmem:[%s1 + $0x88] sm:$0xff]
  %v439 = vld [vmem:[%s1 + $0x90] sm:$0xff]
  %v440 = vld [vmem:[%s1 + $0x98] sm:$0xff]
  %v441 = vld [vmem:[%s1 + $0xa0] sm:$0xff]
  %v442 = vld [vmem:[%s1 + $0xa8] sm:$0xff]
  %v443 = vld [vmem:[%s1 + $0xb0] sm:$0xff]
  %v444 = vld [vmem:[%s1 + $0xb8] sm:$0xff]
  %v445 = vld [vmem:[%s1 + $0xc0] sm:$0xff]
  %v446 = vld [vmem:[%s1 + $0xc8] sm:$0xff]
  %v447 = vld [vmem:[%s1 + $0xd0] sm:$0xff]
  %v448 = vld [vmem:[%s1 + $0xd8] sm:$0xff]
  %v449 = vld [vmem:[%s1 + $0xe0] sm:$0xff]
  %v450 = vld [vmem:[%s1 + $0xe8] sm:$0xff]
  %v451 = vld [vmem:[%s1 + $0xf0] sm:$0xff]
  %v452 = vld [vmem:[%s1 + $0xf8] sm:$0xff]
  %v453 = vld [vmem:[%s1 + $0x100] sm:$0xff]
  %v454 = vld [vmem:[%s1 + $0x108] sm:$0xff]
  %v455 = vld [vmem:[%s1 + $0x110] sm:$0xff]
  %v456 = vld [vmem:[%s1 + $0x118] sm:$0xff]
  %v458 = vsel %vm63, %v421, 0
  %v461 = vsel %vm63, %v422, 0
  %v464 = vsel %vm63, %v423, 0
  %v467 = vsel %vm63, %v424, 0
  %v470 = vsel %vm63, %v425, 0
  %v473 = vsel %vm63, %v426, 0
  %v476 = vsel %vm63, %v427, 0
  %v479 = vsel %vm63, %v428, 0
  %v482 = vsel %vm63, %v429, 0
  %v485 = vsel %vm63, %v430, 0
  %v488 = vsel %vm63, %v431, 0
  %v491 = vsel %vm63, %v432, 0
  %v494 = vsel %vm63, %v433, 0
  %v497 = vsel %vm63, %v434, 0
  %v500 = vsel %vm63, %v435, 0
  %v503 = vsel %vm63, %v436, 0
  %v506 = vsel %vm63, %v437, 0
  %v509 = vsel %vm63, %v438, 0
  %v512 = vsel %vm63, %v439, 0
  %v515 = vsel %vm63, %v440, 0
  %v518 = vsel %vm63, %v441, 0
  %v521 = vsel %vm63, %v442, 0
  %v524 = vsel %vm63, %v443, 0
  %v527 = vsel %vm63, %v444, 0
  %v530 = vsel %vm63, %v445, 0
  %v533 = vsel %vm63, %v446, 0
  %v536 = vsel %vm63, %v447, 0
  %v539 = vsel %vm63, %v448, 0
  %v542 = vsel %vm63, %v449, 0
  %v545 = vsel %vm63, %v450, 0
  %v548 = vsel %vm63, %v451, 0
  %v551 = vsel %vm63, %v452, 0
  %v554 = vsel %vm63, %v453, 0
  %v557 = vsel %vm63, %v454, 0
  %v560 = vsel %vm63, %v455, 0
  %v563 = vsel %vm63, %v456, 0
  %565 = vmatprep.subr.mxu0 0.0
  %566 = vmatpush1.msra.mxu0 %v23
  %567 = vmatprep.subr.mxu0 0.0
  %568 = vmatpush1.msra.mxu0 %v24
  %569 = vmatprep.subr.mxu0 0.0
  %570 = vmatpush1.msra.mxu0 %v25
  %571 = vmatprep.subr.mxu0 0.0
  %572 = vmatpush1.msra.mxu0 %v174
  %573 = vmatprep.subr.mxu0 0.0
  %574 = vmatpush1.msra.mxu0 0.0
  %575 = vmatprep.subr.mxu0 0.0
  %576 = vmatpush1.msra.mxu0 0.0
  %577 = vmatprep.subr.mxu0 0.0
  %578 = vmatpush1.msra.mxu0 0.0
  %579 = vmatprep.subr.mxu0 0.0
  %580 = vmatpush1.msra.mxu0 0.0
  %581 = vmatprep.subr.mxu0 0.0
  %582 = vmatpush1.msra.mxu0 0.0
  %583 = vmatprep.subr.mxu0 0.0
  %584 = vmatpush1.msra.mxu0 0.0
  %585 = vmatprep.subr.mxu0 0.0
  %586 = vmatpush1.msra.mxu0 0.0
  %587 = vmatprep.subr.mxu0 0.0
  %588 = vmatpush1.msra.mxu0 0.0
  %589 = vmatprep.subr.mxu0 0.0
  %590 = vmatpush1.msra.mxu0 0.0
  %591 = vmatprep.subr.mxu0 0.0
  %592 = vmatpush1.msra.mxu0 0.0
  %593 = vmatprep.subr.mxu0 0.0
  %594 = vmatpush1.msra.mxu0 0.0
  %595 = vmatprep.subr.mxu0 0.0
  %596 = vmatpush1.msra.mxu0 0.0
  %597 = vmatprep.subr.mxu0 0.0
  %598 = vmatpush1.msra.mxu0 0.0
  %599 = vmatprep.subr.mxu0 0.0
  %600 = vmatpush1.msra.mxu0 0.0
  %601 = vmatprep.subr.mxu0 0.0
  %602 = vmatpush1.msra.mxu0 0.0
  %603 = vmatprep.subr.mxu0 0.0
  %604 = vmatpush1.msra.mxu0 0.0
  %605 = vmatprep.subr.mxu0 0.0
  %606 = vmatpush1.msra.mxu0 0.0
  %607 = vmatprep.subr.mxu0 0.0
  %608 = vmatpush1.msra.mxu0 0.0
  %609 = vmatprep.subr.mxu0 0.0
  %610 = vmatpush1.msra.mxu0 0.0
  %611 = vmatprep.subr.mxu0 0.0
  %612 = vmatpush1.msra.mxu0 0.0
  %613 = vmatprep.subr.mxu0 0.0
  %614 = vmatpush1.msra.mxu0 0.0
  %615 = vmatprep.subr.mxu0 0.0
  %616 = vmatpush1.msra.mxu0 0.0
  %617 = vmatprep.subr.mxu0 0.0
  %618 = vmatpush1.msra.mxu0 0.0
  %619 = vmatprep.subr.mxu0 0.0
  %620 = vmatpush1.msra.mxu0 0.0
  %621 = vmatprep.subr.mxu0 0.0
  %622 = vmatpush1.msra.mxu0 0.0
  %623 = vmatprep.subr.mxu0 0.0
  %624 = vmatpush1.msra.mxu0 0.0
  %625 = vmatprep.subr.mxu0 0.0
  %626 = vmatpush1.msra.mxu0 0.0
  %627 = vmatprep.subr.mxu0 0.0
  %628 = vmatpush1.msra.mxu0 0.0
  %629 = vmatprep.mubr.f32.mxu0 0.0
  %630 = vmatmul.mubr.f32.gmra.mrb[0].mxu0 %v458
  %v631 = vpop.f32.mrb[0].mxu0
  %v632 = vadd.f32 0.0, %v631
  %v633 = vpop.f32.mrb[0].mxu0
  %634 = vmatprep.mubr.f32.mxu0 0.0
  %635 = vmatmul.mubr.f32.gmra.mrb[0].mxu0 %v461
  %v636 = vpop.f32.mrb[0].mxu0
  %v637 = vadd.f32 0.0, %v636
  %v638 = vpop.f32.mrb[0].mxu0
  %639 = vmatprep.mubr.f32.mxu0 0.0
  %640 = vmatmul.mubr.f32.gmra.mrb[0].mxu0 %v464
  %v641 = vpop.f32.mrb[0].mxu0
  %v642 = vadd.f32 0.0, %v641
  %v643 = vpop.f32.mrb[0].mxu0
  %644 = vmatprep.mubr.f32.mxu0 0.0
  %645 = vmatmul.mubr.f32.gmra.mrb[0].mxu0 %v467
  %v646 = vpop.f32.mrb[0].mxu0
  %v647 = vadd.f32 0.0, %v646
  %v648 = vpop.f32.mrb[0].mxu0
  %649 = vmatprep.mubr.f32.mxu0 0.0
  %650 = vmatmul.mubr.f32.gmra.mrb[0].mxu0 %v470
  %v651 = vpop.f32.mrb[0].mxu0
  %v652 = vadd.f32 0.0, %v651
  %v653 = vpop.f32.mrb[0].mxu0
  %654 = vmatprep.mubr.f32.mxu0 0.0
  %655 = vmatmul.mubr.f32.gmra.mrb[0].mxu0 %v473
  %v656 = vpop.f32.mrb[0].mxu0
  %v657 = vadd.f32 0.0, %v656
  %v658 = vpop.f32.mrb[0].mxu0
  %659 = vmatprep.mubr.f32.mxu0 0.0
  %660 = vmatmul.mubr.f32.gmra.mrb[0].mxu0 %v476
  %v661 = vpop.f32.mrb[0].mxu0
  %v662 = vadd.f32 0.0, %v661
  %v663 = vpop.f32.mrb[0].mxu0
  %664 = vmatprep.mubr.f32.mxu0 0.0
  %665 = vmatmul.mubr.f32.gmra.mrb[0].mxu0 %v479
  %v666 = vpop.f32.mrb[0].mxu0
  %v667 = vadd.f32 0.0, %v666
  %v668 = vpop.f32.mrb[0].mxu0
  %669 = vmatprep.mubr.f32.mxu0 0.0
  %670 = vmatmul.mubr.f32.gmra.mrb[0].mxu0 %v482
  %v671 = vpop.f32.mrb[0].mxu0
  %v672 = vadd.f32 0.0, %v671
  %v673 = vpop.f32.mrb[0].mxu0
  %674 = vmatprep.mubr.f32.mxu0 0.0
  %675 = vmatmul.mubr.f32.gmra.mrb[0].mxu0 %v485
  %v676 = vpop.f32.mrb[0].mxu0
  %v677 = vadd.f32 0.0, %v676
  %v678 = vpop.f32.mrb[0].mxu0
  %679 = vmatprep.mubr.f32.mxu0 0.0
  %680 = vmatmul.mubr.f32.gmra.mrb[0].mxu0 %v488
  %v681 = vpop.f32.mrb[0].mxu0
  %v682 = vadd.f32 0.0, %v681
  %v683 = vpop.f32.mrb[0].mxu0
  %684 = vmatprep.mubr.f32.mxu0 0.0
  %685 = vmatmul.mubr.f32.gmra.mrb[0].mxu0 %v491
  %v686 = vpop.f32.mrb[0].mxu0
  %v687 = vadd.f32 0.0, %v686
  %v688 = vpop.f32.mrb[0].mxu0
  %689 = vmatprep.mubr.f32.mxu0 0.0
  %690 = vmatmul.mubr.f32.gmra.mrb[0].mxu0 %v494
  %v691 = vpop.f32.mrb[0].mxu0
  %v692 = vadd.f32 0.0, %v691
  %v693 = vpop.f32.mrb[0].mxu0
  %694 = vmatprep.mubr.f32.mxu0 0.0
  %695 = vmatmul.mubr.f32.gmra.mrb[0].mxu0 %v497
  %v696 = vpop.f32.mrb[0].mxu0
  %v697 = vadd.f32 0.0, %v696
  %v698 = vpop.f32.mrb[0].mxu0
  %699 = vmatprep.mubr.f32.mxu0 0.0
  %700 = vmatmul.mubr.f32.gmra.mrb[0].mxu0 %v500
  %v701 = vpop.f32.mrb[0].mxu0
  %v702 = vadd.f32 0.0, %v701
  %v703 = vpop.f32.mrb[0].mxu0
  %704 = vmatprep.mubr.f32.mxu0 0.0
  %705 = vmatmul.mubr.f32.gmra.mrb[0].mxu0 %v503
  %v706 = vpop.f32.mrb[0].mxu0
  %v707 = vadd.f32 0.0, %v706
  %v708 = vpop.f32.mrb[0].mxu0
  %709 = vmatprep.mubr.f32.mxu0 0.0
  %710 = vmatmul.mubr.f32.gmra.mrb[0].mxu0 %v506
  %v711 = vpop.f32.mrb[0].mxu0
  %v712 = vadd.f32 0.0, %v711
  %v713 = vpop.f32.mrb[0].mxu0
  %714 = vmatprep.mubr.f32.mxu0 0.0
  %715 = vmatmul.mubr.f32.gmra.mrb[0].mxu0 %v509
  %v716 = vpop.f32.mrb[0].mxu0
  %v717 = vadd.f32 0.0, %v716
  %v718 = vpop.f32.mrb[0].mxu0
  %719 = vmatprep.mubr.f32.mxu0 0.0
  %720 = vmatmul.mubr.f32.gmra.mrb[0].mxu0 %v512
  %v721 = vpop.f32.mrb[0].mxu0
  %v722 = vadd.f32 0.0, %v721
  %v723 = vpop.f32.mrb[0].mxu0
  %724 = vmatprep.mubr.f32.mxu0 0.0
  %725 = vmatmul.mubr.f32.gmra.mrb[0].mxu0 %v515
  %v726 = vpop.f32.mrb[0].mxu0
  %v727 = vadd.f32 0.0, %v726
  %v728 = vpop.f32.mrb[0].mxu0
  %729 = vmatprep.mubr.f32.mxu0 0.0
  %730 = vmatmul.mubr.f32.gmra.mrb[0].mxu0 %v518
  %v731 = vpop.f32.mrb[0].mxu0
  %v732 = vadd.f32 0.0, %v731
  %v733 = vpop.f32.mrb[0].mxu0
  %734 = vmatprep.mubr.f32.mxu0 0.0
  %735 = vmatmul.mubr.f32.gmra.mrb[0].mxu0 %v521
  %v736 = vpop.f32.mrb[0].mxu0
  %v737 = vadd.f32 0.0, %v736
  %v738 = vpop.f32.mrb[0].mxu0
  %739 = vmatprep.mubr.f32.mxu0 0.0
  %740 = vmatmul.mubr.f32.gmra.mrb[0].mxu0 %v524
  %v741 = vpop.f32.mrb[0].mxu0
  %v742 = vadd.f32 0.0, %v741
  %v743 = vpop.f32.mrb[0].mxu0
  %744 = vmatprep.mubr.f32.mxu0 0.0
  %745 = vmatmul.mubr.f32.gmra.mrb[0].mxu0 %v527
  %v746 = vpop.f32.mrb[0].mxu0
  %v747 = vadd.f32 0.0, %v746
  %v748 = vpop.f32.mrb[0].mxu0
  %749 = vmatprep.mubr.f32.mxu0 0.0
  %750 = vmatmul.mubr.f32.gmra.mrb[0].mxu0 %v530
  %v751 = vpop.f32.mrb[0].mxu0
  %v752 = vadd.f32 0.0, %v751
  %v753 = vpop.f32.mrb[0].mxu0
  %754 = vmatprep.mubr.f32.mxu0 0.0
  %755 = vmatmul.mubr.f32.gmra.mrb[0].mxu0 %v533
  %v756 = vpop.f32.mrb[0].mxu0
  %v757 = vadd.f32 0.0, %v756
  %v758 = vpop.f32.mrb[0].mxu0
  %759 = vmatprep.mubr.f32.mxu0 0.0
  %760 = vmatmul.mubr.f32.gmra.mrb[0].mxu0 %v536
  %v761 = vpop.f32.mrb[0].mxu0
  %v762 = vadd.f32 0.0, %v761
  %v763 = vpop.f32.mrb[0].mxu0
  %764 = vmatprep.mubr.f32.mxu0 0.0
  %765 = vmatmul.mubr.f32.gmra.mrb[0].mxu0 %v539
  %v766 = vpop.f32.mrb[0].mxu0
  %v767 = vadd.f32 0.0, %v766
  %v768 = vpop.f32.mrb[0].mxu0
  %769 = vmatprep.mubr.f32.mxu0 0.0
  %770 = vmatmul.mubr.f32.gmra.mrb[0].mxu0 %v542
  %v771 = vpop.f32.mrb[0].mxu0
  %v772 = vadd.f32 0.0, %v771
  %v773 = vpop.f32.mrb[0].mxu0
  %774 = vmatprep.mubr.f32.mxu0 0.0
  %775 = vmatmul.mubr.f32.gmra.mrb[0].mxu0 %v545
  %v776 = vpop.f32.mrb[0].mxu0
  %v777 = vadd.f32 0.0, %v776
  %v778 = vpop.f32.mrb[0].mxu0
  %779 = vmatprep.mubr.f32.mxu0 0.0
  %780 = vmatmul.mubr.f32.gmra.mrb[0].mxu0 %v548
  %v781 = vpop.f32.mrb[0].mxu0
  %v782 = vadd.f32 0.0, %v781
  %v783 = vpop.f32.mrb[0].mxu0
  %784 = vmatprep.mubr.f32.mxu0 0.0
  %785 = vmatmul.mubr.f32.gmra.mrb[0].mxu0 %v551
  %v786 = vpop.f32.mrb[0].mxu0
  %v787 = vadd.f32 0.0, %v786
  %v788 = vpop.f32.mrb[0].mxu0
  %789 = vmatprep.mubr.f32.mxu0 0.0
  %790 = vmatmul.mubr.f32.gmra.mrb[0].mxu0 %v554
  %v791 = vpop.f32.mrb[0].mxu0
  %v792 = vadd.f32 0.0, %v791
  %v793 = vpop.f32.mrb[0].mxu0
  %794 = vmatprep.mubr.f32.mxu0 0.0
  %795 = vmatmul.mubr.f32.gmra.mrb[0].mxu0 %v557
  %v796 = vpop.f32.mrb[0].mxu0
  %v797 = vadd.f32 0.0, %v796
  %v798 = vpop.f32.mrb[0].mxu0
  %799 = vmatprep.mubr.f32.mxu0 0.0
  %800 = vmatmul.mubr.f32.gmra.mrb[0].mxu0 %v560
  %v801 = vpop.f32.mrb[0].mxu0
  %v802 = vadd.f32 0.0, %v801
  %v803 = vpop.f32.mrb[0].mxu0
  %804 = vmatprep.mubr.f32.mxu0 0.0
  %805 = vmatmul.mubr.f32.gmra.mrb[0].mxu0 %v563
  %v806 = vpop.f32.mrb[0].mxu0
  %v807 = vadd.f32 0.0, %v806
  %v808 = vpop.f32.mrb[0].mxu0
  %809 = vdwg.mxu0
  %v810 = vmax.f32 %v243, %v632
  %v811 = vmax.f32 %v248, %v637
  %v812 = vmax.f32 %v253, %v642
  %v813 = vmax.f32 %v258, %v647
  %v814 = vmax.f32 %v263, %v652
  %v815 = vmax.f32 %v268, %v657
  %v816 = vmax.f32 %v273, %v662
  %v817 = vmax.f32 %v278, %v667
  %v818 = vmax.f32 %v283, %v672
  %v819 = vmax.f32 %v288, %v677
  %v820 = vmax.f32 %v293, %v682
  %v821 = vmax.f32 %v298, %v687
  %v822 = vmax.f32 %v303, %v692
  %v823 = vmax.f32 %v308, %v697
  %v824 = vmax.f32 %v313, %v702
  %v825 = vmax.f32 %v318, %v707
  %v826 = vmax.f32 %v323, %v712
  %v827 = vmax.f32 %v328, %v717
  %v828 = vmax.f32 %v333, %v722
  %v829 = vmax.f32 %v338, %v727
  %v830 = vmax.f32 %v343, %v732
  %v831 = vmax.f32 %v348, %v737
  %v832 = vmax.f32 %v353, %v742
  %v833 = vmax.f32 %v358, %v747
  %v834 = vmax.f32 %v363, %v752
  %v835 = vmax.f32 %v368, %v757
  %v836 = vmax.f32 %v373, %v762
  %v837 = vmax.f32 %v378, %v767
  %v838 = vmax.f32 %v383, %v772
  %v839 = vmax.f32 %v388, %v777
  %v840 = vmax.f32 %v393, %v782
  %v841 = vmax.f32 %v398, %v787
  %v842 = vmax.f32 %v403, %v792
  %v843 = vmax.f32 %v408, %v797
  %v844 = vmax.f32 %v413, %v802
  %v845 = vmax.f32 %v418, %v807
  %v846 = vld [vmem:[%s2] sm:$0xff]
  %v847 = vld [vmem:[%s2 + $0x8] sm:$0xff]
  %v848 = vld [vmem:[%s2 + $0x10] sm:$0xff]
  %v849 = vld [vmem:[%s2 + $0x18] sm:$0xff]
  %v850 = vld [vmem:[%s2 + $0x20] sm:$0xff]
  %v851 = vld [vmem:[%s2 + $0x28] sm:$0xff]
  %v852 = vld [vmem:[%s2 + $0x30] sm:$0xff]
  %v853 = vld [vmem:[%s2 + $0x38] sm:$0xff]
  %v854 = vld [vmem:[%s2 + $0x40] sm:$0xff]
  %v855 = vld [vmem:[%s2 + $0x48] sm:$0xff]
  %v856 = vld [vmem:[%s2 + $0x50] sm:$0xff]
  %v857 = vld [vmem:[%s2 + $0x58] sm:$0xff]
  %v858 = vld [vmem:[%s2 + $0x60] sm:$0xff]
  %v859 = vld [vmem:[%s2 + $0x68] sm:$0xff]
  %v860 = vld [vmem:[%s2 + $0x70] sm:$0xff]
  %v861 = vld [vmem:[%s2 + $0x78] sm:$0xff]
  %v862 = vld [vmem:[%s2 + $0x80] sm:$0xff]
  %v863 = vld [vmem:[%s2 + $0x88] sm:$0xff]
  %v864 = vld [vmem:[%s2 + $0x90] sm:$0xff]
  %v865 = vld [vmem:[%s2 + $0x98] sm:$0xff]
  %v866 = vld [vmem:[%s2 + $0xa0] sm:$0xff]
  %v867 = vld [vmem:[%s2 + $0xa8] sm:$0xff]
  %v868 = vld [vmem:[%s2 + $0xb0] sm:$0xff]
  %v869 = vld [vmem:[%s2 + $0xb8] sm:$0xff]
  %v870 = vld [vmem:[%s2 + $0xc0] sm:$0xff]
  %v871 = vld [vmem:[%s2 + $0xc8] sm:$0xff]
  %v872 = vld [vmem:[%s2 + $0xd0] sm:$0xff]
  %v873 = vld [vmem:[%s2 + $0xd8] sm:$0xff]
  %v874 = vld [vmem:[%s2 + $0xe0] sm:$0xff]
  %v875 = vld [vmem:[%s2 + $0xe8] sm:$0xff]
  %v876 = vld [vmem:[%s2 + $0xf0] sm:$0xff]
  %v877 = vld [vmem:[%s2 + $0xf8] sm:$0xff]
  %v878 = vld [vmem:[%s2 + $0x100] sm:$0xff]
  %v879 = vld [vmem:[%s2 + $0x108] sm:$0xff]
  %v880 = vld [vmem:[%s2 + $0x110] sm:$0xff]
  %v881 = vld [vmem:[%s2 + $0x118] sm:$0xff]
  %v883 = vsel %vm63, %v846, 0
  %v886 = vsel %vm63, %v847, 0
  %v889 = vsel %vm63, %v848, 0
  %v892 = vsel %vm63, %v849, 0
  %v895 = vsel %vm63, %v850, 0
  %v898 = vsel %vm63, %v851, 0
  %v901 = vsel %vm63, %v852, 0
  %v904 = vsel %vm63, %v853, 0
  %v907 = vsel %vm63, %v854, 0
  %v910 = vsel %vm63, %v855, 0
  %v913 = vsel %vm63, %v856, 0
  %v916 = vsel %vm63, %v857, 0
  %v919 = vsel %vm63, %v858, 0
  %v922 = vsel %vm63, %v859, 0
  %v925 = vsel %vm63, %v860, 0
  %v928 = vsel %vm63, %v861, 0
  %v931 = vsel %vm63, %v862, 0
  %v934 = vsel %vm63, %v863, 0
  %v937 = vsel %vm63, %v864, 0
  %v940 = vsel %vm63, %v865, 0
  %v943 = vsel %vm63, %v866, 0
  %v946 = vsel %vm63, %v867, 0
  %v949 = vsel %vm63, %v868, 0
  %v952 = vsel %vm63, %v869, 0
  %v955 = vsel %vm63, %v870, 0
  %v958 = vsel %vm63, %v871, 0
  %v961 = vsel %vm63, %v872, 0
  %v964 = vsel %vm63, %v873, 0
  %v967 = vsel %vm63, %v874, 0
  %v970 = vsel %vm63, %v875, 0
  %v973 = vsel %vm63, %v876, 0
  %v976 = vsel %vm63, %v877, 0
  %v979 = vsel %vm63, %v878, 0
  %v982 = vsel %vm63, %v879, 0
  %v985 = vsel %vm63, %v880, 0
  %v988 = vsel %vm63, %v881, 0
  %990 = vmatprep.subr.mxu0 0.0
  %991 = vmatpush1.msra.mxu0 %v23
  %992 = vmatprep.subr.mxu0 0.0
  %993 = vmatpush1.msra.mxu0 %v24
  %994 = vmatprep.subr.mxu0 0.0
  %995 = vmatpush1.msra.mxu0 %v25
  %996 = vmatprep.subr.mxu0 0.0
  %997 = vmatpush1.msra.mxu0 %v174
  %998 = vmatprep.subr.mxu0 0.0
  %999 = vmatpush1.msra.mxu0 0.0
  %1000 = vmatprep.subr.mxu0 0.0
  %1001 = vmatpush1.msra.mxu0 0.0
  %1002 = vmatprep.subr.mxu0 0.0
  %1003 = vmatpush1.msra.mxu0 0.0
  %1004 = vmatprep.subr.mxu0 0.0
  %1005 = vmatpush1.msra.mxu0 0.0
  %1006 = vmatprep.subr.mxu0 0.0
  %1007 = vmatpush1.msra.mxu0 0.0
  %1008 = vmatprep.subr.mxu0 0.0
  %1009 = vmatpush1.msra.mxu0 0.0
  %1010 = vmatprep.subr.mxu0 0.0
  %1011 = vmatpush1.msra.mxu0 0.0
  %1012 = vmatprep.subr.mxu0 0.0
  %1013 = vmatpush1.msra.mxu0 0.0
  %1014 = vmatprep.subr.mxu0 0.0
  %1015 = vmatpush1.msra.mxu0 0.0
  %1016 = vmatprep.subr.mxu0 0.0
  %1017 = vmatpush1.msra.mxu0 0.0
  %1018 = vmatprep.subr.mxu0 0.0
  %1019 = vmatpush1.msra.mxu0 0.0
  %1020 = vmatprep.subr.mxu0 0.0
  %1021 = vmatpush1.msra.mxu0 0.0
  %1022 = vmatprep.subr.mxu0 0.0
  %1023 = vmatpush1.msra.mxu0 0.0
  %1024 = vmatprep.subr.mxu0 0.0
  %1025 = vmatpush1.msra.mxu0 0.0
  %1026 = vmatprep.subr.mxu0 0.0
  %1027 = vmatpush1.msra.mxu0 0.0
  %1028 = vmatprep.subr.mxu0 0.0
  %1029 = vmatpush1.msra.mxu0 0.0
  %1030 = vmatprep.subr.mxu0 0.0
  %1031 = vmatpush1.msra.mxu0 0.0
  %1032 = vmatprep.subr.mxu0 0.0
  %1033 = vmatpush1.msra.mxu0 0.0
  %1034 = vmatprep.subr.mxu0 0.0
  %1035 = vmatpush1.msra.mxu0 0.0
  %1036 = vmatprep.subr.mxu0 0.0
  %1037 = vmatpush1.msra.mxu0 0.0
  %1038 = vmatprep.subr.mxu0 0.0
  %1039 = vmatpush1.msra.mxu0 0.0
  %1040 = vmatprep.subr.mxu0 0.0
  %1041 = vmatpush1.msra.mxu0 0.0
  %1042 = vmatprep.subr.mxu0 0.0
  %1043 = vmatpush1.msra.mxu0 0.0
  %1044 = vmatprep.subr.mxu0 0.0
  %1045 = vmatpush1.msra.mxu0 0.0
  %1046 = vmatprep.subr.mxu0 0.0
  %1047 = vmatpush1.msra.mxu0 0.0
  %1048 = vmatprep.subr.mxu0 0.0
  %1049 = vmatpush1.msra.mxu0 0.0
  %1050 = vmatprep.subr.mxu0 0.0
  %1051 = vmatpush1.msra.mxu0 0.0
  %1052 = vmatprep.subr.mxu0 0.0
  %1053 = vmatpush1.msra.mxu0 0.0
  %1054 = vmatprep.mubr.f32.mxu0 0.0
  %1055 = vmatmul.mubr.f32.gmra.mrb[0].mxu0 %v883
  %v1056 = vpop.f32.mrb[0].mxu0
  %v1057 = vadd.f32 0.0, %v1056
  %v1058 = vpop.f32.mrb[0].mxu0
  %1059 = vmatprep.mubr.f32.mxu0 0.0
  %1060 = vmatmul.mubr.f32.gmra.mrb[0].mxu0 %v886
  %v1061 = vpop.f32.mrb[0].mxu0
  %v1062 = vadd.f32 0.0, %v1061
  %v1063 = vpop.f32.mrb[0].mxu0
  %1064 = vmatprep.mubr.f32.mxu0 0.0
  %1065 = vmatmul.mubr.f32.gmra.mrb[0].mxu0 %v889
  %v1066 = vpop.f32.mrb[0].mxu0
  %v1067 = vadd.f32 0.0, %v1066
  %v1068 = vpop.f32.mrb[0].mxu0
  %1069 = vmatprep.mubr.f32.mxu0 0.0
  %1070 = vmatmul.mubr.f32.gmra.mrb[0].mxu0 %v892
  %v1071 = vpop.f32.mrb[0].mxu0
  %v1072 = vadd.f32 0.0, %v1071
  %v1073 = vpop.f32.mrb[0].mxu0
  %1074 = vmatprep.mubr.f32.mxu0 0.0
  %1075 = vmatmul.mubr.f32.gmra.mrb[0].mxu0 %v895
  %v1076 = vpop.f32.mrb[0].mxu0
  %v1077 = vadd.f32 0.0, %v1076
  %v1078 = vpop.f32.mrb[0].mxu0
  %1079 = vmatprep.mubr.f32.mxu0 0.0
  %1080 = vmatmul.mubr.f32.gmra.mrb[0].mxu0 %v898
  %v1081 = vpop.f32.mrb[0].mxu0
  %v1082 = vadd.f32 0.0, %v1081
  %v1083 = vpop.f32.mrb[0].mxu0
  %1084 = vmatprep.mubr.f32.mxu0 0.0
  %1085 = vmatmul.mubr.f32.gmra.mrb[0].mxu0 %v901
  %v1086 = vpop.f32.mrb[0].mxu0
  %v1087 = vadd.f32 0.0, %v1086
  %v1088 = vpop.f32.mrb[0].mxu0
  %1089 = vmatprep.mubr.f32.mxu0 0.0
  %1090 = vmatmul.mubr.f32.gmra.mrb[0].mxu0 %v904
  %v1091 = vpop.f32.mrb[0].mxu0
  %v1092 = vadd.f32 0.0, %v1091
  %v1093 = vpop.f32.mrb[0].mxu0
  %1094 = vmatprep.mubr.f32.mxu0 0.0
  %1095 = vmatmul.mubr.f32.gmra.mrb[0].mxu0 %v907
  %v1096 = vpop.f32.mrb[0].mxu0
  %v1097 = vadd.f32 0.0, %v1096
  %v1098 = vpop.f32.mrb[0].mxu0
  %1099 = vmatprep.mubr.f32.mxu0 0.0
  %1100 = vmatmul.mubr.f32.gmra.mrb[0].mxu0 %v910
  %v1101 = vpop.f32.mrb[0].mxu0
  %v1102 = vadd.f32 0.0, %v1101
  %v1103 = vpop.f32.mrb[0].mxu0
  %1104 = vmatprep.mubr.f32.mxu0 0.0
  %1105 = vmatmul.mubr.f32.gmra.mrb[0].mxu0 %v913
  %v1106 = vpop.f32.mrb[0].mxu0
  %v1107 = vadd.f32 0.0, %v1106
  %v1108 = vpop.f32.mrb[0].mxu0
  %1109 = vmatprep.mubr.f32.mxu0 0.0
  %1110 = vmatmul.mubr.f32.gmra.mrb[0].mxu0 %v916
  %v1111 = vpop.f32.mrb[0].mxu0
  %v1112 = vadd.f32 0.0, %v1111
  %v1113 = vpop.f32.mrb[0].mxu0
  %1114 = vmatprep.mubr.f32.mxu0 0.0
  %1115 = vmatmul.mubr.f32.gmra.mrb[0].mxu0 %v919
  %v1116 = vpop.f32.mrb[0].mxu0
  %v1117 = vadd.f32 0.0, %v1116
  %v1118 = vpop.f32.mrb[0].mxu0
  %1119 = vmatprep.mubr.f32.mxu0 0.0
  %1120 = vmatmul.mubr.f32.gmra.mrb[0].mxu0 %v922
  %v1121 = vpop.f32.mrb[0].mxu0
  %v1122 = vadd.f32 0.0, %v1121
  %v1123 = vpop.f32.mrb[0].mxu0
  %1124 = vmatprep.mubr.f32.mxu0 0.0
  %1125 = vmatmul.mubr.f32.gmra.mrb[0].mxu0 %v925
  %v1126 = vpop.f32.mrb[0].mxu0
  %v1127 = vadd.f32 0.0, %v1126
  %v1128 = vpop.f32.mrb[0].mxu0
  %1129 = vmatprep.mubr.f32.mxu0 0.0
  %1130 = vmatmul.mubr.f32.gmra.mrb[0].mxu0 %v928
  %v1131 = vpop.f32.mrb[0].mxu0
  %v1132 = vadd.f32 0.0, %v1131
  %v1133 = vpop.f32.mrb[0].mxu0
  %1134 = vmatprep.mubr.f32.mxu0 0.0
  %1135 = vmatmul.mubr.f32.gmra.mrb[0].mxu0 %v931
  %v1136 = vpop.f32.mrb[0].mxu0
  %v1137 = vadd.f32 0.0, %v1136
  %v1138 = vpop.f32.mrb[0].mxu0
  %1139 = vmatprep.mubr.f32.mxu0 0.0
  %1140 = vmatmul.mubr.f32.gmra.mrb[0].mxu0 %v934
  %v1141 = vpop.f32.mrb[0].mxu0
  %v1142 = vadd.f32 0.0, %v1141
  %v1143 = vpop.f32.mrb[0].mxu0
  %1144 = vmatprep.mubr.f32.mxu0 0.0
  %1145 = vmatmul.mubr.f32.gmra.mrb[0].mxu0 %v937
  %v1146 = vpop.f32.mrb[0].mxu0
  %v1147 = vadd.f32 0.0, %v1146
  %v1148 = vpop.f32.mrb[0].mxu0
  %1149 = vmatprep.mubr.f32.mxu0 0.0
  %1150 = vmatmul.mubr.f32.gmra.mrb[0].mxu0 %v940
  %v1151 = vpop.f32.mrb[0].mxu0
  %v1152 = vadd.f32 0.0, %v1151
  %v1153 = vpop.f32.mrb[0].mxu0
  %1154 = vmatprep.mubr.f32.mxu0 0.0
  %1155 = vmatmul.mubr.f32.gmra.mrb[0].mxu0 %v943
  %v1156 = vpop.f32.mrb[0].mxu0
  %v1157 = vadd.f32 0.0, %v1156
  %v1158 = vpop.f32.mrb[0].mxu0
  %1159 = vmatprep.mubr.f32.mxu0 0.0
  %1160 = vmatmul.mubr.f32.gmra.mrb[0].mxu0 %v946
  %v1161 = vpop.f32.mrb[0].mxu0
  %v1162 = vadd.f32 0.0, %v1161
  %v1163 = vpop.f32.mrb[0].mxu0
  %1164 = vmatprep.mubr.f32.mxu0 0.0
  %1165 = vmatmul.mubr.f32.gmra.mrb[0].mxu0 %v949
  %v1166 = vpop.f32.mrb[0].mxu0
  %v1167 = vadd.f32 0.0, %v1166
  %v1168 = vpop.f32.mrb[0].mxu0
  %1169 = vmatprep.mubr.f32.mxu0 0.0
  %1170 = vmatmul.mubr.f32.gmra.mrb[0].mxu0 %v952
  %v1171 = vpop.f32.mrb[0].mxu0
  %v1172 = vadd.f32 0.0, %v1171
  %v1173 = vpop.f32.mrb[0].mxu0
  %1174 = vmatprep.mubr.f32.mxu0 0.0
  %1175 = vmatmul.mubr.f32.gmra.mrb[0].mxu0 %v955
  %v1176 = vpop.f32.mrb[0].mxu0
  %v1177 = vadd.f32 0.0, %v1176
  %v1178 = vpop.f32.mrb[0].mxu0
  %1179 = vmatprep.mubr.f32.mxu0 0.0
  %1180 = vmatmul.mubr.f32.gmra.mrb[0].mxu0 %v958
  %v1181 = vpop.f32.mrb[0].mxu0
  %v1182 = vadd.f32 0.0, %v1181
  %v1183 = vpop.f32.mrb[0].mxu0
  %1184 = vmatprep.mubr.f32.mxu0 0.0
  %1185 = vmatmul.mubr.f32.gmra.mrb[0].mxu0 %v961
  %v1186 = vpop.f32.mrb[0].mxu0
  %v1187 = vadd.f32 0.0, %v1186
  %v1188 = vpop.f32.mrb[0].mxu0
  %1189 = vmatprep.mubr.f32.mxu0 0.0
  %1190 = vmatmul.mubr.f32.gmra.mrb[0].mxu0 %v964
  %v1191 = vpop.f32.mrb[0].mxu0
  %v1192 = vadd.f32 0.0, %v1191
  %v1193 = vpop.f32.mrb[0].mxu0
  %1194 = vmatprep.mubr.f32.mxu0 0.0
  %1195 = vmatmul.mubr.f32.gmra.mrb[0].mxu0 %v967
  %v1196 = vpop.f32.mrb[0].mxu0
  %v1197 = vadd.f32 0.0, %v1196
  %v1198 = vpop.f32.mrb[0].mxu0
  %1199 = vmatprep.mubr.f32.mxu0 0.0
  %1200 = vmatmul.mubr.f32.gmra.mrb[0].mxu0 %v970
  %v1201 = vpop.f32.mrb[0].mxu0
  %v1202 = vadd.f32 0.0, %v1201
  %v1203 = vpop.f32.mrb[0].mxu0
  %1204 = vmatprep.mubr.f32.mxu0 0.0
  %1205 = vmatmul.mubr.f32.gmra.mrb[0].mxu0 %v973
  %v1206 = vpop.f32.mrb[0].mxu0
  %v1207 = vadd.f32 0.0, %v1206
  %v1208 = vpop.f32.mrb[0].mxu0
  %1209 = vmatprep.mubr.f32.mxu0 0.0
  %1210 = vmatmul.mubr.f32.gmra.mrb[0].mxu0 %v976
  %v1211 = vpop.f32.mrb[0].mxu0
  %v1212 = vadd.f32 0.0, %v1211
  %v1213 = vpop.f32.mrb[0].mxu0
  %1214 = vmatprep.mubr.f32.mxu0 0.0
  %1215 = vmatmul.mubr.f32.gmra.mrb[0].mxu0 %v979
  %v1216 = vpop.f32.mrb[0].mxu0
  %v1217 = vadd.f32 0.0, %v1216
  %v1218 = vpop.f32.mrb[0].mxu0
  %1219 = vmatprep.mubr.f32.mxu0 0.0
  %1220 = vmatmul.mubr.f32.gmra.mrb[0].mxu0 %v982
  %v1221 = vpop.f32.mrb[0].mxu0
  %v1222 = vadd.f32 0.0, %v1221
  %v1223 = vpop.f32.mrb[0].mxu0
  %1224 = vmatprep.mubr.f32.mxu0 0.0
  %1225 = vmatmul.mubr.f32.gmra.mrb[0].mxu0 %v985
  %v1226 = vpop.f32.mrb[0].mxu0
  %v1227 = vadd.f32 0.0, %v1226
  %v1228 = vpop.f32.mrb[0].mxu0
  %1229 = vmatprep.mubr.f32.mxu0 0.0
  %1230 = vmatmul.mubr.f32.gmra.mrb[0].mxu0 %v988
  %v1231 = vpop.f32.mrb[0].mxu0
  %v1232 = vadd.f32 0.0, %v1231
  %v1233 = vpop.f32.mrb[0].mxu0
  %1234 = vdwg.mxu0
  %v1235 = vmax.f32 %v810, %v1057
  %v1236 = vmax.f32 %v811, %v1062
  %v1237 = vmax.f32 %v812, %v1067
  %v1238 = vmax.f32 %v813, %v1072
  %v1239 = vmax.f32 %v814, %v1077
  %v1240 = vmax.f32 %v815, %v1082
  %v1241 = vmax.f32 %v816, %v1087
  %v1242 = vmax.f32 %v817, %v1092
  %v1243 = vmax.f32 %v818, %v1097
  %v1244 = vmax.f32 %v819, %v1102
  %v1245 = vmax.f32 %v820, %v1107
  %v1246 = vmax.f32 %v821, %v1112
  %v1247 = vmax.f32 %v822, %v1117
  %v1248 = vmax.f32 %v823, %v1122
  %v1249 = vmax.f32 %v824, %v1127
  %v1250 = vmax.f32 %v825, %v1132
  %v1251 = vmax.f32 %v826, %v1137
  %v1252 = vmax.f32 %v827, %v1142
  %v1253 = vmax.f32 %v828, %v1147
  %v1254 = vmax.f32 %v829, %v1152
  %v1255 = vmax.f32 %v830, %v1157
  %v1256 = vmax.f32 %v831, %v1162
  %v1257 = vmax.f32 %v832, %v1167
  %v1258 = vmax.f32 %v833, %v1172
  %v1259 = vmax.f32 %v834, %v1177
  %v1260 = vmax.f32 %v835, %v1182
  %v1261 = vmax.f32 %v836, %v1187
  %v1262 = vmax.f32 %v837, %v1192
  %v1263 = vmax.f32 %v838, %v1197
  %v1264 = vmax.f32 %v839, %v1202
  %v1265 = vmax.f32 %v840, %v1207
  %v1266 = vmax.f32 %v841, %v1212
  %v1267 = vmax.f32 %v842, %v1217
  %v1268 = vmax.f32 %v843, %v1222
  %v1269 = vmax.f32 %v844, %v1227
  %v1270 = vmax.f32 %v845, %v1232
  %v1271 = vld [vmem:[%s3] sm:$0xff]
  %v1272 = vld [vmem:[%s3 + $0x8] sm:$0xff]
  %v1273 = vld [vmem:[%s3 + $0x10] sm:$0xff]
  %v1274 = vld [vmem:[%s3 + $0x18] sm:$0xff]
  %v1275 = vld [vmem:[%s3 + $0x20] sm:$0xff]
  %v1276 = vld [vmem:[%s3 + $0x28] sm:$0xff]
  %v1277 = vld [vmem:[%s3 + $0x30] sm:$0xff]
  %v1278 = vld [vmem:[%s3 + $0x38] sm:$0xff]
  %v1279 = vld [vmem:[%s3 + $0x40] sm:$0xff]
  %v1280 = vld [vmem:[%s3 + $0x48] sm:$0xff]
  %v1281 = vld [vmem:[%s3 + $0x50] sm:$0xff]
  %v1282 = vld [vmem:[%s3 + $0x58] sm:$0xff]
  %v1283 = vld [vmem:[%s3 + $0x60] sm:$0xff]
  %v1284 = vld [vmem:[%s3 + $0x68] sm:$0xff]
  %v1285 = vld [vmem:[%s3 + $0x70] sm:$0xff]
  %v1286 = vld [vmem:[%s3 + $0x78] sm:$0xff]
  %v1287 = vld [vmem:[%s3 + $0x80] sm:$0xff]
  %v1288 = vld [vmem:[%s3 + $0x88] sm:$0xff]
  %v1289 = vld [vmem:[%s3 + $0x90] sm:$0xff]
  %v1290 = vld [vmem:[%s3 + $0x98] sm:$0xff]
  %v1291 = vld [vmem:[%s3 + $0xa0] sm:$0xff]
  %v1292 = vld [vmem:[%s3 + $0xa8] sm:$0xff]
  %v1293 = vld [vmem:[%s3 + $0xb0] sm:$0xff]
  %v1294 = vld [vmem:[%s3 + $0xb8] sm:$0xff]
  %v1295 = vld [vmem:[%s3 + $0xc0] sm:$0xff]
  %v1296 = vld [vmem:[%s3 + $0xc8] sm:$0xff]
  %v1297 = vld [vmem:[%s3 + $0xd0] sm:$0xff]
  %v1298 = vld [vmem:[%s3 + $0xd8] sm:$0xff]
  %v1299 = vld [vmem:[%s3 + $0xe0] sm:$0xff]
  %v1300 = vld [vmem:[%s3 + $0xe8] sm:$0xff]
  %v1301 = vld [vmem:[%s3 + $0xf0] sm:$0xff]
  %v1302 = vld [vmem:[%s3 + $0xf8] sm:$0xff]
  %v1303 = vld [vmem:[%s3 + $0x100] sm:$0xff]
  %v1304 = vld [vmem:[%s3 + $0x108] sm:$0xff]
  %v1305 = vld [vmem:[%s3 + $0x110] sm:$0xff]
  %v1306 = vld [vmem:[%s3 + $0x118] sm:$0xff]
  %v1308 = vsel %vm63, %v1271, 0
  %v1311 = vsel %vm63, %v1272, 0
  %v1314 = vsel %vm63, %v1273, 0
  %v1317 = vsel %vm63, %v1274, 0
  %v1320 = vsel %vm63, %v1275, 0
  %v1323 = vsel %vm63, %v1276, 0
  %v1326 = vsel %vm63, %v1277, 0
  %v1329 = vsel %vm63, %v1278, 0
  %v1332 = vsel %vm63, %v1279, 0
  %v1335 = vsel %vm63, %v1280, 0
  %v1338 = vsel %vm63, %v1281, 0
  %v1341 = vsel %vm63, %v1282, 0
  %v1344 = vsel %vm63, %v1283, 0
  %v1347 = vsel %vm63, %v1284, 0
  %v1350 = vsel %vm63, %v1285, 0
  %v1353 = vsel %vm63, %v1286, 0
  %v1356 = vsel %vm63, %v1287, 0
  %v1359 = vsel %vm63, %v1288, 0
  %v1362 = vsel %vm63, %v1289, 0
  %v1365 = vsel %vm63, %v1290, 0
  %v1368 = vsel %vm63, %v1291, 0
  %v1371 = vsel %vm63, %v1292, 0
  %v1374 = vsel %vm63, %v1293, 0
  %v1377 = vsel %vm63, %v1294, 0
  %v1380 = vsel %vm63, %v1295, 0
  %v1383 = vsel %vm63, %v1296, 0
  %v1386 = vsel %vm63, %v1297, 0
  %v1389 = vsel %vm63, %v1298, 0
  %v1392 = vsel %vm63, %v1299, 0
  %v1395 = vsel %vm63, %v1300, 0
  %v1398 = vsel %vm63, %v1301, 0
  %v1401 = vsel %vm63, %v1302, 0
  %v1404 = vsel %vm63, %v1303, 0
  %v1407 = vsel %vm63, %v1304, 0
  %v1410 = vsel %vm63, %v1305, 0
  %v1413 = vsel %vm63, %v1306, 0
  %1415 = vmatprep.subr.mxu0 0.0
  %1416 = vmatpush1.msra.mxu0 %v23
  %1417 = vmatprep.subr.mxu0 0.0
  %1418 = vmatpush1.msra.mxu0 %v24
  %1419 = vmatprep.subr.mxu0 0.0
  %1420 = vmatpush1.msra.mxu0 %v25
  %1421 = vmatprep.subr.mxu0 0.0
  %1422 = vmatpush1.msra.mxu0 %v174
  %1423 = vmatprep.subr.mxu0 0.0
  %1424 = vmatpush1.msra.mxu0 0.0
  %1425 = vmatprep.subr.mxu0 0.0
  %1426 = vmatpush1.msra.mxu0 0.0
  %1427 = vmatprep.subr.mxu0 0.0
  %1428 = vmatpush1.msra.mxu0 0.0
  %1429 = vmatprep.subr.mxu0 0.0
  %1430 = vmatpush1.msra.mxu0 0.0
  %1431 = vmatprep.subr.mxu0 0.0
  %1432 = vmatpush1.msra.mxu0 0.0
  %1433 = vmatprep.subr.mxu0 0.0
  %1434 = vmatpush1.msra.mxu0 0.0
  %1435 = vmatprep.subr.mxu0 0.0
  %1436 = vmatpush1.msra.mxu0 0.0
  %1437 = vmatprep.subr.mxu0 0.0
  %1438 = vmatpush1.msra.mxu0 0.0
  %1439 = vmatprep.subr.mxu0 0.0
  %1440 = vmatpush1.msra.mxu0 0.0
  %1441 = vmatprep.subr.mxu0 0.0
  %1442 = vmatpush1.msra.mxu0 0.0
  %1443 = vmatprep.subr.mxu0 0.0
  %1444 = vmatpush1.msra.mxu0 0.0
  %1445 = vmatprep.subr.mxu0 0.0
  %1446 = vmatpush1.msra.mxu0 0.0
  %1447 = vmatprep.subr.mxu0 0.0
  %1448 = vmatpush1.msra.mxu0 0.0
  %1449 = vmatprep.subr.mxu0 0.0
  %1450 = vmatpush1.msra.mxu0 0.0
  %1451 = vmatprep.subr.mxu0 0.0
  %1452 = vmatpush1.msra.mxu0 0.0
  %1453 = vmatprep.subr.mxu0 0.0
  %1454 = vmatpush1.msra.mxu0 0.0
  %1455 = vmatprep.subr.mxu0 0.0
  %1456 = vmatpush1.msra.mxu0 0.0
  %1457 = vmatprep.subr.mxu0 0.0
  %1458 = vmatpush1.msra.mxu0 0.0
  %1459 = vmatprep.subr.mxu0 0.0
  %1460 = vmatpush1.msra.mxu0 0.0
  %1461 = vmatprep.subr.mxu0 0.0
  %1462 = vmatpush1.msra.mxu0 0.0
  %1463 = vmatprep.subr.mxu0 0.0
  %1464 = vmatpush1.msra.mxu0 0.0
  %1465 = vmatprep.subr.mxu0 0.0
  %1466 = vmatpush1.msra.mxu0 0.0
  %1467 = vmatprep.subr.mxu0 0.0
  %1468 = vmatpush1.msra.mxu0 0.0
  %1469 = vmatprep.subr.mxu0 0.0
  %1470 = vmatpush1.msra.mxu0 0.0
  %1471 = vmatprep.subr.mxu0 0.0
  %1472 = vmatpush1.msra.mxu0 0.0
  %1473 = vmatprep.subr.mxu0 0.0
  %1474 = vmatpush1.msra.mxu0 0.0
  %1475 = vmatprep.subr.mxu0 0.0
  %1476 = vmatpush1.msra.mxu0 0.0
  %1477 = vmatprep.subr.mxu0 0.0
  %1478 = vmatpush1.msra.mxu0 0.0
  %1479 = vmatprep.mubr.f32.mxu0 0.0
  %1480 = vmatmul.mubr.f32.gmra.mrb[0].mxu0 %v1308
  %v1481 = vpop.f32.mrb[0].mxu0
  %v1482 = vadd.f32 0.0, %v1481
  %v1483 = vpop.f32.mrb[0].mxu0
  %1484 = vmatprep.mubr.f32.mxu0 0.0
  %1485 = vmatmul.mubr.f32.gmra.mrb[0].mxu0 %v1311
  %v1486 = vpop.f32.mrb[0].mxu0
  %v1487 = vadd.f32 0.0, %v1486
  %v1488 = vpop.f32.mrb[0].mxu0
  %1489 = vmatprep.mubr.f32.mxu0 0.0
  %1490 = vmatmul.mubr.f32.gmra.mrb[0].mxu0 %v1314
  %v1491 = vpop.f32.mrb[0].mxu0
  %v1492 = vadd.f32 0.0, %v1491
  %v1493 = vpop.f32.mrb[0].mxu0
  %1494 = vmatprep.mubr.f32.mxu0 0.0
  %1495 = vmatmul.mubr.f32.gmra.mrb[0].mxu0 %v1317
  %v1496 = vpop.f32.mrb[0].mxu0
  %v1497 = vadd.f32 0.0, %v1496
  %v1498 = vpop.f32.mrb[0].mxu0
  %1499 = vmatprep.mubr.f32.mxu0 0.0
  %1500 = vmatmul.mubr.f32.gmra.mrb[0].mxu0 %v1320
  %v1501 = vpop.f32.mrb[0].mxu0
  %v1502 = vadd.f32 0.0, %v1501
  %v1503 = vpop.f32.mrb[0].mxu0
  %1504 = vmatprep.mubr.f32.mxu0 0.0
  %1505 = vmatmul.mubr.f32.gmra.mrb[0].mxu0 %v1323
  %v1506 = vpop.f32.mrb[0].mxu0
  %v1507 = vadd.f32 0.0, %v1506
  %v1508 = vpop.f32.mrb[0].mxu0
  %1509 = vmatprep.mubr.f32.mxu0 0.0
  %1510 = vmatmul.mubr.f32.gmra.mrb[0].mxu0 %v1326
  %v1511 = vpop.f32.mrb[0].mxu0
  %v1512 = vadd.f32 0.0, %v1511
  %v1513 = vpop.f32.mrb[0].mxu0
  %1514 = vmatprep.mubr.f32.mxu0 0.0
  %1515 = vmatmul.mubr.f32.gmra.mrb[0].mxu0 %v1329
  %v1516 = vpop.f32.mrb[0].mxu0
  %v1517 = vadd.f32 0.0, %v1516
  %v1518 = vpop.f32.mrb[0].mxu0
  %1519 = vmatprep.mubr.f32.mxu0 0.0
  %1520 = vmatmul.mubr.f32.gmra.mrb[0].mxu0 %v1332
  %v1521 = vpop.f32.mrb[0].mxu0
  %v1522 = vadd.f32 0.0, %v1521
  %v1523 = vpop.f32.mrb[0].mxu0
  %1524 = vmatprep.mubr.f32.mxu0 0.0
  %1525 = vmatmul.mubr.f32.gmra.mrb[0].mxu0 %v1335
  %v1526 = vpop.f32.mrb[0].mxu0
  %v1527 = vadd.f32 0.0, %v1526
  %v1528 = vpop.f32.mrb[0].mxu0
  %1529 = vmatprep.mubr.f32.mxu0 0.0
  %1530 = vmatmul.mubr.f32.gmra.mrb[0].mxu0 %v1338
  %v1531 = vpop.f32.mrb[0].mxu0
  %v1532 = vadd.f32 0.0, %v1531
  %v1533 = vpop.f32.mrb[0].mxu0
  %1534 = vmatprep.mubr.f32.mxu0 0.0
  %1535 = vmatmul.mubr.f32.gmra.mrb[0].mxu0 %v1341
  %v1536 = vpop.f32.mrb[0].mxu0
  %v1537 = vadd.f32 0.0, %v1536
  %v1538 = vpop.f32.mrb[0].mxu0
  %1539 = vmatprep.mubr.f32.mxu0 0.0
  %1540 = vmatmul.mubr.f32.gmra.mrb[0].mxu0 %v1344
  %v1541 = vpop.f32.mrb[0].mxu0
  %v1542 = vadd.f32 0.0, %v1541
  %v1543 = vpop.f32.mrb[0].mxu0
  %1544 = vmatprep.mubr.f32.mxu0 0.0
  %1545 = vmatmul.mubr.f32.gmra.mrb[0].mxu0 %v1347
  %v1546 = vpop.f32.mrb[0].mxu0
  %v1547 = vadd.f32 0.0, %v1546
  %v1548 = vpop.f32.mrb[0].mxu0
  %1549 = vmatprep.mubr.f32.mxu0 0.0
  %1550 = vmatmul.mubr.f32.gmra.mrb[0].mxu0 %v1350
  %v1551 = vpop.f32.mrb[0].mxu0
  %v1552 = vadd.f32 0.0, %v1551
  %v1553 = vpop.f32.mrb[0].mxu0
  %1554 = vmatprep.mubr.f32.mxu0 0.0
  %1555 = vmatmul.mubr.f32.gmra.mrb[0].mxu0 %v1353
  %v1556 = vpop.f32.mrb[0].mxu0
  %v1557 = vadd.f32 0.0, %v1556
  %v1558 = vpop.f32.mrb[0].mxu0
  %1559 = vmatprep.mubr.f32.mxu0 0.0
  %1560 = vmatmul.mubr.f32.gmra.mrb[0].mxu0 %v1356
  %v1561 = vpop.f32.mrb[0].mxu0
  %v1562 = vadd.f32 0.0, %v1561
  %v1563 = vpop.f32.mrb[0].mxu0
  %1564 = vmatprep.mubr.f32.mxu0 0.0
  %1565 = vmatmul.mubr.f32.gmra.mrb[0].mxu0 %v1359
  %v1566 = vpop.f32.mrb[0].mxu0
  %v1567 = vadd.f32 0.0, %v1566
  %v1568 = vpop.f32.mrb[0].mxu0
  %1569 = vmatprep.mubr.f32.mxu0 0.0
  %1570 = vmatmul.mubr.f32.gmra.mrb[0].mxu0 %v1362
  %v1571 = vpop.f32.mrb[0].mxu0
  %v1572 = vadd.f32 0.0, %v1571
  %v1573 = vpop.f32.mrb[0].mxu0
  %1574 = vmatprep.mubr.f32.mxu0 0.0
  %1575 = vmatmul.mubr.f32.gmra.mrb[0].mxu0 %v1365
  %v1576 = vpop.f32.mrb[0].mxu0
  %v1577 = vadd.f32 0.0, %v1576
  %v1578 = vpop.f32.mrb[0].mxu0
  %1579 = vmatprep.mubr.f32.mxu0 0.0
  %1580 = vmatmul.mubr.f32.gmra.mrb[0].mxu0 %v1368
  %v1581 = vpop.f32.mrb[0].mxu0
  %v1582 = vadd.f32 0.0, %v1581
  %v1583 = vpop.f32.mrb[0].mxu0
  %1584 = vmatprep.mubr.f32.mxu0 0.0
  %1585 = vmatmul.mubr.f32.gmra.mrb[0].mxu0 %v1371
  %v1586 = vpop.f32.mrb[0].mxu0
  %v1587 = vadd.f32 0.0, %v1586
  %v1588 = vpop.f32.mrb[0].mxu0
  %1589 = vmatprep.mubr.f32.mxu0 0.0
  %1590 = vmatmul.mubr.f32.gmra.mrb[0].mxu0 %v1374
  %v1591 = vpop.f32.mrb[0].mxu0
  %v1592 = vadd.f32 0.0, %v1591
  %v1593 = vpop.f32.mrb[0].mxu0
  %1594 = vmatprep.mubr.f32.mxu0 0.0
  %1595 = vmatmul.mubr.f32.gmra.mrb[0].mxu0 %v1377
  %v1596 = vpop.f32.mrb[0].mxu0
  %v1597 = vadd.f32 0.0, %v1596
  %v1598 = vpop.f32.mrb[0].mxu0
  %1599 = vmatprep.mubr.f32.mxu0 0.0
  %1600 = vmatmul.mubr.f32.gmra.mrb[0].mxu0 %v1380
  %v1601 = vpop.f32.mrb[0].mxu0
  %v1602 = vadd.f32 0.0, %v1601
  %v1603 = vpop.f32.mrb[0].mxu0
  %1604 = vmatprep.mubr.f32.mxu0 0.0
  %1605 = vmatmul.mubr.f32.gmra.mrb[0].mxu0 %v1383
  %v1606 = vpop.f32.mrb[0].mxu0
  %v1607 = vadd.f32 0.0, %v1606
  %v1608 = vpop.f32.mrb[0].mxu0
  %1609 = vmatprep.mubr.f32.mxu0 0.0
  %1610 = vmatmul.mubr.f32.gmra.mrb[0].mxu0 %v1386
  %v1611 = vpop.f32.mrb[0].mxu0
  %v1612 = vadd.f32 0.0, %v1611
  %v1613 = vpop.f32.mrb[0].mxu0
  %1614 = vmatprep.mubr.f32.mxu0 0.0
  %1615 = vmatmul.mubr.f32.gmra.mrb[0].mxu0 %v1389
  %v1616 = vpop.f32.mrb[0].mxu0
  %v1617 = vadd.f32 0.0, %v1616
  %v1618 = vpop.f32.mrb[0].mxu0
  %1619 = vmatprep.mubr.f32.mxu0 0.0
  %1620 = vmatmul.mubr.f32.gmra.mrb[0].mxu0 %v1392
  %v1621 = vpop.f32.mrb[0].mxu0
  %v1622 = vadd.f32 0.0, %v1621
  %v1623 = vpop.f32.mrb[0].mxu0
  %1624 = vmatprep.mubr.f32.mxu0 0.0
  %1625 = vmatmul.mubr.f32.gmra.mrb[0].mxu0 %v1395
  %v1626 = vpop.f32.mrb[0].mxu0
  %v1627 = vadd.f32 0.0, %v1626
  %v1628 = vpop.f32.mrb[0].mxu0
  %1629 = vmatprep.mubr.f32.mxu0 0.0
  %1630 = vmatmul.mubr.f32.gmra.mrb[0].mxu0 %v1398
  %v1631 = vpop.f32.mrb[0].mxu0
  %v1632 = vadd.f32 0.0, %v1631
  %v1633 = vpop.f32.mrb[0].mxu0
  %1634 = vmatprep.mubr.f32.mxu0 0.0
  %1635 = vmatmul.mubr.f32.gmra.mrb[0].mxu0 %v1401
  %v1636 = vpop.f32.mrb[0].mxu0
  %v1637 = vadd.f32 0.0, %v1636
  %v1638 = vpop.f32.mrb[0].mxu0
  %1639 = vmatprep.mubr.f32.mxu0 0.0
  %1640 = vmatmul.mubr.f32.gmra.mrb[0].mxu0 %v1404
  %v1641 = vpop.f32.mrb[0].mxu0
  %v1642 = vadd.f32 0.0, %v1641
  %v1643 = vpop.f32.mrb[0].mxu0
  %1644 = vmatprep.mubr.f32.mxu0 0.0
  %1645 = vmatmul.mubr.f32.gmra.mrb[0].mxu0 %v1407
  %v1646 = vpop.f32.mrb[0].mxu0
  %v1647 = vadd.f32 0.0, %v1646
  %v1648 = vpop.f32.mrb[0].mxu0
  %1649 = vmatprep.mubr.f32.mxu0 0.0
  %1650 = vmatmul.mubr.f32.gmra.mrb[0].mxu0 %v1410
  %v1651 = vpop.f32.mrb[0].mxu0
  %v1652 = vadd.f32 0.0, %v1651
  %v1653 = vpop.f32.mrb[0].mxu0
  %1654 = vmatprep.mubr.f32.mxu0 0.0
  %1655 = vmatmul.mubr.f32.gmra.mrb[0].mxu0 %v1413
  %v1656 = vpop.f32.mrb[0].mxu0
  %v1657 = vadd.f32 0.0, %v1656
  %v1658 = vpop.f32.mrb[0].mxu0
  %1659 = vdwg.mxu0
  %v1660 = vmax.f32 %v1235, %v1482
  %v1661 = vmax.f32 %v1236, %v1487
  %v1662 = vmax.f32 %v1237, %v1492
  %v1663 = vmax.f32 %v1238, %v1497
  %v1664 = vmax.f32 %v1239, %v1502
  %v1665 = vmax.f32 %v1240, %v1507
  %v1666 = vmax.f32 %v1241, %v1512
  %v1667 = vmax.f32 %v1242, %v1517
  %v1668 = vmax.f32 %v1243, %v1522
  %v1669 = vmax.f32 %v1244, %v1527
  %v1670 = vmax.f32 %v1245, %v1532
  %v1671 = vmax.f32 %v1246, %v1537
  %v1672 = vmax.f32 %v1247, %v1542
  %v1673 = vmax.f32 %v1248, %v1547
  %v1674 = vmax.f32 %v1249, %v1552
  %v1675 = vmax.f32 %v1250, %v1557
  %v1676 = vmax.f32 %v1251, %v1562
  %v1677 = vmax.f32 %v1252, %v1567
  %v1678 = vmax.f32 %v1253, %v1572
  %v1679 = vmax.f32 %v1254, %v1577
  %v1680 = vmax.f32 %v1255, %v1582
  %v1681 = vmax.f32 %v1256, %v1587
  %v1682 = vmax.f32 %v1257, %v1592
  %v1683 = vmax.f32 %v1258, %v1597
  %v1684 = vmax.f32 %v1259, %v1602
  %v1685 = vmax.f32 %v1260, %v1607
  %v1686 = vmax.f32 %v1261, %v1612
  %v1687 = vmax.f32 %v1262, %v1617
  %v1688 = vmax.f32 %v1263, %v1622
  %v1689 = vmax.f32 %v1264, %v1627
  %v1690 = vmax.f32 %v1265, %v1632
  %v1691 = vmax.f32 %v1266, %v1637
  %v1692 = vmax.f32 %v1267, %v1642
  %v1693 = vmax.f32 %v1268, %v1647
  %v1694 = vmax.f32 %v1269, %v1652
  %v1695 = vmax.f32 %v1270, %v1657
  %v1696 = vld [vmem:[%s5] sm:$0x1]
  %v1698 = vlaneseq
  %v1699 = vshrl.u32 %v1698, 7
  %v1700 = vsub.s32 0, %v1699
  %v1701 = vrot.slane %v1696, %v1700
  %v1703 = vadd.f32 %v1660, %v1701
  %v1704 = vadd.f32 %v1661, %v1701
  %v1705 = vadd.f32 %v1662, %v1701
  %v1706 = vadd.f32 %v1663, %v1701
  %v1707 = vadd.f32 %v1664, %v1701
  %v1708 = vadd.f32 %v1665, %v1701
  %v1709 = vadd.f32 %v1666, %v1701
  %v1710 = vadd.f32 %v1667, %v1701
  %v1711 = vadd.f32 %v1668, %v1701
  %v1712 = vadd.f32 %v1669, %v1701
  %v1713 = vadd.f32 %v1670, %v1701
  %v1714 = vadd.f32 %v1671, %v1701
  %v1715 = vadd.f32 %v1672, %v1701
  %v1716 = vadd.f32 %v1673, %v1701
  %v1717 = vadd.f32 %v1674, %v1701
  %v1718 = vadd.f32 %v1675, %v1701
  %v1719 = vadd.f32 %v1676, %v1701
  %v1720 = vadd.f32 %v1677, %v1701
  %v1721 = vadd.f32 %v1678, %v1701
  %v1722 = vadd.f32 %v1679, %v1701
  %v1723 = vadd.f32 %v1680, %v1701
  %v1724 = vadd.f32 %v1681, %v1701
  %v1725 = vadd.f32 %v1682, %v1701
  %v1726 = vadd.f32 %v1683, %v1701
  %v1727 = vadd.f32 %v1684, %v1701
  %v1728 = vadd.f32 %v1685, %v1701
  %v1729 = vadd.f32 %v1686, %v1701
  %v1730 = vadd.f32 %v1687, %v1701
  %v1731 = vadd.f32 %v1688, %v1701
  %v1732 = vadd.f32 %v1689, %v1701
  %v1733 = vadd.f32 %v1690, %v1701
  %v1734 = vadd.f32 %v1691, %v1701
  %v1735 = vadd.f32 %v1692, %v1701
  %v1736 = vadd.f32 %v1693, %v1701
  %v1737 = vadd.f32 %v1694, %v1701
  %v1738 = vadd.f32 %v1695, %v1701
  %v1739 = vmax.f32 %v1703, 0.0
  %v1740 = vmax.f32 %v1704, 0.0
  %v1741 = vmax.f32 %v1705, 0.0
  %v1742 = vmax.f32 %v1706, 0.0
  %v1743 = vmax.f32 %v1707, 0.0
  %v1744 = vmax.f32 %v1708, 0.0
  %v1745 = vmax.f32 %v1709, 0.0
  %v1746 = vmax.f32 %v1710, 0.0
  %v1747 = vmax.f32 %v1711, 0.0
  %v1748 = vmax.f32 %v1712, 0.0
  %v1749 = vmax.f32 %v1713, 0.0
  %v1750 = vmax.f32 %v1714, 0.0
  %v1751 = vmax.f32 %v1715, 0.0
  %v1752 = vmax.f32 %v1716, 0.0
  %v1753 = vmax.f32 %v1717, 0.0
  %v1754 = vmax.f32 %v1718, 0.0
  %v1755 = vmax.f32 %v1719, 0.0
  %v1756 = vmax.f32 %v1720, 0.0
  %v1757 = vmax.f32 %v1721, 0.0
  %v1758 = vmax.f32 %v1722, 0.0
  %v1759 = vmax.f32 %v1723, 0.0
  %v1760 = vmax.f32 %v1724, 0.0
  %v1761 = vmax.f32 %v1725, 0.0
  %v1762 = vmax.f32 %v1726, 0.0
  %v1763 = vmax.f32 %v1727, 0.0
  %v1764 = vmax.f32 %v1728, 0.0
  %v1765 = vmax.f32 %v1729, 0.0
  %v1766 = vmax.f32 %v1730, 0.0
  %v1767 = vmax.f32 %v1731, 0.0
  %v1768 = vmax.f32 %v1732, 0.0
  %v1769 = vmax.f32 %v1733, 0.0
  %v1770 = vmax.f32 %v1734, 0.0
  %v1771 = vmax.f32 %v1735, 0.0
  %v1772 = vmax.f32 %v1736, 0.0
  %v1773 = vmax.f32 %v1737, 0.0
  %v1774 = vmax.f32 %v1738, 0.0
  %1775 = vst [vmem:[%s6] sm:$0xff] %v1739
  %1776 = vst [vmem:[%s6 + $0x8] sm:$0xff] %v1740
  %1777 = vst [vmem:[%s6 + $0x10] sm:$0xff] %v1741
  %1778 = vst [vmem:[%s6 + $0x18] sm:$0xff] %v1742
  %1779 = vst [vmem:[%s6 + $0x20] sm:$0xff] %v1743
  %1780 = vst [vmem:[%s6 + $0x28] sm:$0xff] %v1744
  %1781 = vst [vmem:[%s6 + $0x30] sm:$0xff] %v1745
  %1782 = vst [vmem:[%s6 + $0x38] sm:$0xff] %v1746
  %1783 = vst [vmem:[%s6 + $0x40] sm:$0xff] %v1747
  %1784 = vst [vmem:[%s6 + $0x48] sm:$0xff] %v1748
  %1785 = vst [vmem:[%s6 + $0x50] sm:$0xff] %v1749
  %1786 = vst [vmem:[%s6 + $0x58] sm:$0xff] %v1750
  %1787 = vst [vmem:[%s6 + $0x60] sm:$0xff] %v1751
  %1788 = vst [vmem:[%s6 + $0x68] sm:$0xff] %v1752
  %1789 = vst [vmem:[%s6 + $0x70] sm:$0xff] %v1753
  %1790 = vst [vmem:[%s6 + $0x78] sm:$0xff] %v1754
  %1791 = vst [vmem:[%s6 + $0x80] sm:$0xff] %v1755
  %1792 = vst [vmem:[%s6 + $0x88] sm:$0xff] %v1756
  %1793 = vst [vmem:[%s6 + $0x90] sm:$0xff] %v1757
  %1794 = vst [vmem:[%s6 + $0x98] sm:$0xff] %v1758
  %1795 = vst [vmem:[%s6 + $0xa0] sm:$0xff] %v1759
  %1796 = vst [vmem:[%s6 + $0xa8] sm:$0xff] %v1760
  %1797 = vst [vmem:[%s6 + $0xb0] sm:$0xff] %v1761
  %1798 = vst [vmem:[%s6 + $0xb8] sm:$0xff] %v1762
  %1799 = vst [vmem:[%s6 + $0xc0] sm:$0xff] %v1763
  %1800 = vst [vmem:[%s6 + $0xc8] sm:$0xff] %v1764
  %1801 = vst [vmem:[%s6 + $0xd0] sm:$0xff] %v1765
  %1802 = vst [vmem:[%s6 + $0xd8] sm:$0xff] %v1766
  %1803 = vst [vmem:[%s6 + $0xe0] sm:$0xff] %v1767
  %1804 = vst [vmem:[%s6 + $0xe8] sm:$0xff] %v1768
  %1805 = vst [vmem:[%s6 + $0xf0] sm:$0xff] %v1769
  %1806 = vst [vmem:[%s6 + $0xf8] sm:$0xff] %v1770
  %1807 = vst [vmem:[%s6 + $0x100] sm:$0xff] %v1771
  %1808 = vst [vmem:[%s6 + $0x108] sm:$0xff] %v1772
  %1809 = vst [vmem:[%s6 + $0x110] sm:$0xff] %v1773
  %1810 = vst [vmem:[%s6 + $0x118] sm:$0xff] %v1774
  // Predicated region
  $region26: #{net1_forward.2} parent=0 // pred_check
    _
  $region27: #{net1_forward.2} parent=0 // pred_check_branch
    %1812 = sbr.rel (0) target = $region29
  $region28: #{net1_forward.2} parent=0 // pred_region
    _
  $region29: #{net1_forward.2} parent=0 // pred_fallthru
    _
  // Predicated region
  $region30: #{net1_forward.2} parent=0 // pred_check
    _
  $region31: #{net1_forward.2} parent=0 // pred_check_branch
    %1814 = sbr.rel (0) target = $region33
  $region32: #{net1_forward.2} parent=0 // pred_region
    _
  $region33: #{net1_forward.2} parent=0 // pred_fallthru
    _

// kernel: net1_forward.3
$region0: #{net1_forward.3}
  #allocation0 [shape = 'u32[]', space=smem, size = 0x4, offset = 0x4, fixed_abs, tag = 'smem constant byte address 0x4 - core index']
  #allocation1 [shape = 'u32[144,128]{1,0:T(1,128)}', space=vmem, size = 0x12000, scoped, tag = 'internal scratch']
  %s0 = inlined_call_operand.vmem [shape: f32[2,1440], index: 0, kind: input, shape index: {}]
  %s1 = inlined_call_operand.vmem [shape: f32[1440,320], index: 1, kind: input, shape index: {}]
  %s2 = inlined_call_operand.vmem [shape: f32[1,320], index: 2, kind: input, shape index: {}]
  %s3 = inlined_call_operand.vmem [shape: f32[320,50], index: 3, kind: input, shape index: {}]
  %s4 = inlined_call_operand.vmem [shape: f32[1,50], index: 4, kind: input, shape index: {}]
  %s5 = inlined_call_operand.vmem [shape: f32[50,128], index: 5, kind: input, shape index: {}]
  %s6 = inlined_call_operand.vmem [shape: f32[1,128], index: 6, kind: input, shape index: {}]
  %s7 = inlined_call_operand.hbm [shape: f32[2,128], index: 7, kind: output, shape index: {}]
  %s8 = sld [smem:[#allocation0]]
  $region38: #{net1_forward.3} parent=0
    _
  %s10 = ssub.s32 1, %s8
  %s11 = scalar_select 0, %s10, %s8
  $region1: #{net1_forward.3} parent=0
    #allocation2 [shape = 'u8[1024]{0}', space=vmem, size = 0x400, scoped, tag = 'output window, operand 0, single buffered']
    #allocation3 [shape = 's32[1]{0}', space=sflag, size = 0x4, scoped, tag = 'scoped memory for net1_forward.3']
    %12 = vsyncpa [#allocation3], 0
    // Predicated region
    $region2: #{net1_forward.3} parent=1 // pred_check
      _
    $region3: #{net1_forward.3} parent=1 // pred_check_branch
      %14 = sbr.rel (0) target = $region5
    $region4: #{net1_forward.3} parent=1 // pred_region
      _
    $region5: #{net1_forward.3} parent=1 // pred_fallthru
      _
    // Predicated region
    $region6: #{net1_forward.3} parent=1 // pred_check
      _
    $region7: #{net1_forward.3} parent=1 // pred_check_branch
      %16 = sbr.rel (0) target = $region9
    $region8: #{net1_forward.3} parent=1 // pred_region
      _
    $region9: #{net1_forward.3} parent=1 // pred_fallthru
      _
    // Predicated region
    $region10: #{net1_forward.3} parent=1 // pred_check
      _
    $region11: #{net1_forward.3} parent=1 // pred_check_branch
      %18 = sbr.rel (0) target = $region13
    $region12: #{net1_forward.3} parent=1 // pred_region
      _
    $region13: #{net1_forward.3} parent=1 // pred_fallthru
      _
    // Predicated region
    $region14: #{net1_forward.3} parent=1 // pred_check
      _
    $region15: #{net1_forward.3} parent=1 // pred_check_branch
      %20 = sbr.rel (0) target = $region17
    $region16: #{net1_forward.3} parent=1 // pred_region
      _
    $region17: #{net1_forward.3} parent=1 // pred_fallthru
      _
    // Predicated region
    $region18: #{net1_forward.3} parent=1 // pred_check
      _
    $region19: #{net1_forward.3} parent=1 // pred_check_branch
      %22 = sbr.rel (0) target = $region21
    $region20: #{net1_forward.3} parent=1 // pred_region
      _
    $region21: #{net1_forward.3} parent=1 // pred_fallthru
      _
    // Predicated region
    $region22: #{net1_forward.3} parent=1 // pred_check
      _
    $region23: #{net1_forward.3} parent=1 // pred_check_branch
      %24 = sbr.rel (0) target = $region25
    $region24: #{net1_forward.3} parent=1 // pred_region
      _
    $region25: #{net1_forward.3} parent=1 // pred_fallthru
      _
    // Predicated region
    $region26: #{net1_forward.3} parent=1 // pred_check
      _
    $region27: #{net1_forward.3} parent=1 // pred_check_branch
      %26 = sbr.rel (0) target = $region29
    $region28: #{net1_forward.3} parent=1 // pred_region
      _
    $region29: #{net1_forward.3} parent=1 // pred_fallthru
      _
    %v27 = vld [vmem:[%s0] sm:$0xff]
    %v28 = vld [vmem:[%s0 + $0x8] sm:$0xff]
    %v29 = vld [vmem:[%s0 + $0x10] sm:$0xff]
    %v30 = vld [vmem:[%s1] sm:$0xff]
    %v31 = vld [vmem:[%s1 + $0x8] sm:$0xff]
    %v32 = vld [vmem:[%s1 + $0x10] sm:$0xff]
    %v33 = vld [vmem:[%s1 + $0x18] sm:$0xff]
    %v34 = vld [vmem:[%s1 + $0x20] sm:$0xff]
    %v35 = vld [vmem:[%s1 + $0x28] sm:$0xff]
    %v36 = vld [vmem:[%s1 + $0x30] sm:$0xff]
    %v37 = vld [vmem:[%s1 + $0x38] sm:$0xff]
    %v38 = vld [vmem:[%s1 + $0x40] sm:$0xff]
    %v39 = vld [vmem:[%s1 + $0x48] sm:$0xff]
    %v40 = vld [vmem:[%s1 + $0x50] sm:$0xff]
    %v41 = vld [vmem:[%s1 + $0x58] sm:$0xff]
    %v42 = vld [vmem:[%s1 + $0x60] sm:$0xff]
    %v43 = vld [vmem:[%s1 + $0x68] sm:$0xff]
    %v44 = vld [vmem:[%s1 + $0x70] sm:$0xff]
    %v45 = vld [vmem:[%s1 + $0x78] sm:$0xff]
    %v46 = vld [vmem:[%s1 + $0x80] sm:$0xff]
    %v47 = vld [vmem:[%s1 + $0x88] sm:$0xff]
    %v48 = vld [vmem:[%s1 + $0x90] sm:$0xff]
    %v49 = vld [vmem:[%s1 + $0x98] sm:$0xff]
    %v50 = vld [vmem:[%s1 + $0xa0] sm:$0xff]
    %v51 = vld [vmem:[%s1 + $0xa8] sm:$0xff]
    %v52 = vld [vmem:[%s1 + $0xb0] sm:$0xff]
    %v53 = vld [vmem:[%s1 + $0xb8] sm:$0xff]
    %v54 = vld [vmem:[%s1 + $0xc0] sm:$0xff]
    %v55 = vld [vmem:[%s1 + $0xc8] sm:$0xff]
    %v56 = vld [vmem:[%s1 + $0xd0] sm:$0xff]
    %v57 = vld [vmem:[%s1 + $0xd8] sm:$0xff]
    %v58 = vld [vmem:[%s1 + $0xe0] sm:$0xff]
    %v59 = vld [vmem:[%s1 + $0xe8] sm:$0xff]
    %v60 = vld [vmem:[%s1 + $0xf0] sm:$0xff]
    %v61 = vld [vmem:[%s1 + $0xf8] sm:$0xff]
    %v62 = vld [vmem:[%s1 + $0x100] sm:$0xff]
    %v63 = vld [vmem:[%s1 + $0x108] sm:$0xff]
    %v64 = vld [vmem:[%s1 + $0x110] sm:$0xff]
    %v65 = vld [vmem:[%s1 + $0x118] sm:$0xff]
    %v66 = vld [vmem:[%s1 + $0x120] sm:$0xff]
    %v67 = vld [vmem:[%s1 + $0x128] sm:$0xff]
    %v68 = vld [vmem:[%s1 + $0x130] sm:$0xff]
    %v69 = vld [vmem:[%s1 + $0x138] sm:$0xff]
    %v70 = vld [vmem:[%s1 + $0x140] sm:$0xff]
    %v71 = vld [vmem:[%s1 + $0x148] sm:$0xff]
    %v72 = vld [vmem:[%s1 + $0x150] sm:$0xff]
    %v73 = vld [vmem:[%s1 + $0x158] sm:$0xff]
    %v74 = vld [vmem:[%s1 + $0x160] sm:$0xff]
    %v75 = vld [vmem:[%s1 + $0x168] sm:$0xff]
    %v76 = vld [vmem:[%s1 + $0x170] sm:$0xff]
    %v77 = vld [vmem:[%s1 + $0x178] sm:$0xff]
    %v78 = vld [vmem:[%s1 + $0x180] sm:$0xff]
    %v79 = vld [vmem:[%s1 + $0x188] sm:$0xff]
    %v80 = vld [vmem:[%s1 + $0x190] sm:$0xff]
    %v81 = vld [vmem:[%s1 + $0x198] sm:$0xff]
    %v82 = vld [vmem:[%s1 + $0x1a0] sm:$0xff]
    %v83 = vld [vmem:[%s1 + $0x1a8] sm:$0xff]
    %v84 = vld [vmem:[%s1 + $0x1b0] sm:$0xff]
    %v85 = vld [vmem:[%s1 + $0x1b8] sm:$0xff]
    %v86 = vld [vmem:[%s1 + $0x1c0] sm:$0xff]
    %v87 = vld [vmem:[%s1 + $0x1c8] sm:$0xff]
    %v88 = vld [vmem:[%s1 + $0x1d0] sm:$0xff]
    %v89 = vld [vmem:[%s1 + $0x1d8] sm:$0xff]
    %v90 = vld [vmem:[%s1 + $0x1e0] sm:$0xff]
    %v91 = vld [vmem:[%s1 + $0x1e8] sm:$0xff]
    %v92 = vld [vmem:[%s1 + $0x1f0] sm:$0xff]
    %v93 = vld [vmem:[%s1 + $0x1f8] sm:$0xff]
    %v94 = vld [vmem:[%s1 + $0x200] sm:$0xff]
    %v95 = vld [vmem:[%s1 + $0x208] sm:$0xff]
    %v96 = vld [vmem:[%s1 + $0x210] sm:$0xff]
    %v97 = vld [vmem:[%s1 + $0x218] sm:$0xff]
    %v98 = vld [vmem:[%s1 + $0x220] sm:$0xff]
    %v99 = vld [vmem:[%s1 + $0x228] sm:$0xff]
    %v100 = vld [vmem:[%s1 + $0x230] sm:$0xff]
    %v101 = vld [vmem:[%s1 + $0x238] sm:$0xff]
    %v102 = vld [vmem:[%s1 + $0x240] sm:$0xff]
    %v103 = vld [vmem:[%s1 + $0x248] sm:$0xff]
    %v104 = vld [vmem:[%s1 + $0x250] sm:$0xff]
    %v105 = vld [vmem:[%s1 + $0x258] sm:$0xff]
    %v106 = vld [vmem:[%s1 + $0x260] sm:$0xff]
    %v107 = vld [vmem:[%s1 + $0x268] sm:$0xff]
    %v108 = vld [vmem:[%s1 + $0x270] sm:$0xff]
    %v109 = vld [vmem:[%s1 + $0x278] sm:$0xff]
    %v110 = vld [vmem:[%s1 + $0x280] sm:$0xff]
    %v111 = vld [vmem:[%s1 + $0x288] sm:$0xff]
    %v112 = vld [vmem:[%s1 + $0x290] sm:$0xff]
    %v113 = vld [vmem:[%s1 + $0x298] sm:$0xff]
    %v114 = vld [vmem:[%s1 + $0x2a0] sm:$0xff]
    %v115 = vld [vmem:[%s1 + $0x2a8] sm:$0xff]
    %v116 = vld [vmem:[%s1 + $0x2b0] sm:$0xff]
    %v117 = vld [vmem:[%s1 + $0x2b8] sm:$0xff]
    %v118 = vld [vmem:[%s1 + $0x2c0] sm:$0xff]
    %v119 = vld [vmem:[%s1 + $0x2c8] sm:$0xff]
    %v120 = vld [vmem:[%s1 + $0x2d0] sm:$0xff]
    %v121 = vld [vmem:[%s1 + $0x2d8] sm:$0xff]
    %v122 = vld [vmem:[%s1 + $0x2e0] sm:$0xff]
    %v123 = vld [vmem:[%s1 + $0x2e8] sm:$0xff]
    %v124 = vld [vmem:[%s1 + $0x2f0] sm:$0xff]
    %v125 = vld [vmem:[%s1 + $0x2f8] sm:$0xff]
    %v126 = vld [vmem:[%s1 + $0x300] sm:$0xff]
    %v127 = vld [vmem:[%s1 + $0x308] sm:$0xff]
    %v128 = vld [vmem:[%s1 + $0x310] sm:$0xff]
    %v129 = vld [vmem:[%s1 + $0x318] sm:$0xff]
    %v130 = vld [vmem:[%s1 + $0x320] sm:$0xff]
    %v131 = vld [vmem:[%s1 + $0x328] sm:$0xff]
    %v132 = vld [vmem:[%s1 + $0x330] sm:$0xff]
    %v133 = vld [vmem:[%s1 + $0x338] sm:$0xff]
    %v134 = vld [vmem:[%s1 + $0x340] sm:$0xff]
    %v135 = vld [vmem:[%s1 + $0x348] sm:$0xff]
    %v136 = vld [vmem:[%s1 + $0x350] sm:$0xff]
    %v137 = vld [vmem:[%s1 + $0x358] sm:$0xff]
    %v138 = vld [vmem:[%s1 + $0x360] sm:$0xff]
    %v139 = vld [vmem:[%s1 + $0x368] sm:$0xff]
    %v140 = vld [vmem:[%s1 + $0x370] sm:$0xff]
    %v141 = vld [vmem:[%s1 + $0x378] sm:$0xff]
    %v142 = vld [vmem:[%s1 + $0x380] sm:$0xff]
    %v143 = vld [vmem:[%s1 + $0x388] sm:$0xff]
    %v144 = vld [vmem:[%s1 + $0x390] sm:$0xff]
    %v145 = vld [vmem:[%s1 + $0x398] sm:$0xff]
    %v146 = vld [vmem:[%s1 + $0x3a0] sm:$0xff]
    %v147 = vld [vmem:[%s1 + $0x3a8] sm:$0xff]
    %v148 = vld [vmem:[%s1 + $0x3b0] sm:$0xff]
    %v149 = vld [vmem:[%s1 + $0x3b8] sm:$0xff]
    %v150 = vld [vmem:[%s1 + $0x3c0] sm:$0xff]
    %v151 = vld [vmem:[%s1 + $0x3c8] sm:$0xff]
    %v152 = vld [vmem:[%s1 + $0x3d0] sm:$0xff]
    %v153 = vld [vmem:[%s1 + $0x3d8] sm:$0xff]
    %v154 = vld [vmem:[%s1 + $0x3e0] sm:$0xff]
    %v155 = vld [vmem:[%s1 + $0x3e8] sm:$0xff]
    %v156 = vld [vmem:[%s1 + $0x3f0] sm:$0xff]
    %v157 = vld [vmem:[%s1 + $0x3f8] sm:$0xff]
    %v158 = vld [vmem:[%s1 + $0x400] sm:$0xff]
    %v159 = vld [vmem:[%s1 + $0x408] sm:$0xff]
    %v160 = vld [vmem:[%s1 + $0x410] sm:$0xff]
    %v161 = vld [vmem:[%s1 + $0x418] sm:$0xff]
    %v162 = vld [vmem:[%s1 + $0x420] sm:$0xff]
    %v163 = vld [vmem:[%s1 + $0x428] sm:$0xff]
    %v164 = vld [vmem:[%s1 + $0x430] sm:$0xff]
    %v165 = vld [vmem:[%s1 + $0x438] sm:$0xff]
    %v166 = vld [vmem:[%s1 + $0x440] sm:$0xff]
    %v167 = vld [vmem:[%s1 + $0x448] sm:$0xff]
    %v168 = vld [vmem:[%s1 + $0x450] sm:$0xff]
    %v169 = vld [vmem:[%s1 + $0x458] sm:$0xff]
    %v170 = vld [vmem:[%s1 + $0x460] sm:$0xff]
    %v171 = vld [vmem:[%s1 + $0x468] sm:$0xff]
    %v172 = vld [vmem:[%s1 + $0x470] sm:$0xff]
    %v173 = vld [vmem:[%s1 + $0x478] sm:$0xff]
    %v174 = vld [vmem:[%s1 + $0x480] sm:$0xff]
    %v175 = vld [vmem:[%s1 + $0x488] sm:$0xff]
    %v176 = vld [vmem:[%s1 + $0x490] sm:$0xff]
    %v177 = vld [vmem:[%s1 + $0x498] sm:$0xff]
    %v178 = vld [vmem:[%s1 + $0x4a0] sm:$0xff]
    %v179 = vld [vmem:[%s1 + $0x4a8] sm:$0xff]
    %v180 = vld [vmem:[%s1 + $0x4b0] sm:$0xff]
    %v181 = vld [vmem:[%s1 + $0x4b8] sm:$0xff]
    %v182 = vld [vmem:[%s1 + $0x4c0] sm:$0xff]
    %v183 = vld [vmem:[%s1 + $0x4c8] sm:$0xff]
    %v184 = vld [vmem:[%s1 + $0x4d0] sm:$0xff]
    %v185 = vld [vmem:[%s1 + $0x4d8] sm:$0xff]
    %v186 = vld [vmem:[%s1 + $0x4e0] sm:$0xff]
    %v187 = vld [vmem:[%s1 + $0x4e8] sm:$0xff]
    %v188 = vld [vmem:[%s1 + $0x4f0] sm:$0xff]
    %v189 = vld [vmem:[%s1 + $0x4f8] sm:$0xff]
    %v190 = vld [vmem:[%s1 + $0x500] sm:$0xff]
    %v191 = vld [vmem:[%s1 + $0x508] sm:$0xff]
    %v192 = vld [vmem:[%s1 + $0x510] sm:$0xff]
    %v193 = vld [vmem:[%s1 + $0x518] sm:$0xff]
    %v194 = vld [vmem:[%s1 + $0x520] sm:$0xff]
    %v195 = vld [vmem:[%s1 + $0x528] sm:$0xff]
    %v196 = vld [vmem:[%s1 + $0x530] sm:$0xff]
    %v197 = vld [vmem:[%s1 + $0x538] sm:$0xff]
    %v198 = vld [vmem:[%s1 + $0x540] sm:$0xff]
    %v199 = vld [vmem:[%s1 + $0x548] sm:$0xff]
    %v200 = vld [vmem:[%s1 + $0x550] sm:$0xff]
    %v201 = vld [vmem:[%s1 + $0x558] sm:$0xff]
    %v202 = vld [vmem:[%s1 + $0x560] sm:$0xff]
    %v203 = vld [vmem:[%s1 + $0x568] sm:$0xff]
    %v204 = vld [vmem:[%s1 + $0x570] sm:$0xff]
    %v205 = vld [vmem:[%s1 + $0x578] sm:$0xff]
    %v206 = vld [vmem:[%s1 + $0x580] sm:$0xff]
    %v207 = vld [vmem:[%s1 + $0x588] sm:$0xff]
    %v208 = vld [vmem:[%s1 + $0x590] sm:$0xff]
    %v209 = vld [vmem:[%s1 + $0x598] sm:$0xff]
    %v210 = vld [vmem:[%s1 + $0x5a0] sm:$0xff]
    %v211 = vld [vmem:[%s1 + $0x5a8] sm:$0xff]
    %v212 = vld [vmem:[%s1 + $0x5b0] sm:$0xff]
    %v213 = vld [vmem:[%s1 + $0x5b8] sm:$0xff]
    %v214 = vld [vmem:[%s1 + $0x5c0] sm:$0xff]
    %v215 = vld [vmem:[%s1 + $0x5c8] sm:$0xff]
    %v216 = vld [vmem:[%s1 + $0x5d0] sm:$0xff]
    %v217 = vld [vmem:[%s1 + $0x5d8] sm:$0xff]
    %v218 = vld [vmem:[%s1 + $0x5e0] sm:$0xff]
    %v219 = vld [vmem:[%s1 + $0x5e8] sm:$0xff]
    %v220 = vld [vmem:[%s1 + $0x5f0] sm:$0xff]
    %v221 = vld [vmem:[%s1 + $0x5f8] sm:$0xff]
    %v222 = vld [vmem:[%s1 + $0x600] sm:$0xff]
    %v223 = vld [vmem:[%s1 + $0x608] sm:$0xff]
    %v224 = vld [vmem:[%s1 + $0x610] sm:$0xff]
    %v225 = vld [vmem:[%s1 + $0x618] sm:$0xff]
    %v226 = vld [vmem:[%s1 + $0x620] sm:$0xff]
    %v227 = vld [vmem:[%s1 + $0x628] sm:$0xff]
    %v228 = vld [vmem:[%s1 + $0x630] sm:$0xff]
    %v229 = vld [vmem:[%s1 + $0x638] sm:$0xff]
    %v230 = vld [vmem:[%s1 + $0x640] sm:$0xff]
    %v231 = vld [vmem:[%s1 + $0x648] sm:$0xff]
    %v232 = vld [vmem:[%s1 + $0x650] sm:$0xff]
    %v233 = vld [vmem:[%s1 + $0x658] sm:$0xff]
    %v234 = vld [vmem:[%s1 + $0x660] sm:$0xff]
    %v235 = vld [vmem:[%s1 + $0x668] sm:$0xff]
    %v236 = vld [vmem:[%s1 + $0x670] sm:$0xff]
    %v237 = vld [vmem:[%s1 + $0x678] sm:$0xff]
    %v238 = vld [vmem:[%s1 + $0x680] sm:$0xff]
    %v239 = vld [vmem:[%s1 + $0x688] sm:$0xff]
    %v240 = vld [vmem:[%s1 + $0x690] sm:$0xff]
    %v241 = vld [vmem:[%s1 + $0x698] sm:$0xff]
    %v242 = vld [vmem:[%s1 + $0x6a0] sm:$0xff]
    %v243 = vld [vmem:[%s1 + $0x6a8] sm:$0xff]
    %v244 = vld [vmem:[%s1 + $0x6b0] sm:$0xff]
    %v245 = vld [vmem:[%s1 + $0x6b8] sm:$0xff]
    %v246 = vld [vmem:[%s1 + $0x6c0] sm:$0xff]
    %v247 = vld [vmem:[%s1 + $0x6c8] sm:$0xff]
    %v248 = vld [vmem:[%s1 + $0x6d0] sm:$0xff]
    %v249 = vld [vmem:[%s1 + $0x6d8] sm:$0xff]
    %v250 = vld [vmem:[%s1 + $0x6e0] sm:$0xff]
    %v251 = vld [vmem:[%s1 + $0x6e8] sm:$0xff]
    %v252 = vld [vmem:[%s1 + $0x6f0] sm:$0xff]
    %v253 = vld [vmem:[%s1 + $0x6f8] sm:$0xff]
    %v254 = vld [vmem:[%s1 + $0x700] sm:$0xff]
    %v255 = vld [vmem:[%s1 + $0x708] sm:$0xff]
    %v256 = vld [vmem:[%s1 + $0x710] sm:$0xff]
    %v257 = vld [vmem:[%s1 + $0x718] sm:$0xff]
    %v258 = vld [vmem:[%s1 + $0x720] sm:$0xff]
    %v259 = vld [vmem:[%s1 + $0x728] sm:$0xff]
    %v260 = vld [vmem:[%s1 + $0x730] sm:$0xff]
    %v261 = vld [vmem:[%s1 + $0x738] sm:$0xff]
    %v262 = vld [vmem:[%s1 + $0x740] sm:$0xff]
    %v263 = vld [vmem:[%s1 + $0x748] sm:$0xff]
    %v264 = vld [vmem:[%s1 + $0x750] sm:$0xff]
    %v265 = vld [vmem:[%s1 + $0x758] sm:$0xff]
    %v266 = vld [vmem:[%s1 + $0x760] sm:$0xff]
    %v267 = vld [vmem:[%s1 + $0x768] sm:$0xff]
    %v268 = vld [vmem:[%s1 + $0x770] sm:$0xff]
    %v269 = vld [vmem:[%s1 + $0x778] sm:$0xff]
    %v270 = vld [vmem:[%s1 + $0x780] sm:$0xff]
    %v271 = vld [vmem:[%s1 + $0x788] sm:$0xff]
    %v272 = vld [vmem:[%s1 + $0x790] sm:$0xff]
    %v273 = vld [vmem:[%s1 + $0x798] sm:$0xff]
    %v274 = vld [vmem:[%s1 + $0x7a0] sm:$0xff]
    %v275 = vld [vmem:[%s1 + $0x7a8] sm:$0xff]
    %v276 = vld [vmem:[%s1 + $0x7b0] sm:$0xff]
    %v277 = vld [vmem:[%s1 + $0x7b8] sm:$0xff]
    %v278 = vld [vmem:[%s1 + $0x7c0] sm:$0xff]
    %v279 = vld [vmem:[%s1 + $0x7c8] sm:$0xff]
    %v280 = vld [vmem:[%s1 + $0x7d0] sm:$0xff]
    %v281 = vld [vmem:[%s1 + $0x7d8] sm:$0xff]
    %v282 = vld [vmem:[%s1 + $0x7e0] sm:$0xff]
    %v283 = vld [vmem:[%s1 + $0x7e8] sm:$0xff]
    %v284 = vld [vmem:[%s1 + $0x7f0] sm:$0xff]
    %v285 = vld [vmem:[%s1 + $0x7f8] sm:$0xff]
    %v286 = vld [vmem:[%s1 + $0x800] sm:$0xff]
    %v287 = vld [vmem:[%s1 + $0x808] sm:$0xff]
    %v288 = vld [vmem:[%s1 + $0x810] sm:$0xff]
    %v289 = vld [vmem:[%s1 + $0x818] sm:$0xff]
    %v290 = vld [vmem:[%s1 + $0x820] sm:$0xff]
    %v291 = vld [vmem:[%s1 + $0x828] sm:$0xff]
    %v292 = vld [vmem:[%s1 + $0x830] sm:$0xff]
    %v293 = vld [vmem:[%s1 + $0x838] sm:$0xff]
    %v294 = vld [vmem:[%s1 + $0x840] sm:$0xff]
    %v295 = vld [vmem:[%s1 + $0x848] sm:$0xff]
    %v296 = vld [vmem:[%s1 + $0x850] sm:$0xff]
    %v297 = vld [vmem:[%s1 + $0x858] sm:$0xff]
    %v298 = vld [vmem:[%s1 + $0x860] sm:$0xff]
    %v299 = vld [vmem:[%s1 + $0x868] sm:$0xff]
    %v300 = vld [vmem:[%s1 + $0x870] sm:$0xff]
    %v301 = vld [vmem:[%s1 + $0x878] sm:$0xff]
    %v302 = vld [vmem:[%s1 + $0x880] sm:$0xff]
    %v303 = vld [vmem:[%s1 + $0x888] sm:$0xff]
    %v304 = vld [vmem:[%s1 + $0x890] sm:$0xff]
    %v305 = vld [vmem:[%s1 + $0x898] sm:$0xff]
    %v306 = vld [vmem:[%s1 + $0x8a0] sm:$0xff]
    %v307 = vld [vmem:[%s1 + $0x8a8] sm:$0xff]
    %v308 = vld [vmem:[%s1 + $0x8b0] sm:$0xff]
    %v309 = vld [vmem:[%s1 + $0x8b8] sm:$0xff]
    %v310 = vld [vmem:[%s1 + $0x8c0] sm:$0xff]
    %v311 = vld [vmem:[%s1 + $0x8c8] sm:$0xff]
    %v312 = vld [vmem:[%s1 + $0x8d0] sm:$0xff]
    %v313 = vld [vmem:[%s1 + $0x8d8] sm:$0xff]
    %v314 = vld [vmem:[%s1 + $0x8e0] sm:$0xff]
    %v315 = vld [vmem:[%s1 + $0x8e8] sm:$0xff]
    %v316 = vld [vmem:[%s1 + $0x8f0] sm:$0xff]
    %v317 = vld [vmem:[%s1 + $0x8f8] sm:$0xff]
    %v318 = vld [vmem:[%s1 + $0x900] sm:$0xff]
    %v319 = vld [vmem:[%s1 + $0x908] sm:$0xff]
    %v320 = vld [vmem:[%s1 + $0x910] sm:$0xff]
    %v321 = vld [vmem:[%s1 + $0x918] sm:$0xff]
    %v322 = vld [vmem:[%s1 + $0x920] sm:$0xff]
    %v323 = vld [vmem:[%s1 + $0x928] sm:$0xff]
    %v324 = vld [vmem:[%s1 + $0x930] sm:$0xff]
    %v325 = vld [vmem:[%s1 + $0x938] sm:$0xff]
    %v326 = vld [vmem:[%s1 + $0x940] sm:$0xff]
    %v327 = vld [vmem:[%s1 + $0x948] sm:$0xff]
    %v328 = vld [vmem:[%s1 + $0x950] sm:$0xff]
    %v329 = vld [vmem:[%s1 + $0x958] sm:$0xff]
    %v330 = vld [vmem:[%s1 + $0x960] sm:$0xff]
    %v331 = vld [vmem:[%s1 + $0x968] sm:$0xff]
    %v332 = vld [vmem:[%s1 + $0x970] sm:$0xff]
    %v333 = vld [vmem:[%s1 + $0x978] sm:$0xff]
    %v334 = vld [vmem:[%s1 + $0x980] sm:$0xff]
    %v335 = vld [vmem:[%s1 + $0x988] sm:$0xff]
    %v336 = vld [vmem:[%s1 + $0x990] sm:$0xff]
    %v337 = vld [vmem:[%s1 + $0x998] sm:$0xff]
    %v338 = vld [vmem:[%s1 + $0x9a0] sm:$0xff]
    %v339 = vld [vmem:[%s1 + $0x9a8] sm:$0xff]
    %v340 = vld [vmem:[%s1 + $0x9b0] sm:$0xff]
    %v341 = vld [vmem:[%s1 + $0x9b8] sm:$0xff]
    %v342 = vld [vmem:[%s1 + $0x9c0] sm:$0xff]
    %v343 = vld [vmem:[%s1 + $0x9c8] sm:$0xff]
    %v344 = vld [vmem:[%s1 + $0x9d0] sm:$0xff]
    %v345 = vld [vmem:[%s1 + $0x9d8] sm:$0xff]
    %v346 = vld [vmem:[%s1 + $0x9e0] sm:$0xff]
    %v347 = vld [vmem:[%s1 + $0x9e8] sm:$0xff]
    %v348 = vld [vmem:[%s1 + $0x9f0] sm:$0xff]
    %v349 = vld [vmem:[%s1 + $0x9f8] sm:$0xff]
    %v350 = vld [vmem:[%s1 + $0xa00] sm:$0xff]
    %v351 = vld [vmem:[%s1 + $0xa08] sm:$0xff]
    %v352 = vld [vmem:[%s1 + $0xa10] sm:$0xff]
    %v353 = vld [vmem:[%s1 + $0xa18] sm:$0xff]
    %v354 = vld [vmem:[%s1 + $0xa20] sm:$0xff]
    %v355 = vld [vmem:[%s1 + $0xa28] sm:$0xff]
    %v356 = vld [vmem:[%s1 + $0xa30] sm:$0xff]
    %v357 = vld [vmem:[%s1 + $0xa38] sm:$0xff]
    %v358 = vld [vmem:[%s1 + $0xa40] sm:$0xff]
    %v359 = vld [vmem:[%s1 + $0xa48] sm:$0xff]
    %v360 = vld [vmem:[%s1 + $0xa50] sm:$0xff]
    %v361 = vld [vmem:[%s1 + $0xa58] sm:$0xff]
    %v362 = vld [vmem:[%s1 + $0xa60] sm:$0xff]
    %v363 = vld [vmem:[%s1 + $0xa68] sm:$0xff]
    %v364 = vld [vmem:[%s1 + $0xa70] sm:$0xff]
    %v365 = vld [vmem:[%s1 + $0xa78] sm:$0xff]
    %v366 = vld [vmem:[%s1 + $0xa80] sm:$0xff]
    %v367 = vld [vmem:[%s1 + $0xa88] sm:$0xff]
    %v368 = vld [vmem:[%s1 + $0xa90] sm:$0xff]
    %v369 = vld [vmem:[%s1 + $0xa98] sm:$0xff]
    %v370 = vld [vmem:[%s1 + $0xaa0] sm:$0xff]
    %v371 = vld [vmem:[%s1 + $0xaa8] sm:$0xff]
    %v372 = vld [vmem:[%s1 + $0xab0] sm:$0xff]
    %v373 = vld [vmem:[%s1 + $0xab8] sm:$0xff]
    %v374 = vld [vmem:[%s1 + $0xac0] sm:$0xff]
    %v375 = vld [vmem:[%s1 + $0xac8] sm:$0xff]
    %v376 = vld [vmem:[%s1 + $0xad0] sm:$0xff]
    %v377 = vld [vmem:[%s1 + $0xad8] sm:$0xff]
    %v378 = vld [vmem:[%s1 + $0xae0] sm:$0xff]
    %v379 = vld [vmem:[%s1 + $0xae8] sm:$0xff]
    %v380 = vld [vmem:[%s1 + $0xaf0] sm:$0xff]
    %v381 = vld [vmem:[%s1 + $0xaf8] sm:$0xff]
    %v382 = vld [vmem:[%s1 + $0xb00] sm:$0xff]
    %v383 = vld [vmem:[%s1 + $0xb08] sm:$0xff]
    %v384 = vld [vmem:[%s1 + $0xb10] sm:$0xff]
    %v385 = vld [vmem:[%s1 + $0xb18] sm:$0xff]
    %v386 = vld [vmem:[%s1 + $0xb20] sm:$0xff]
    %v387 = vld [vmem:[%s1 + $0xb28] sm:$0xff]
    %v388 = vld [vmem:[%s1 + $0xb30] sm:$0xff]
    %v389 = vld [vmem:[%s1 + $0xb38] sm:$0xff]
    %v390 = vld [vmem:[%s1 + $0xb40] sm:$0xff]
    %v391 = vld [vmem:[%s1 + $0xb48] sm:$0xff]
    %v392 = vld [vmem:[%s1 + $0xb50] sm:$0xff]
    %v393 = vld [vmem:[%s1 + $0xb58] sm:$0xff]
    %v394 = vld [vmem:[%s1 + $0xb60] sm:$0xff]
    %v395 = vld [vmem:[%s1 + $0xb68] sm:$0xff]
    %v396 = vld [vmem:[%s1 + $0xb70] sm:$0xff]
    %v397 = vld [vmem:[%s1 + $0xb78] sm:$0xff]
    %v398 = vld [vmem:[%s1 + $0xb80] sm:$0xff]
    %v399 = vld [vmem:[%s1 + $0xb88] sm:$0xff]
    %v400 = vld [vmem:[%s1 + $0xb90] sm:$0xff]
    %v401 = vld [vmem:[%s1 + $0xb98] sm:$0xff]
    %v402 = vld [vmem:[%s1 + $0xba0] sm:$0xff]
    %v403 = vld [vmem:[%s1 + $0xba8] sm:$0xff]
    %v404 = vld [vmem:[%s1 + $0xbb0] sm:$0xff]
    %v405 = vld [vmem:[%s1 + $0xbb8] sm:$0xff]
    %v406 = vld [vmem:[%s1 + $0xbc0] sm:$0xff]
    %v407 = vld [vmem:[%s1 + $0xbc8] sm:$0xff]
    %v408 = vld [vmem:[%s1 + $0xbd0] sm:$0xff]
    %v409 = vld [vmem:[%s1 + $0xbd8] sm:$0xff]
    %v410 = vld [vmem:[%s1 + $0xbe0] sm:$0xff]
    %v411 = vld [vmem:[%s1 + $0xbe8] sm:$0xff]
    %v412 = vld [vmem:[%s1 + $0xbf0] sm:$0xff]
    %v413 = vld [vmem:[%s1 + $0xbf8] sm:$0xff]
    %v414 = vld [vmem:[%s1 + $0xc00] sm:$0xff]
    %v415 = vld [vmem:[%s1 + $0xc08] sm:$0xff]
    %v416 = vld [vmem:[%s1 + $0xc10] sm:$0xff]
    %v417 = vld [vmem:[%s1 + $0xc18] sm:$0xff]
    %v418 = vld [vmem:[%s1 + $0xc20] sm:$0xff]
    %v419 = vld [vmem:[%s1 + $0xc28] sm:$0xff]
    %v420 = vld [vmem:[%s1 + $0xc30] sm:$0xff]
    %v421 = vld [vmem:[%s1 + $0xc38] sm:$0xff]
    %v422 = vld [vmem:[%s1 + $0xc40] sm:$0xff]
    %v423 = vld [vmem:[%s1 + $0xc48] sm:$0xff]
    %v424 = vld [vmem:[%s1 + $0xc50] sm:$0xff]
    %v425 = vld [vmem:[%s1 + $0xc58] sm:$0xff]
    %v426 = vld [vmem:[%s1 + $0xc60] sm:$0xff]
    %v427 = vld [vmem:[%s1 + $0xc68] sm:$0xff]
    %v428 = vld [vmem:[%s1 + $0xc70] sm:$0xff]
    %v429 = vld [vmem:[%s1 + $0xc78] sm:$0xff]
    %v430 = vld [vmem:[%s1 + $0xc80] sm:$0xff]
    %v431 = vld [vmem:[%s1 + $0xc88] sm:$0xff]
    %v432 = vld [vmem:[%s1 + $0xc90] sm:$0xff]
    %v433 = vld [vmem:[%s1 + $0xc98] sm:$0xff]
    %v434 = vld [vmem:[%s1 + $0xca0] sm:$0xff]
    %v435 = vld [vmem:[%s1 + $0xca8] sm:$0xff]
    %v436 = vld [vmem:[%s1 + $0xcb0] sm:$0xff]
    %v437 = vld [vmem:[%s1 + $0xcb8] sm:$0xff]
    %v438 = vld [vmem:[%s1 + $0xcc0] sm:$0xff]
    %v439 = vld [vmem:[%s1 + $0xcc8] sm:$0xff]
    %v440 = vld [vmem:[%s1 + $0xcd0] sm:$0xff]
    %v441 = vld [vmem:[%s1 + $0xcd8] sm:$0xff]
    %v442 = vld [vmem:[%s1 + $0xce0] sm:$0xff]
    %v443 = vld [vmem:[%s1 + $0xce8] sm:$0xff]
    %v444 = vld [vmem:[%s1 + $0xcf0] sm:$0xff]
    %v445 = vld [vmem:[%s1 + $0xcf8] sm:$0xff]
    %v446 = vld [vmem:[%s1 + $0xd00] sm:$0xff]
    %v447 = vld [vmem:[%s1 + $0xd08] sm:$0xff]
    %v448 = vld [vmem:[%s1 + $0xd10] sm:$0xff]
    %v449 = vld [vmem:[%s1 + $0xd18] sm:$0xff]
    %v450 = vld [vmem:[%s1 + $0xd20] sm:$0xff]
    %v451 = vld [vmem:[%s1 + $0xd28] sm:$0xff]
    %v452 = vld [vmem:[%s1 + $0xd30] sm:$0xff]
    %v453 = vld [vmem:[%s1 + $0xd38] sm:$0xff]
    %v454 = vld [vmem:[%s1 + $0xd40] sm:$0xff]
    %v455 = vld [vmem:[%s1 + $0xd48] sm:$0xff]
    %v456 = vld [vmem:[%s1 + $0xd50] sm:$0xff]
    %v457 = vld [vmem:[%s1 + $0xd58] sm:$0xff]
    %v458 = vld [vmem:[%s1 + $0xd60] sm:$0xff]
    %v459 = vld [vmem:[%s1 + $0xd68] sm:$0xff]
    %v460 = vld [vmem:[%s1 + $0xd70] sm:$0xff]
    %v461 = vld [vmem:[%s1 + $0xd78] sm:$0xff]
    %v462 = vld [vmem:[%s1 + $0xd80] sm:$0xff]
    %v463 = vld [vmem:[%s1 + $0xd88] sm:$0xff]
    %v464 = vld [vmem:[%s1 + $0xd90] sm:$0xff]
    %v465 = vld [vmem:[%s1 + $0xd98] sm:$0xff]
    %v466 = vld [vmem:[%s1 + $0xda0] sm:$0xff]
    %v467 = vld [vmem:[%s1 + $0xda8] sm:$0xff]
    %v468 = vld [vmem:[%s1 + $0xdb0] sm:$0xff]
    %v469 = vld [vmem:[%s1 + $0xdb8] sm:$0xff]
    %v470 = vld [vmem:[%s1 + $0xdc0] sm:$0xff]
    %v471 = vld [vmem:[%s1 + $0xdc8] sm:$0xff]
    %v472 = vld [vmem:[%s1 + $0xdd0] sm:$0xff]
    %v473 = vld [vmem:[%s1 + $0xdd8] sm:$0xff]
    %v474 = vld [vmem:[%s1 + $0xde0] sm:$0xff]
    %v475 = vld [vmem:[%s1 + $0xde8] sm:$0xff]
    %v476 = vld [vmem:[%s1 + $0xdf0] sm:$0xff]
    %v477 = vld [vmem:[%s1 + $0xdf8] sm:$0xff]
    %v478 = vld [vmem:[%s1 + $0xe00] sm:$0xff]
    %v479 = vld [vmem:[%s1 + $0xe08] sm:$0xff]
    %v480 = vld [vmem:[%s1 + $0xe10] sm:$0xff]
    %v481 = vld [vmem:[%s1 + $0xe18] sm:$0xff]
    %v482 = vld [vmem:[%s1 + $0xe20] sm:$0xff]
    %v483 = vld [vmem:[%s1 + $0xe28] sm:$0xff]
    %v484 = vld [vmem:[%s1 + $0xe30] sm:$0xff]
    %v485 = vld [vmem:[%s1 + $0xe38] sm:$0xff]
    %v486 = vld [vmem:[%s1 + $0xe40] sm:$0xff]
    %v487 = vld [vmem:[%s1 + $0xe48] sm:$0xff]
    %v488 = vld [vmem:[%s1 + $0xe50] sm:$0xff]
    %v489 = vld [vmem:[%s1 + $0xe58] sm:$0xff]
    %v490 = vld [vmem:[%s1 + $0xe60] sm:$0xff]
    %v491 = vld [vmem:[%s1 + $0xe68] sm:$0xff]
    %v492 = vld [vmem:[%s1 + $0xe70] sm:$0xff]
    %v493 = vld [vmem:[%s1 + $0xe78] sm:$0xff]
    %v494 = vld [vmem:[%s1 + $0xe80] sm:$0xff]
    %v495 = vld [vmem:[%s1 + $0xe88] sm:$0xff]
    %v496 = vld [vmem:[%s1 + $0xe90] sm:$0xff]
    %v497 = vld [vmem:[%s1 + $0xe98] sm:$0xff]
    %v498 = vld [vmem:[%s1 + $0xea0] sm:$0xff]
    %v499 = vld [vmem:[%s1 + $0xea8] sm:$0xff]
    %v500 = vld [vmem:[%s1 + $0xeb0] sm:$0xff]
    %v501 = vld [vmem:[%s1 + $0xeb8] sm:$0xff]
    %v502 = vld [vmem:[%s1 + $0xec0] sm:$0xff]
    %v503 = vld [vmem:[%s1 + $0xec8] sm:$0xff]
    %v504 = vld [vmem:[%s1 + $0xed0] sm:$0xff]
    %v505 = vld [vmem:[%s1 + $0xed8] sm:$0xff]
    %v506 = vld [vmem:[%s1 + $0xee0] sm:$0xff]
    %v507 = vld [vmem:[%s1 + $0xee8] sm:$0xff]
    %v508 = vld [vmem:[%s1 + $0xef0] sm:$0xff]
    %v509 = vld [vmem:[%s1 + $0xef8] sm:$0xff]
    %v510 = vld [vmem:[%s1 + $0xf00] sm:$0xff]
    %v511 = vld [vmem:[%s1 + $0xf08] sm:$0xff]
    %v512 = vld [vmem:[%s1 + $0xf10] sm:$0xff]
    %v513 = vld [vmem:[%s1 + $0xf18] sm:$0xff]
    %v514 = vld [vmem:[%s1 + $0xf20] sm:$0xff]
    %v515 = vld [vmem:[%s1 + $0xf28] sm:$0xff]
    %v516 = vld [vmem:[%s1 + $0xf30] sm:$0xff]
    %v517 = vld [vmem:[%s1 + $0xf38] sm:$0xff]
    %v518 = vld [vmem:[%s1 + $0xf40] sm:$0xff]
    %v519 = vld [vmem:[%s1 + $0xf48] sm:$0xff]
    %v520 = vld [vmem:[%s1 + $0xf50] sm:$0xff]
    %v521 = vld [vmem:[%s1 + $0xf58] sm:$0xff]
    %v522 = vld [vmem:[%s1 + $0xf60] sm:$0xff]
    %v523 = vld [vmem:[%s1 + $0xf68] sm:$0xff]
    %v524 = vld [vmem:[%s1 + $0xf70] sm:$0xff]
    %v525 = vld [vmem:[%s1 + $0xf78] sm:$0xff]
    %v526 = vld [vmem:[%s1 + $0xf80] sm:$0xff]
    %v527 = vld [vmem:[%s1 + $0xf88] sm:$0xff]
    %v528 = vld [vmem:[%s1 + $0xf90] sm:$0xff]
    %v529 = vld [vmem:[%s1 + $0xf98] sm:$0xff]
    %v530 = vld [vmem:[%s1 + $0xfa0] sm:$0xff]
    %v531 = vld [vmem:[%s1 + $0xfa8] sm:$0xff]
    %v532 = vld [vmem:[%s1 + $0xfb0] sm:$0xff]
    %v533 = vld [vmem:[%s1 + $0xfb8] sm:$0xff]
    %v534 = vld [vmem:[%s1 + $0xfc0] sm:$0xff]
    %v535 = vld [vmem:[%s1 + $0xfc8] sm:$0xff]
    %v536 = vld [vmem:[%s1 + $0xfd0] sm:$0xff]
    %v537 = vld [vmem:[%s1 + $0xfd8] sm:$0xff]
    %v538 = vld [vmem:[%s1 + $0xfe0] sm:$0xff]
    %v539 = vld [vmem:[%s1 + $0xfe8] sm:$0xff]
    %v540 = vld [vmem:[%s1 + $0xff0] sm:$0xff]
    %v541 = vld [vmem:[%s1 + $0xff8] sm:$0xff]
    %v542 = vld [vmem:[%s1 + $0x1000] sm:$0xff]
    %v543 = vld [vmem:[%s1 + $0x1008] sm:$0xff]
    %v544 = vld [vmem:[%s1 + $0x1010] sm:$0xff]
    %v545 = vld [vmem:[%s1 + $0x1018] sm:$0xff]
    %v546 = vld [vmem:[%s1 + $0x1020] sm:$0xff]
    %v547 = vld [vmem:[%s1 + $0x1028] sm:$0xff]
    %v548 = vld [vmem:[%s1 + $0x1030] sm:$0xff]
    %v549 = vld [vmem:[%s1 + $0x1038] sm:$0xff]
    %v550 = vld [vmem:[%s1 + $0x1040] sm:$0xff]
    %v551 = vld [vmem:[%s1 + $0x1048] sm:$0xff]
    %v552 = vld [vmem:[%s1 + $0x1050] sm:$0xff]
    %v553 = vld [vmem:[%s1 + $0x1058] sm:$0xff]
    %v554 = vld [vmem:[%s1 + $0x1060] sm:$0xff]
    %v555 = vld [vmem:[%s1 + $0x1068] sm:$0xff]
    %v556 = vld [vmem:[%s1 + $0x1070] sm:$0xff]
    %v557 = vld [vmem:[%s1 + $0x1078] sm:$0xff]
    %v558 = vld [vmem:[%s1 + $0x1080] sm:$0xff]
    %v559 = vld [vmem:[%s1 + $0x1088] sm:$0xff]
    %v560 = vld [vmem:[%s1 + $0x1090] sm:$0xff]
    %v561 = vld [vmem:[%s1 + $0x1098] sm:$0xff]
    %v562 = vld [vmem:[%s1 + $0x10a0] sm:$0xff]
    %v563 = vld [vmem:[%s1 + $0x10a8] sm:$0xff]
    %v564 = vld [vmem:[%s1 + $0x10b0] sm:$0xff]
    %v565 = vld [vmem:[%s1 + $0x10b8] sm:$0xff]
    %v566 = vld [vmem:[%s1 + $0x10c0] sm:$0xff]
    %v567 = vld [vmem:[%s1 + $0x10c8] sm:$0xff]
    %v568 = vld [vmem:[%s1 + $0x10d0] sm:$0xff]
    %v569 = vld [vmem:[%s1 + $0x10d8] sm:$0xff]
    %v570 = vld [vmem:[%s2] sm:$0x7]
    %v572 = vlaneseq
    %v573 = vshrl.u32 %v572, 7
    %v574 = vsub.s32 0, %v573
    %v575 = vrot.slane %v570, %v574
    %v576 = vlaneseq
    %v577 = vshrl.u32 %v576, 7
    %v578 = vsub.s32 1, %v577
    %v579 = vrot.slane %v570, %v578
    %v580 = vlaneseq
    %v581 = vshrl.u32 %v580, 7
    %v582 = vsub.s32 2, %v581
    %v583 = vrot.slane %v570, %v582
    %v590 = vcombine.high %v27, %v27
    %v592 = vunpack.c.l.s4 1983009808
    %v593 = vunpack.c.0.s8 %v592
    %v594 = vlaneseq
    %v595 = vshrl.u32 %v594, 7
    %v596 = vsub.s32 %v593, %v595
    %v597 = vrot.slane %v27, %v596
    %v599 = vunpack.c.l.s4 1983009808
    %v600 = vunpack.c.0.s8 %v599
    %v601 = vlaneseq
    %v602 = vshrl.u32 %v601, 7
    %v603 = vsub.s32 %v600, %v602
    %v604 = vrot.slane %v590, %v603
    %v605 = vcombine.high %v597, %v597
    %v606 = vcombine.high %v604, %v604
    %v607 = vcombine.high %v28, %v28
    %v609 = vunpack.c.l.s4 1983009808
    %v610 = vunpack.c.0.s8 %v609
    %v611 = vlaneseq
    %v612 = vshrl.u32 %v611, 7
    %v613 = vsub.s32 %v610, %v612
    %v614 = vrot.slane %v28, %v613
    %v616 = vunpack.c.l.s4 1983009808
    %v617 = vunpack.c.0.s8 %v616
    %v618 = vlaneseq
    %v619 = vshrl.u32 %v618, 7
    %v620 = vsub.s32 %v617, %v619
    %v621 = vrot.slane %v607, %v620
    %v622 = vcombine.high %v614, %v614
    %v623 = vcombine.high %v621, %v621
    %v624 = vcombine.high %v29, %v29
    %v626 = vunpack.c.l.s4 1983009808
    %v627 = vunpack.c.0.s8 %v626
    %v628 = vlaneseq
    %v629 = vshrl.u32 %v628, 7
    %v630 = vsub.s32 %v627, %v629
    %v631 = vrot.slane %v29, %v630
    %v633 = vunpack.c.l.s4 1983009808
    %v634 = vunpack.c.0.s8 %v633
    %v635 = vlaneseq
    %v636 = vshrl.u32 %v635, 7
    %v637 = vsub.s32 %v634, %v636
    %v638 = vrot.slane %v624, %v637
    %v639 = vcombine.high %v631, %v631
    %v640 = vcombine.high %v638, %v638
    %vm652 = vcmask 261120
    %v653 = vsel %vm652, %v640, 0
    %655 = vmatprep.subr.mxu0 %v31
    %656 = vmatpush1.msra.mxu0 %v30
    %657 = vmatprep.subr.mxu0 %v34
    %658 = vmatpush1.msra.mxu0 %v33
    %659 = vmatprep.subr.mxu0 %v37
    %660 = vmatpush1.msra.mxu0 %v36
    %661 = vmatprep.subr.mxu0 %v40
    %662 = vmatpush1.msra.mxu0 %v39
    %663 = vmatprep.subr.mxu0 %v43
    %664 = vmatpush1.msra.mxu0 %v42
    %665 = vmatprep.subr.mxu0 %v46
    %666 = vmatpush1.msra.mxu0 %v45
    %667 = vmatprep.subr.mxu0 %v49
    %668 = vmatpush1.msra.mxu0 %v48
    %669 = vmatprep.subr.mxu0 %v52
    %670 = vmatpush1.msra.mxu0 %v51
    %671 = vmatprep.subr.mxu0 %v55
    %672 = vmatpush1.msra.mxu0 %v54
    %673 = vmatprep.subr.mxu0 %v58
    %674 = vmatpush1.msra.mxu0 %v57
    %675 = vmatprep.subr.mxu0 %v61
    %676 = vmatpush1.msra.mxu0 %v60
    %677 = vmatprep.subr.mxu0 %v64
    %678 = vmatpush1.msra.mxu0 %v63
    %679 = vmatprep.subr.mxu0 %v67
    %680 = vmatpush1.msra.mxu0 %v66
    %681 = vmatprep.subr.mxu0 %v70
    %682 = vmatpush1.msra.mxu0 %v69
    %683 = vmatprep.subr.mxu0 %v73
    %684 = vmatpush1.msra.mxu0 %v72
    %685 = vmatprep.subr.mxu0 %v76
    %686 = vmatpush1.msra.mxu0 %v75
    %687 = vmatprep.subr.mxu0 %v79
    %688 = vmatpush1.msra.mxu0 %v78
    %689 = vmatprep.subr.mxu0 %v82
    %690 = vmatpush1.msra.mxu0 %v81
    %691 = vmatprep.subr.mxu0 %v85
    %692 = vmatpush1.msra.mxu0 %v84
    %693 = vmatprep.subr.mxu0 %v88
    %694 = vmatpush1.msra.mxu0 %v87
    %695 = vmatprep.subr.mxu0 %v91
    %696 = vmatpush1.msra.mxu0 %v90
    %697 = vmatprep.subr.mxu0 %v94
    %698 = vmatpush1.msra.mxu0 %v93
    %699 = vmatprep.subr.mxu0 %v97
    %700 = vmatpush1.msra.mxu0 %v96
    %701 = vmatprep.subr.mxu0 %v100
    %702 = vmatpush1.msra.mxu0 %v99
    %703 = vmatprep.subr.mxu0 %v103
    %704 = vmatpush1.msra.mxu0 %v102
    %705 = vmatprep.subr.mxu0 %v106
    %706 = vmatpush1.msra.mxu0 %v105
    %707 = vmatprep.subr.mxu0 %v109
    %708 = vmatpush1.msra.mxu0 %v108
    %709 = vmatprep.subr.mxu0 %v112
    %710 = vmatpush1.msra.mxu0 %v111
    %711 = vmatprep.subr.mxu0 %v115
    %712 = vmatpush1.msra.mxu0 %v114
    %713 = vmatprep.subr.mxu0 %v118
    %714 = vmatpush1.msra.mxu0 %v117
    %715 = vmatprep.subr.mxu0 %v121
    %716 = vmatpush1.msra.mxu0 %v120
    %717 = vmatprep.subr.mxu0 %v124
    %718 = vmatpush1.msra.mxu0 %v123
    %719 = vmatprep.mubr.f32.mxu0 %v605
    %720 = vmatmul.mubr.f32.gmra.mrb[0].mxu0 %v597
    %v721 = vpop.f32.mrb[0].mxu0
    %v722 = vadd.f32 %v575, %v721
    %v723 = vpop.f32.mrb[0].mxu0
    %v724 = vadd.f32 %v579, %v723
    %725 = vdwg.mxu0
    %726 = vmatprep.subr.mxu0 %v127
    %727 = vmatpush1.msra.mxu0 %v126
    %728 = vmatprep.subr.mxu0 %v130
    %729 = vmatpush1.msra.mxu0 %v129
    %730 = vmatprep.subr.mxu0 %v133
    %731 = vmatpush1.msra.mxu0 %v132
    %732 = vmatprep.subr.mxu0 %v136
    %733 = vmatpush1.msra.mxu0 %v135
    %734 = vmatprep.subr.mxu0 %v139
    %735 = vmatpush1.msra.mxu0 %v138
    %736 = vmatprep.subr.mxu0 %v142
    %737 = vmatpush1.msra.mxu0 %v141
    %738 = vmatprep.subr.mxu0 %v145
    %739 = vmatpush1.msra.mxu0 %v144
    %740 = vmatprep.subr.mxu0 %v148
    %741 = vmatpush1.msra.mxu0 %v147
    %742 = vmatprep.subr.mxu0 %v151
    %743 = vmatpush1.msra.mxu0 %v150
    %744 = vmatprep.subr.mxu0 %v154
    %745 = vmatpush1.msra.mxu0 %v153
    %746 = vmatprep.subr.mxu0 %v157
    %747 = vmatpush1.msra.mxu0 %v156
    %748 = vmatprep.subr.mxu0 %v160
    %749 = vmatpush1.msra.mxu0 %v159
    %750 = vmatprep.subr.mxu0 %v163
    %751 = vmatpush1.msra.mxu0 %v162
    %752 = vmatprep.subr.mxu0 %v166
    %753 = vmatpush1.msra.mxu0 %v165
    %754 = vmatprep.subr.mxu0 %v169
    %755 = vmatpush1.msra.mxu0 %v168
    %756 = vmatprep.subr.mxu0 %v172
    %757 = vmatpush1.msra.mxu0 %v171
    %758 = vmatprep.subr.mxu0 %v175
    %759 = vmatpush1.msra.mxu0 %v174
    %760 = vmatprep.subr.mxu0 %v178
    %761 = vmatpush1.msra.mxu0 %v177
    %762 = vmatprep.subr.mxu0 %v181
    %763 = vmatpush1.msra.mxu0 %v180
    %764 = vmatprep.subr.mxu0 %v184
    %765 = vmatpush1.msra.mxu0 %v183
    %766 = vmatprep.subr.mxu0 %v187
    %767 = vmatpush1.msra.mxu0 %v186
    %768 = vmatprep.subr.mxu0 %v190
    %769 = vmatpush1.msra.mxu0 %v189
    %770 = vmatprep.subr.mxu0 %v193
    %771 = vmatpush1.msra.mxu0 %v192
    %772 = vmatprep.subr.mxu0 %v196
    %773 = vmatpush1.msra.mxu0 %v195
    %774 = vmatprep.subr.mxu0 %v199
    %775 = vmatpush1.msra.mxu0 %v198
    %776 = vmatprep.subr.mxu0 %v202
    %777 = vmatpush1.msra.mxu0 %v201
    %778 = vmatprep.subr.mxu0 %v205
    %779 = vmatpush1.msra.mxu0 %v204
    %780 = vmatprep.subr.mxu0 %v208
    %781 = vmatpush1.msra.mxu0 %v207
    %782 = vmatprep.subr.mxu0 %v211
    %783 = vmatpush1.msra.mxu0 %v210
    %784 = vmatprep.subr.mxu0 %v214
    %785 = vmatpush1.msra.mxu0 %v213
    %786 = vmatprep.subr.mxu0 %v217
    %787 = vmatpush1.msra.mxu0 %v216
    %788 = vmatprep.subr.mxu0 %v220
    %789 = vmatpush1.msra.mxu0 %v219
    %790 = vmatprep.mubr.f32.mxu0 %v606
    %791 = vmatmul.mubr.f32.gmra.mrb[0].mxu0 %v604
    %v792 = vpop.f32.mrb[0].mxu0
    %v793 = vadd.f32 %v722, %v792
    %v794 = vpop.f32.mrb[0].mxu0
    %v795 = vadd.f32 %v724, %v794
    %796 = vdwg.mxu0
    %797 = vmatprep.subr.mxu0 %v223
    %798 = vmatpush1.msra.mxu0 %v222
    %799 = vmatprep.subr.mxu0 %v226
    %800 = vmatpush1.msra.mxu0 %v225
    %801 = vmatprep.subr.mxu0 %v229
    %802 = vmatpush1.msra.mxu0 %v228
    %803 = vmatprep.subr.mxu0 %v232
    %804 = vmatpush1.msra.mxu0 %v231
    %805 = vmatprep.subr.mxu0 %v235
    %806 = vmatpush1.msra.mxu0 %v234
    %807 = vmatprep.subr.mxu0 %v238
    %808 = vmatpush1.msra.mxu0 %v237
    %809 = vmatprep.subr.mxu0 %v241
    %810 = vmatpush1.msra.mxu0 %v240
    %811 = vmatprep.subr.mxu0 %v244
    %812 = vmatpush1.msra.mxu0 %v243
    %813 = vmatprep.subr.mxu0 %v247
    %814 = vmatpush1.msra.mxu0 %v246
    %815 = vmatprep.subr.mxu0 %v250
    %816 = vmatpush1.msra.mxu0 %v249
    %817 = vmatprep.subr.mxu0 %v253
    %818 = vmatpush1.msra.mxu0 %v252
    %819 = vmatprep.subr.mxu0 %v256
    %820 = vmatpush1.msra.mxu0 %v255
    %821 = vmatprep.subr.mxu0 %v259
    %822 = vmatpush1.msra.mxu0 %v258
    %823 = vmatprep.subr.mxu0 %v262
    %824 = vmatpush1.msra.mxu0 %v261
    %825 = vmatprep.subr.mxu0 %v265
    %826 = vmatpush1.msra.mxu0 %v264
    %827 = vmatprep.subr.mxu0 %v268
    %828 = vmatpush1.msra.mxu0 %v267
    %829 = vmatprep.subr.mxu0 %v271
    %830 = vmatpush1.msra.mxu0 %v270
    %831 = vmatprep.subr.mxu0 %v274
    %832 = vmatpush1.msra.mxu0 %v273
    %833 = vmatprep.subr.mxu0 %v277
    %834 = vmatpush1.msra.mxu0 %v276
    %835 = vmatprep.subr.mxu0 %v280
    %836 = vmatpush1.msra.mxu0 %v279
    %837 = vmatprep.subr.mxu0 %v283
    %838 = vmatpush1.msra.mxu0 %v282
    %839 = vmatprep.subr.mxu0 %v286
    %840 = vmatpush1.msra.mxu0 %v285
    %841 = vmatprep.subr.mxu0 %v289
    %842 = vmatpush1.msra.mxu0 %v288
    %843 = vmatprep.subr.mxu0 %v292
    %844 = vmatpush1.msra.mxu0 %v291
    %845 = vmatprep.subr.mxu0 %v295
    %846 = vmatpush1.msra.mxu0 %v294
    %847 = vmatprep.subr.mxu0 %v298
    %848 = vmatpush1.msra.mxu0 %v297
    %849 = vmatprep.subr.mxu0 %v301
    %850 = vmatpush1.msra.mxu0 %v300
    %851 = vmatprep.subr.mxu0 %v304
    %852 = vmatpush1.msra.mxu0 %v303
    %853 = vmatprep.subr.mxu0 %v307
    %854 = vmatpush1.msra.mxu0 %v306
    %855 = vmatprep.subr.mxu0 %v310
    %856 = vmatpush1.msra.mxu0 %v309
    %857 = vmatprep.subr.mxu0 %v313
    %858 = vmatpush1.msra.mxu0 %v312
    %859 = vmatprep.subr.mxu0 %v316
    %860 = vmatpush1.msra.mxu0 %v315
    %861 = vmatprep.mubr.f32.mxu0 %v622
    %862 = vmatmul.mubr.f32.gmra.mrb[0].mxu0 %v614
    %v863 = vpop.f32.mrb[0].mxu0
    %v864 = vadd.f32 %v793, %v863
    %v865 = vpop.f32.mrb[0].mxu0
    %v866 = vadd.f32 %v795, %v865
    %867 = vdwg.mxu0
    %868 = vmatprep.subr.mxu0 %v319
    %869 = vmatpush1.msra.mxu0 %v318
    %870 = vmatprep.subr.mxu0 %v322
    %871 = vmatpush1.msra.mxu0 %v321
    %872 = vmatprep.subr.mxu0 %v325
    %873 = vmatpush1.msra.mxu0 %v324
    %874 = vmatprep.subr.mxu0 %v328
    %875 = vmatpush1.msra.mxu0 %v327
    %876 = vmatprep.subr.mxu0 %v331
    %877 = vmatpush1.msra.mxu0 %v330
    %878 = vmatprep.subr.mxu0 %v334
    %879 = vmatpush1.msra.mxu0 %v333
    %880 = vmatprep.subr.mxu0 %v337
    %881 = vmatpush1.msra.mxu0 %v336
    %882 = vmatprep.subr.mxu0 %v340
    %883 = vmatpush1.msra.mxu0 %v339
    %884 = vmatprep.subr.mxu0 %v343
    %885 = vmatpush1.msra.mxu0 %v342
    %886 = vmatprep.subr.mxu0 %v346
    %887 = vmatpush1.msra.mxu0 %v345
    %888 = vmatprep.subr.mxu0 %v349
    %889 = vmatpush1.msra.mxu0 %v348
    %890 = vmatprep.subr.mxu0 %v352
    %891 = vmatpush1.msra.mxu0 %v351
    %892 = vmatprep.subr.mxu0 %v355
    %893 = vmatpush1.msra.mxu0 %v354
    %894 = vmatprep.subr.mxu0 %v358
    %895 = vmatpush1.msra.mxu0 %v357
    %896 = vmatprep.subr.mxu0 %v361
    %897 = vmatpush1.msra.mxu0 %v360
    %898 = vmatprep.subr.mxu0 %v364
    %899 = vmatpush1.msra.mxu0 %v363
    %900 = vmatprep.subr.mxu0 %v367
    %901 = vmatpush1.msra.mxu0 %v366
    %902 = vmatprep.subr.mxu0 %v370
    %903 = vmatpush1.msra.mxu0 %v369
    %904 = vmatprep.subr.mxu0 %v373
    %905 = vmatpush1.msra.mxu0 %v372
    %906 = vmatprep.subr.mxu0 %v376
    %907 = vmatpush1.msra.mxu0 %v375
    %908 = vmatprep.subr.mxu0 %v379
    %909 = vmatpush1.msra.mxu0 %v378
    %910 = vmatprep.subr.mxu0 %v382
    %911 = vmatpush1.msra.mxu0 %v381
    %912 = vmatprep.subr.mxu0 %v385
    %913 = vmatpush1.msra.mxu0 %v384
    %914 = vmatprep.subr.mxu0 %v388
    %915 = vmatpush1.msra.mxu0 %v387
    %916 = vmatprep.subr.mxu0 %v391
    %917 = vmatpush1.msra.mxu0 %v390
    %918 = vmatprep.subr.mxu0 %v394
    %919 = vmatpush1.msra.mxu0 %v393
    %920 = vmatprep.subr.mxu0 %v397
    %921 = vmatpush1.msra.mxu0 %v396
    %922 = vmatprep.subr.mxu0 %v400
    %923 = vmatpush1.msra.mxu0 %v399
    %924 = vmatprep.subr.mxu0 %v403
    %925 = vmatpush1.msra.mxu0 %v402
    %926 = vmatprep.subr.mxu0 %v406
    %927 = vmatpush1.msra.mxu0 %v405
    %928 = vmatprep.subr.mxu0 %v409
    %929 = vmatpush1.msra.mxu0 %v408
    %930 = vmatprep.subr.mxu0 %v412
    %931 = vmatpush1.msra.mxu0 %v411
    %932 = vmatprep.mubr.f32.mxu0 %v623
    %933 = vmatmul.mubr.f32.gmra.mrb[0].mxu0 %v621
    %v934 = vpop.f32.mrb[0].mxu0
    %v935 = vadd.f32 %v864, %v934
    %v936 = vpop.f32.mrb[0].mxu0
    %v937 = vadd.f32 %v866, %v936
    %938 = vdwg.mxu0
    %939 = vmatprep.subr.mxu0 %v415
    %940 = vmatpush1.msra.mxu0 %v414
    %941 = vmatprep.subr.mxu0 %v418
    %942 = vmatpush1.msra.mxu0 %v417
    %943 = vmatprep.subr.mxu0 %v421
    %944 = vmatpush1.msra.mxu0 %v420
    %945 = vmatprep.subr.mxu0 %v424
    %946 = vmatpush1.msra.mxu0 %v423
    %947 = vmatprep.subr.mxu0 %v427
    %948 = vmatpush1.msra.mxu0 %v426
    %949 = vmatprep.subr.mxu0 %v430
    %950 = vmatpush1.msra.mxu0 %v429
    %951 = vmatprep.subr.mxu0 %v433
    %952 = vmatpush1.msra.mxu0 %v432
    %953 = vmatprep.subr.mxu0 %v436
    %954 = vmatpush1.msra.mxu0 %v435
    %955 = vmatprep.subr.mxu0 %v439
    %956 = vmatpush1.msra.mxu0 %v438
    %957 = vmatprep.subr.mxu0 %v442
    %958 = vmatpush1.msra.mxu0 %v441
    %959 = vmatprep.subr.mxu0 %v445
    %960 = vmatpush1.msra.mxu0 %v444
    %961 = vmatprep.subr.mxu0 %v448
    %962 = vmatpush1.msra.mxu0 %v447
    %963 = vmatprep.subr.mxu0 %v451
    %964 = vmatpush1.msra.mxu0 %v450
    %965 = vmatprep.subr.mxu0 %v454
    %966 = vmatpush1.msra.mxu0 %v453
    %967 = vmatprep.subr.mxu0 %v457
    %968 = vmatpush1.msra.mxu0 %v456
    %969 = vmatprep.subr.mxu0 %v460
    %970 = vmatpush1.msra.mxu0 %v459
    %971 = vmatprep.subr.mxu0 %v463
    %972 = vmatpush1.msra.mxu0 %v462
    %973 = vmatprep.subr.mxu0 %v466
    %974 = vmatpush1.msra.mxu0 %v465
    %975 = vmatprep.subr.mxu0 %v469
    %976 = vmatpush1.msra.mxu0 %v468
    %977 = vmatprep.subr.mxu0 %v472
    %978 = vmatpush1.msra.mxu0 %v471
    %979 = vmatprep.subr.mxu0 %v475
    %980 = vmatpush1.msra.mxu0 %v474
    %981 = vmatprep.subr.mxu0 %v478
    %982 = vmatpush1.msra.mxu0 %v477
    %983 = vmatprep.subr.mxu0 %v481
    %984 = vmatpush1.msra.mxu0 %v480
    %985 = vmatprep.subr.mxu0 %v484
    %986 = vmatpush1.msra.mxu0 %v483
    %987 = vmatprep.subr.mxu0 %v487
    %988 = vmatpush1.msra.mxu0 %v486
    %989 = vmatprep.subr.mxu0 %v490
    %990 = vmatpush1.msra.mxu0 %v489
    %991 = vmatprep.subr.mxu0 %v493
    %992 = vmatpush1.msra.mxu0 %v492
    %993 = vmatprep.subr.mxu0 %v496
    %994 = vmatpush1.msra.mxu0 %v495
    %995 = vmatprep.subr.mxu0 %v499
    %996 = vmatpush1.msra.mxu0 %v498
    %997 = vmatprep.subr.mxu0 %v502
    %998 = vmatpush1.msra.mxu0 %v501
    %999 = vmatprep.subr.mxu0 %v505
    %1000 = vmatpush1.msra.mxu0 %v504
    %1001 = vmatprep.subr.mxu0 %v508
    %1002 = vmatpush1.msra.mxu0 %v507
    %1003 = vmatprep.mubr.f32.mxu0 %v639
    %1004 = vmatmul.mubr.f32.gmra.mrb[0].mxu0 %v631
    %v1005 = vpop.f32.mrb[0].mxu0
    %v1006 = vadd.f32 %v935, %v1005
    %v1007 = vpop.f32.mrb[0].mxu0
    %v1008 = vadd.f32 %v937, %v1007
    %1009 = vdwg.mxu0
    %1010 = vmatprep.subr.mxu0 %v511
    %1011 = vmatpush1.msra.mxu0 %v510
    %1012 = vmatprep.subr.mxu0 %v514
    %1013 = vmatpush1.msra.mxu0 %v513
    %1014 = vmatprep.subr.mxu0 %v517
    %1015 = vmatpush1.msra.mxu0 %v516
    %1016 = vmatprep.subr.mxu0 %v520
    %1017 = vmatpush1.msra.mxu0 %v519
    %1018 = vmatprep.subr.mxu0 %v523
    %1019 = vmatpush1.msra.mxu0 %v522
    %1020 = vmatprep.subr.mxu0 %v526
    %1021 = vmatpush1.msra.mxu0 %v525
    %1022 = vmatprep.subr.mxu0 %v529
    %1023 = vmatpush1.msra.mxu0 %v528
    %1024 = vmatprep.subr.mxu0 %v532
    %1025 = vmatpush1.msra.mxu0 %v531
    %1026 = vmatprep.subr.mxu0 %v535
    %1027 = vmatpush1.msra.mxu0 %v534
    %1028 = vmatprep.subr.mxu0 %v538
    %1029 = vmatpush1.msra.mxu0 %v537
    %1030 = vmatprep.subr.mxu0 %v541
    %1031 = vmatpush1.msra.mxu0 %v540
    %1032 = vmatprep.subr.mxu0 %v544
    %1033 = vmatpush1.msra.mxu0 %v543
    %1034 = vmatprep.subr.mxu0 %v547
    %1035 = vmatpush1.msra.mxu0 %v546
    %1036 = vmatprep.subr.mxu0 %v550
    %1037 = vmatpush1.msra.mxu0 %v549
    %1038 = vmatprep.subr.mxu0 %v553
    %1039 = vmatpush1.msra.mxu0 %v552
    %1040 = vmatprep.subr.mxu0 %v556
    %1041 = vmatpush1.msra.mxu0 %v555
    %1042 = vmatprep.subr.mxu0 %v559
    %1043 = vmatpush1.msra.mxu0 %v558
    %1044 = vmatprep.subr.mxu0 %v562
    %1045 = vmatpush1.msra.mxu0 %v561
    %1046 = vmatprep.subr.mxu0 %v565
    %1047 = vmatpush1.msra.mxu0 %v564
    %1048 = vmatprep.subr.mxu0 %v568
    %1049 = vmatpush1.msra.mxu0 %v567
    %1050 = vmatprep.subr.mxu0 0.0
    %1051 = vmatpush1.msra.mxu0 0.0
    %1052 = vmatprep.subr.mxu0 0.0
    %1053 = vmatpush1.msra.mxu0 0.0
    %1054 = vmatprep.subr.mxu0 0.0
    %1055 = vmatpush1.msra.mxu0 0.0
    %1056 = vmatprep.subr.mxu0 0.0
    %1057 = vmatpush1.msra.mxu0 0.0
    %1058 = vmatprep.subr.mxu0 0.0
    %1059 = vmatpush1.msra.mxu0 0.0
    %1060 = vmatprep.subr.mxu0 0.0
    %1061 = vmatpush1.msra.mxu0 0.0
    %1062 = vmatprep.subr.mxu0 0.0
    %1063 = vmatpush1.msra.mxu0 0.0
    %1064 = vmatprep.subr.mxu0 0.0
    %1065 = vmatpush1.msra.mxu0 0.0
    %1066 = vmatprep.subr.mxu0 0.0
    %1067 = vmatpush1.msra.mxu0 0.0
    %1068 = vmatprep.subr.mxu0 0.0
    %1069 = vmatpush1.msra.mxu0 0.0
    %1070 = vmatprep.subr.mxu0 0.0
    %1071 = vmatpush1.msra.mxu0 0.0
    %1072 = vmatprep.subr.mxu0 0.0
    %1073 = vmatpush1.msra.mxu0 0.0
    %1074 = vmatprep.mubr.f32.mxu0 %v653
    %1075 = vmatmul.mubr.f32.gmra.mrb[0].mxu0 %v638
    %v1076 = vpop.f32.mrb[0].mxu0
    %v1077 = vadd.f32 %v1006, %v1076
    %v1078 = vpop.f32.mrb[0].mxu0
    %v1079 = vadd.f32 %v1008, %v1078
    %1080 = vdwg.mxu0
    %1081 = vmatprep.subr.mxu0 0.0
    %1082 = vmatpush1.msra.mxu0 %v32
    %1083 = vmatprep.subr.mxu0 0.0
    %1084 = vmatpush1.msra.mxu0 %v35
    %1085 = vmatprep.subr.mxu0 0.0
    %1086 = vmatpush1.msra.mxu0 %v38
    %1087 = vmatprep.subr.mxu0 0.0
    %1088 = vmatpush1.msra.mxu0 %v41
    %1089 = vmatprep.subr.mxu0 0.0
    %1090 = vmatpush1.msra.mxu0 %v44
    %1091 = vmatprep.subr.mxu0 0.0
    %1092 = vmatpush1.msra.mxu0 %v47
    %1093 = vmatprep.subr.mxu0 0.0
    %1094 = vmatpush1.msra.mxu0 %v50
    %1095 = vmatprep.subr.mxu0 0.0
    %1096 = vmatpush1.msra.mxu0 %v53
    %1097 = vmatprep.subr.mxu0 0.0
    %1098 = vmatpush1.msra.mxu0 %v56
    %1099 = vmatprep.subr.mxu0 0.0
    %1100 = vmatpush1.msra.mxu0 %v59
    %1101 = vmatprep.subr.mxu0 0.0
    %1102 = vmatpush1.msra.mxu0 %v62
    %1103 = vmatprep.subr.mxu0 0.0
    %1104 = vmatpush1.msra.mxu0 %v65
    %1105 = vmatprep.subr.mxu0 0.0
    %1106 = vmatpush1.msra.mxu0 %v68
    %1107 = vmatprep.subr.mxu0 0.0
    %1108 = vmatpush1.msra.mxu0 %v71
    %1109 = vmatprep.subr.mxu0 0.0
    %1110 = vmatpush1.msra.mxu0 %v74
    %1111 = vmatprep.subr.mxu0 0.0
    %1112 = vmatpush1.msra.mxu0 %v77
    %1113 = vmatprep.subr.mxu0 0.0
    %1114 = vmatpush1.msra.mxu0 %v80
    %1115 = vmatprep.subr.mxu0 0.0
    %1116 = vmatpush1.msra.mxu0 %v83
    %1117 = vmatprep.subr.mxu0 0.0
    %1118 = vmatpush1.msra.mxu0 %v86
    %1119 = vmatprep.subr.mxu0 0.0
    %1120 = vmatpush1.msra.mxu0 %v89
    %1121 = vmatprep.subr.mxu0 0.0
    %1122 = vmatpush1.msra.mxu0 %v92
    %1123 = vmatprep.subr.mxu0 0.0
    %1124 = vmatpush1.msra.mxu0 %v95
    %1125 = vmatprep.subr.mxu0 0.0
    %1126 = vmatpush1.msra.mxu0 %v98
    %1127 = vmatprep.subr.mxu0 0.0
    %1128 = vmatpush1.msra.mxu0 %v101
    %1129 = vmatprep.subr.mxu0 0.0
    %1130 = vmatpush1.msra.mxu0 %v104
    %1131 = vmatprep.subr.mxu0 0.0
    %1132 = vmatpush1.msra.mxu0 %v107
    %1133 = vmatprep.subr.mxu0 0.0
    %1134 = vmatpush1.msra.mxu0 %v110
    %1135 = vmatprep.subr.mxu0 0.0
    %1136 = vmatpush1.msra.mxu0 %v113
    %1137 = vmatprep.subr.mxu0 0.0
    %1138 = vmatpush1.msra.mxu0 %v116
    %1139 = vmatprep.subr.mxu0 0.0
    %1140 = vmatpush1.msra.mxu0 %v119
    %1141 = vmatprep.subr.mxu0 0.0
    %1142 = vmatpush1.msra.mxu0 %v122
    %1143 = vmatprep.subr.mxu0 0.0
    %1144 = vmatpush1.msra.mxu0 %v125
    %1145 = vmatprep.mubr.f32.mxu0 %v605
    %1146 = vmatmul.mubr.f32.gmra.mrb[0].mxu0 %v597
    %v1147 = vpop.f32.mrb[0].mxu0
    %v1148 = vadd.f32 %v583, %v1147
    %v1149 = vpop.f32.mrb[0].mxu0
    %1150 = vdwg.mxu0
    %1151 = vmatprep.subr.mxu0 0.0
    %1152 = vmatpush1.msra.mxu0 %v128
    %1153 = vmatprep.subr.mxu0 0.0
    %1154 = vmatpush1.msra.mxu0 %v131
    %1155 = vmatprep.subr.mxu0 0.0
    %1156 = vmatpush1.msra.mxu0 %v134
    %1157 = vmatprep.subr.mxu0 0.0
    %1158 = vmatpush1.msra.mxu0 %v137
    %1159 = vmatprep.subr.mxu0 0.0
    %1160 = vmatpush1.msra.mxu0 %v140
    %1161 = vmatprep.subr.mxu0 0.0
    %1162 = vmatpush1.msra.mxu0 %v143
    %1163 = vmatprep.subr.mxu0 0.0
    %1164 = vmatpush1.msra.mxu0 %v146
    %1165 = vmatprep.subr.mxu0 0.0
    %1166 = vmatpush1.msra.mxu0 %v149
    %1167 = vmatprep.subr.mxu0 0.0
    %1168 = vmatpush1.msra.mxu0 %v152
    %1169 = vmatprep.subr.mxu0 0.0
    %1170 = vmatpush1.msra.mxu0 %v155
    %1171 = vmatprep.subr.mxu0 0.0
    %1172 = vmatpush1.msra.mxu0 %v158
    %1173 = vmatprep.subr.mxu0 0.0
    %1174 = vmatpush1.msra.mxu0 %v161
    %1175 = vmatprep.subr.mxu0 0.0
    %1176 = vmatpush1.msra.mxu0 %v164
    %1177 = vmatprep.subr.mxu0 0.0
    %1178 = vmatpush1.msra.mxu0 %v167
    %1179 = vmatprep.subr.mxu0 0.0
    %1180 = vmatpush1.msra.mxu0 %v170
    %1181 = vmatprep.subr.mxu0 0.0
    %1182 = vmatpush1.msra.mxu0 %v173
    %1183 = vmatprep.subr.mxu0 0.0
    %1184 = vmatpush1.msra.mxu0 %v176
    %1185 = vmatprep.subr.mxu0 0.0
    %1186 = vmatpush1.msra.mxu0 %v179
    %1187 = vmatprep.subr.mxu0 0.0
    %1188 = vmatpush1.msra.mxu0 %v182
    %1189 = vmatprep.subr.mxu0 0.0
    %1190 = vmatpush1.msra.mxu0 %v185
    %1191 = vmatprep.subr.mxu0 0.0
    %1192 = vmatpush1.msra.mxu0 %v188
    %1193 = vmatprep.subr.mxu0 0.0
    %1194 = vmatpush1.msra.mxu0 %v191
    %1195 = vmatprep.subr.mxu0 0.0
    %1196 = vmatpush1.msra.mxu0 %v194
    %1197 = vmatprep.subr.mxu0 0.0
    %1198 = vmatpush1.msra.mxu0 %v197
    %1199 = vmatprep.subr.mxu0 0.0
    %1200 = vmatpush1.msra.mxu0 %v200
    %1201 = vmatprep.subr.mxu0 0.0
    %1202 = vmatpush1.msra.mxu0 %v203
    %1203 = vmatprep.subr.mxu0 0.0
    %1204 = vmatpush1.msra.mxu0 %v206
    %1205 = vmatprep.subr.mxu0 0.0
    %1206 = vmatpush1.msra.mxu0 %v209
    %1207 = vmatprep.subr.mxu0 0.0
    %1208 = vmatpush1.msra.mxu0 %v212
    %1209 = vmatprep.subr.mxu0 0.0
    %1210 = vmatpush1.msra.mxu0 %v215
    %1211 = vmatprep.subr.mxu0 0.0
    %1212 = vmatpush1.msra.mxu0 %v218
    %1213 = vmatprep.subr.mxu0 0.0
    %1214 = vmatpush1.msra.mxu0 %v221
    %1215 = vmatprep.mubr.f32.mxu0 %v606
    %1216 = vmatmul.mubr.f32.gmra.mrb[0].mxu0 %v604
    %v1217 = vpop.f32.mrb[0].mxu0
    %v1218 = vadd.f32 %v1148, %v1217
    %v1219 = vpop.f32.mrb[0].mxu0
    %1220 = vdwg.mxu0
    %1221 = vmatprep.subr.mxu0 0.0
    %1222 = vmatpush1.msra.mxu0 %v224
    %1223 = vmatprep.subr.mxu0 0.0
    %1224 = vmatpush1.msra.mxu0 %v227
    %1225 = vmatprep.subr.mxu0 0.0
    %1226 = vmatpush1.msra.mxu0 %v230
    %1227 = vmatprep.subr.mxu0 0.0
    %1228 = vmatpush1.msra.mxu0 %v233
    %1229 = vmatprep.subr.mxu0 0.0
    %1230 = vmatpush1.msra.mxu0 %v236
    %1231 = vmatprep.subr.mxu0 0.0
    %1232 = vmatpush1.msra.mxu0 %v239
    %1233 = vmatprep.subr.mxu0 0.0
    %1234 = vmatpush1.msra.mxu0 %v242
    %1235 = vmatprep.subr.mxu0 0.0
    %1236 = vmatpush1.msra.mxu0 %v245
    %1237 = vmatprep.subr.mxu0 0.0
    %1238 = vmatpush1.msra.mxu0 %v248
    %1239 = vmatprep.subr.mxu0 0.0
    %1240 = vmatpush1.msra.mxu0 %v251
    %1241 = vmatprep.subr.mxu0 0.0
    %1242 = vmatpush1.msra.mxu0 %v254
    %1243 = vmatprep.subr.mxu0 0.0
    %1244 = vmatpush1.msra.mxu0 %v257
    %1245 = vmatprep.subr.mxu0 0.0
    %1246 = vmatpush1.msra.mxu0 %v260
    %1247 = vmatprep.subr.mxu0 0.0
    %1248 = vmatpush1.msra.mxu0 %v263
    %1249 = vmatprep.subr.mxu0 0.0
    %1250 = vmatpush1.msra.mxu0 %v266
    %1251 = vmatprep.subr.mxu0 0.0
    %1252 = vmatpush1.msra.mxu0 %v269
    %1253 = vmatprep.subr.mxu0 0.0
    %1254 = vmatpush1.msra.mxu0 %v272
    %1255 = vmatprep.subr.mxu0 0.0
    %1256 = vmatpush1.msra.mxu0 %v275
    %1257 = vmatprep.subr.mxu0 0.0
    %1258 = vmatpush1.msra.mxu0 %v278
    %1259 = vmatprep.subr.mxu0 0.0
    %1260 = vmatpush1.msra.mxu0 %v281
    %1261 = vmatprep.subr.mxu0 0.0
    %1262 = vmatpush1.msra.mxu0 %v284
    %1263 = vmatprep.subr.mxu0 0.0
    %1264 = vmatpush1.msra.mxu0 %v287
    %1265 = vmatprep.subr.mxu0 0.0
    %1266 = vmatpush1.msra.mxu0 %v290
    %1267 = vmatprep.subr.mxu0 0.0
    %1268 = vmatpush1.msra.mxu0 %v293
    %1269 = vmatprep.subr.mxu0 0.0
    %1270 = vmatpush1.msra.mxu0 %v296
    %1271 = vmatprep.subr.mxu0 0.0
    %1272 = vmatpush1.msra.mxu0 %v299
    %1273 = vmatprep.subr.mxu0 0.0
    %1274 = vmatpush1.msra.mxu0 %v302
    %1275 = vmatprep.subr.mxu0 0.0
    %1276 = vmatpush1.msra.mxu0 %v305
    %1277 = vmatprep.subr.mxu0 0.0
    %1278 = vmatpush1.msra.mxu0 %v308
    %1279 = vmatprep.subr.mxu0 0.0
    %1280 = vmatpush1.msra.mxu0 %v311
    %1281 = vmatprep.subr.mxu0 0.0
    %1282 = vmatpush1.msra.mxu0 %v314
    %1283 = vmatprep.subr.mxu0 0.0
    %1284 = vmatpush1.msra.mxu0 %v317
    %1285 = vmatprep.mubr.f32.mxu0 %v622
    %1286 = vmatmul.mubr.f32.gmra.mrb[0].mxu0 %v614
    %v1287 = vpop.f32.mrb[0].mxu0
    %v1288 = vadd.f32 %v1218, %v1287
    %v1289 = vpop.f32.mrb[0].mxu0
    %1290 = vdwg.mxu0
    %1291 = vmatprep.subr.mxu0 0.0
    %1292 = vmatpush1.msra.mxu0 %v320
    %1293 = vmatprep.subr.mxu0 0.0
    %1294 = vmatpush1.msra.mxu0 %v323
    %1295 = vmatprep.subr.mxu0 0.0
    %1296 = vmatpush1.msra.mxu0 %v326
    %1297 = vmatprep.subr.mxu0 0.0
    %1298 = vmatpush1.msra.mxu0 %v329
    %1299 = vmatprep.subr.mxu0 0.0
    %1300 = vmatpush1.msra.mxu0 %v332
    %1301 = vmatprep.subr.mxu0 0.0
    %1302 = vmatpush1.msra.mxu0 %v335
    %1303 = vmatprep.subr.mxu0 0.0
    %1304 = vmatpush1.msra.mxu0 %v338
    %1305 = vmatprep.subr.mxu0 0.0
    %1306 = vmatpush1.msra.mxu0 %v341
    %1307 = vmatprep.subr.mxu0 0.0
    %1308 = vmatpush1.msra.mxu0 %v344
    %1309 = vmatprep.subr.mxu0 0.0
    %1310 = vmatpush1.msra.mxu0 %v347
    %1311 = vmatprep.subr.mxu0 0.0
    %1312 = vmatpush1.msra.mxu0 %v350
    %1313 = vmatprep.subr.mxu0 0.0
    %1314 = vmatpush1.msra.mxu0 %v353
    %1315 = vmatprep.subr.mxu0 0.0
    %1316 = vmatpush1.msra.mxu0 %v356
    %1317 = vmatprep.subr.mxu0 0.0
    %1318 = vmatpush1.msra.mxu0 %v359
    %1319 = vmatprep.subr.mxu0 0.0
    %1320 = vmatpush1.msra.mxu0 %v362
    %1321 = vmatprep.subr.mxu0 0.0
    %1322 = vmatpush1.msra.mxu0 %v365
    %1323 = vmatprep.subr.mxu0 0.0
    %1324 = vmatpush1.msra.mxu0 %v368
    %1325 = vmatprep.subr.mxu0 0.0
    %1326 = vmatpush1.msra.mxu0 %v371
    %1327 = vmatprep.subr.mxu0 0.0
    %1328 = vmatpush1.msra.mxu0 %v374
    %1329 = vmatprep.subr.mxu0 0.0
    %1330 = vmatpush1.msra.mxu0 %v377
    %1331 = vmatprep.subr.mxu0 0.0
    %1332 = vmatpush1.msra.mxu0 %v380
    %1333 = vmatprep.subr.mxu0 0.0
    %1334 = vmatpush1.msra.mxu0 %v383
    %1335 = vmatprep.subr.mxu0 0.0
    %1336 = vmatpush1.msra.mxu0 %v386
    %1337 = vmatprep.subr.mxu0 0.0
    %1338 = vmatpush1.msra.mxu0 %v389
    %1339 = vmatprep.subr.mxu0 0.0
    %1340 = vmatpush1.msra.mxu0 %v392
    %1341 = vmatprep.subr.mxu0 0.0
    %1342 = vmatpush1.msra.mxu0 %v395
    %1343 = vmatprep.subr.mxu0 0.0
    %1344 = vmatpush1.msra.mxu0 %v398
    %1345 = vmatprep.subr.mxu0 0.0
    %1346 = vmatpush1.msra.mxu0 %v401
    %1347 = vmatprep.subr.mxu0 0.0
    %1348 = vmatpush1.msra.mxu0 %v404
    %1349 = vmatprep.subr.mxu0 0.0
    %1350 = vmatpush1.msra.mxu0 %v407
    %1351 = vmatprep.subr.mxu0 0.0
    %1352 = vmatpush1.msra.mxu0 %v410
    %1353 = vmatprep.subr.mxu0 0.0
    %1354 = vmatpush1.msra.mxu0 %v413
    %1355 = vmatprep.mubr.f32.mxu0 %v623
    %1356 = vmatmul.mubr.f32.gmra.mrb[0].mxu0 %v621
    %v1357 = vpop.f32.mrb[0].mxu0
    %v1358 = vadd.f32 %v1288, %v1357
    %v1359 = vpop.f32.mrb[0].mxu0
    %1360 = vdwg.mxu0
    %1361 = vmatprep.subr.mxu0 0.0
    %1362 = vmatpush1.msra.mxu0 %v416
    %1363 = vmatprep.subr.mxu0 0.0
    %1364 = vmatpush1.msra.mxu0 %v419
    %1365 = vmatprep.subr.mxu0 0.0
    %1366 = vmatpush1.msra.mxu0 %v422
    %1367 = vmatprep.subr.mxu0 0.0
    %1368 = vmatpush1.msra.mxu0 %v425
    %1369 = vmatprep.subr.mxu0 0.0
    %1370 = vmatpush1.msra.mxu0 %v428
    %1371 = vmatprep.subr.mxu0 0.0
    %1372 = vmatpush1.msra.mxu0 %v431
    %1373 = vmatprep.subr.mxu0 0.0
    %1374 = vmatpush1.msra.mxu0 %v434
    %1375 = vmatprep.subr.mxu0 0.0
    %1376 = vmatpush1.msra.mxu0 %v437
    %1377 = vmatprep.subr.mxu0 0.0
    %1378 = vmatpush1.msra.mxu0 %v440
    %1379 = vmatprep.subr.mxu0 0.0
    %1380 = vmatpush1.msra.mxu0 %v443
    %1381 = vmatprep.subr.mxu0 0.0
    %1382 = vmatpush1.msra.mxu0 %v446
    %1383 = vmatprep.subr.mxu0 0.0
    %1384 = vmatpush1.msra.mxu0 %v449
    %1385 = vmatprep.subr.mxu0 0.0
    %1386 = vmatpush1.msra.mxu0 %v452
    %1387 = vmatprep.subr.mxu0 0.0
    %1388 = vmatpush1.msra.mxu0 %v455
    %1389 = vmatprep.subr.mxu0 0.0
    %1390 = vmatpush1.msra.mxu0 %v458
    %1391 = vmatprep.subr.mxu0 0.0
    %1392 = vmatpush1.msra.mxu0 %v461
    %1393 = vmatprep.subr.mxu0 0.0
    %1394 = vmatpush1.msra.mxu0 %v464
    %1395 = vmatprep.subr.mxu0 0.0
    %1396 = vmatpush1.msra.mxu0 %v467
    %1397 = vmatprep.subr.mxu0 0.0
    %1398 = vmatpush1.msra.mxu0 %v470
    %1399 = vmatprep.subr.mxu0 0.0
    %1400 = vmatpush1.msra.mxu0 %v473
    %1401 = vmatprep.subr.mxu0 0.0
    %1402 = vmatpush1.msra.mxu0 %v476
    %1403 = vmatprep.subr.mxu0 0.0
    %1404 = vmatpush1.msra.mxu0 %v479
    %1405 = vmatprep.subr.mxu0 0.0
    %1406 = vmatpush1.msra.mxu0 %v482
    %1407 = vmatprep.subr.mxu0 0.0
    %1408 = vmatpush1.msra.mxu0 %v485
    %1409 = vmatprep.subr.mxu0 0.0
    %1410 = vmatpush1.msra.mxu0 %v488
    %1411 = vmatprep.subr.mxu0 0.0
    %1412 = vmatpush1.msra.mxu0 %v491
    %1413 = vmatprep.subr.mxu0 0.0
    %1414 = vmatpush1.msra.mxu0 %v494
    %1415 = vmatprep.subr.mxu0 0.0
    %1416 = vmatpush1.msra.mxu0 %v497
    %1417 = vmatprep.subr.mxu0 0.0
    %1418 = vmatpush1.msra.mxu0 %v500
    %1419 = vmatprep.subr.mxu0 0.0
    %1420 = vmatpush1.msra.mxu0 %v503
    %1421 = vmatprep.subr.mxu0 0.0
    %1422 = vmatpush1.msra.mxu0 %v506
    %1423 = vmatprep.subr.mxu0 0.0
    %1424 = vmatpush1.msra.mxu0 %v509
    %1425 = vmatprep.mubr.f32.mxu0 %v639
    %1426 = vmatmul.mubr.f32.gmra.mrb[0].mxu0 %v631
    %v1427 = vpop.f32.mrb[0].mxu0
    %v1428 = vadd.f32 %v1358, %v1427
    %v1429 = vpop.f32.mrb[0].mxu0
    %1430 = vdwg.mxu0
    %1431 = vmatprep.subr.mxu0 0.0
    %1432 = vmatpush1.msra.mxu0 %v512
    %1433 = vmatprep.subr.mxu0 0.0
    %1434 = vmatpush1.msra.mxu0 %v515
    %1435 = vmatprep.subr.mxu0 0.0
    %1436 = vmatpush1.msra.mxu0 %v518
    %1437 = vmatprep.subr.mxu0 0.0
    %1438 = vmatpush1.msra.mxu0 %v521
    %1439 = vmatprep.subr.mxu0 0.0
    %1440 = vmatpush1.msra.mxu0 %v524
    %1441 = vmatprep.subr.mxu0 0.0
    %1442 = vmatpush1.msra.mxu0 %v527
    %1443 = vmatprep.subr.mxu0 0.0
    %1444 = vmatpush1.msra.mxu0 %v530
    %1445 = vmatprep.subr.mxu0 0.0
    %1446 = vmatpush1.msra.mxu0 %v533
    %1447 = vmatprep.subr.mxu0 0.0
    %1448 = vmatpush1.msra.mxu0 %v536
    %1449 = vmatprep.subr.mxu0 0.0
    %1450 = vmatpush1.msra.mxu0 %v539
    %1451 = vmatprep.subr.mxu0 0.0
    %1452 = vmatpush1.msra.mxu0 %v542
    %1453 = vmatprep.subr.mxu0 0.0
    %1454 = vmatpush1.msra.mxu0 %v545
    %1455 = vmatprep.subr.mxu0 0.0
    %1456 = vmatpush1.msra.mxu0 %v548
    %1457 = vmatprep.subr.mxu0 0.0
    %1458 = vmatpush1.msra.mxu0 %v551
    %1459 = vmatprep.subr.mxu0 0.0
    %1460 = vmatpush1.msra.mxu0 %v554
    %1461 = vmatprep.subr.mxu0 0.0
    %1462 = vmatpush1.msra.mxu0 %v557
    %1463 = vmatprep.subr.mxu0 0.0
    %1464 = vmatpush1.msra.mxu0 %v560
    %1465 = vmatprep.subr.mxu0 0.0
    %1466 = vmatpush1.msra.mxu0 %v563
    %1467 = vmatprep.subr.mxu0 0.0
    %1468 = vmatpush1.msra.mxu0 %v566
    %1469 = vmatprep.subr.mxu0 0.0
    %1470 = vmatpush1.msra.mxu0 %v569
    %1471 = vmatprep.subr.mxu0 0.0
    %1472 = vmatpush1.msra.mxu0 0.0
    %1473 = vmatprep.subr.mxu0 0.0
    %1474 = vmatpush1.msra.mxu0 0.0
    %1475 = vmatprep.subr.mxu0 0.0
    %1476 = vmatpush1.msra.mxu0 0.0
    %1477 = vmatprep.subr.mxu0 0.0
    %1478 = vmatpush1.msra.mxu0 0.0
    %1479 = vmatprep.subr.mxu0 0.0
    %1480 = vmatpush1.msra.mxu0 0.0
    %1481 = vmatprep.subr.mxu0 0.0
    %1482 = vmatpush1.msra.mxu0 0.0
    %1483 = vmatprep.subr.mxu0 0.0
    %1484 = vmatpush1.msra.mxu0 0.0
    %1485 = vmatprep.subr.mxu0 0.0
    %1486 = vmatpush1.msra.mxu0 0.0
    %1487 = vmatprep.subr.mxu0 0.0
    %1488 = vmatpush1.msra.mxu0 0.0
    %1489 = vmatprep.subr.mxu0 0.0
    %1490 = vmatpush1.msra.mxu0 0.0
    %1491 = vmatprep.subr.mxu0 0.0
    %1492 = vmatpush1.msra.mxu0 0.0
    %1493 = vmatprep.subr.mxu0 0.0
    %1494 = vmatpush1.msra.mxu0 0.0
    %1495 = vmatprep.mubr.f32.mxu0 %v653
    %1496 = vmatmul.mubr.f32.gmra.mrb[0].mxu0 %v638
    %v1497 = vpop.f32.mrb[0].mxu0
    %v1498 = vadd.f32 %v1428, %v1497
    %v1499 = vpop.f32.mrb[0].mxu0
    %1500 = vdwg.mxu0
    %v1501 = vmax.f32 %v1077, 0.0
    %v1502 = vmax.f32 %v1079, 0.0
    %v1503 = vmax.f32 %v1498, 0.0
    %v1504 = vld [vmem:[%s3] sm:$0xff]
    %v1505 = vld [vmem:[%s3 + $0x8] sm:$0xff]
    %v1506 = vld [vmem:[%s3 + $0x10] sm:$0xff]
    %v1507 = vld [vmem:[%s3 + $0x18] sm:$0xff]
    %v1508 = vld [vmem:[%s3 + $0x20] sm:$0xff]
    %v1509 = vld [vmem:[%s3 + $0x28] sm:$0xff]
    %v1510 = vld [vmem:[%s3 + $0x30] sm:$0xff]
    %v1511 = vld [vmem:[%s3 + $0x38] sm:$0xff]
    %v1512 = vld [vmem:[%s3 + $0x40] sm:$0xff]
    %v1513 = vld [vmem:[%s3 + $0x48] sm:$0xff]
    %v1514 = vld [vmem:[%s3 + $0x50] sm:$0xff]
    %v1515 = vld [vmem:[%s3 + $0x58] sm:$0xff]
    %v1516 = vld [vmem:[%s3 + $0x60] sm:$0xff]
    %v1517 = vld [vmem:[%s3 + $0x68] sm:$0xff]
    %v1518 = vld [vmem:[%s3 + $0x70] sm:$0xff]
    %v1519 = vld [vmem:[%s3 + $0x78] sm:$0xff]
    %v1520 = vld [vmem:[%s3 + $0x80] sm:$0xff]
    %v1521 = vld [vmem:[%s3 + $0x88] sm:$0xff]
    %v1522 = vld [vmem:[%s3 + $0x90] sm:$0xff]
    %v1523 = vld [vmem:[%s3 + $0x98] sm:$0xff]
    %v1524 = vld [vmem:[%s3 + $0xa0] sm:$0xff]
    %v1525 = vld [vmem:[%s3 + $0xa8] sm:$0xff]
    %v1526 = vld [vmem:[%s3 + $0xb0] sm:$0xff]
    %v1527 = vld [vmem:[%s3 + $0xb8] sm:$0xff]
    %v1528 = vld [vmem:[%s3 + $0xc0] sm:$0xff]
    %v1529 = vld [vmem:[%s3 + $0xc8] sm:$0xff]
    %v1530 = vld [vmem:[%s3 + $0xd0] sm:$0xff]
    %v1531 = vld [vmem:[%s3 + $0xd8] sm:$0xff]
    %v1532 = vld [vmem:[%s3 + $0xe0] sm:$0xff]
    %v1533 = vld [vmem:[%s3 + $0xe8] sm:$0xff]
    %v1534 = vld [vmem:[%s3 + $0xf0] sm:$0xff]
    %v1535 = vld [vmem:[%s3 + $0xf8] sm:$0xff]
    %v1536 = vld [vmem:[%s3 + $0x100] sm:$0xff]
    %v1537 = vld [vmem:[%s3 + $0x108] sm:$0xff]
    %v1538 = vld [vmem:[%s3 + $0x110] sm:$0xff]
    %v1539 = vld [vmem:[%s3 + $0x118] sm:$0xff]
    %v1540 = vld [vmem:[%s3 + $0x120] sm:$0xff]
    %v1541 = vld [vmem:[%s3 + $0x128] sm:$0xff]
    %v1542 = vld [vmem:[%s3 + $0x130] sm:$0xff]
    %v1543 = vld [vmem:[%s3 + $0x138] sm:$0xff]
    %v1544 = vld [vmem:[%s4] sm:$0x1]
    %v1546 = vlaneseq
    %v1547 = vshrl.u32 %v1546, 7
    %v1548 = vsub.s32 0, %v1547
    %v1549 = vrot.slane %v1544, %v1548
    %vm1551 = vcmask 523264
    %v1553 = vsel %vm1551, %v1503, 0
    %1555 = vmatprep.subr.mxu0 0.0
    %1556 = vmatpush1.msra.mxu0 %v1504
    %1557 = vmatprep.subr.mxu0 0.0
    %1558 = vmatpush1.msra.mxu0 %v1505
    %1559 = vmatprep.subr.mxu0 0.0
    %1560 = vmatpush1.msra.mxu0 %v1506
    %1561 = vmatprep.subr.mxu0 0.0
    %1562 = vmatpush1.msra.mxu0 %v1507
    %1563 = vmatprep.subr.mxu0 0.0
    %1564 = vmatpush1.msra.mxu0 %v1508
    %1565 = vmatprep.subr.mxu0 0.0
    %1566 = vmatpush1.msra.mxu0 %v1509
    %1567 = vmatprep.subr.mxu0 0.0
    %1568 = vmatpush1.msra.mxu0 %v1510
    %1569 = vmatprep.subr.mxu0 0.0
    %1570 = vmatpush1.msra.mxu0 %v1511
    %1571 = vmatprep.subr.mxu0 0.0
    %1572 = vmatpush1.msra.mxu0 %v1512
    %1573 = vmatprep.subr.mxu0 0.0
    %1574 = vmatpush1.msra.mxu0 %v1513
    %1575 = vmatprep.subr.mxu0 0.0
    %1576 = vmatpush1.msra.mxu0 %v1514
    %1577 = vmatprep.subr.mxu0 0.0
    %1578 = vmatpush1.msra.mxu0 %v1515
    %1579 = vmatprep.subr.mxu0 0.0
    %1580 = vmatpush1.msra.mxu0 %v1516
    %1581 = vmatprep.subr.mxu0 0.0
    %1582 = vmatpush1.msra.mxu0 %v1517
    %1583 = vmatprep.subr.mxu0 0.0
    %1584 = vmatpush1.msra.mxu0 %v1518
    %1585 = vmatprep.subr.mxu0 0.0
    %1586 = vmatpush1.msra.mxu0 %v1519
    %1587 = vmatprep.subr.mxu0 0.0
    %1588 = vmatpush1.msra.mxu0 %v1520
    %1589 = vmatprep.subr.mxu0 0.0
    %1590 = vmatpush1.msra.mxu0 %v1521
    %1591 = vmatprep.subr.mxu0 0.0
    %1592 = vmatpush1.msra.mxu0 %v1522
    %1593 = vmatprep.subr.mxu0 0.0
    %1594 = vmatpush1.msra.mxu0 %v1523
    %1595 = vmatprep.subr.mxu0 0.0
    %1596 = vmatpush1.msra.mxu0 %v1524
    %1597 = vmatprep.subr.mxu0 0.0
    %1598 = vmatpush1.msra.mxu0 %v1525
    %1599 = vmatprep.subr.mxu0 0.0
    %1600 = vmatpush1.msra.mxu0 %v1526
    %1601 = vmatprep.subr.mxu0 0.0
    %1602 = vmatpush1.msra.mxu0 %v1527
    %1603 = vmatprep.subr.mxu0 0.0
    %1604 = vmatpush1.msra.mxu0 %v1528
    %1605 = vmatprep.subr.mxu0 0.0
    %1606 = vmatpush1.msra.mxu0 %v1529
    %1607 = vmatprep.subr.mxu0 0.0
    %1608 = vmatpush1.msra.mxu0 %v1530
    %1609 = vmatprep.subr.mxu0 0.0
    %1610 = vmatpush1.msra.mxu0 %v1531
    %1611 = vmatprep.subr.mxu0 0.0
    %1612 = vmatpush1.msra.mxu0 %v1532
    %1613 = vmatprep.subr.mxu0 0.0
    %1614 = vmatpush1.msra.mxu0 %v1533
    %1615 = vmatprep.subr.mxu0 0.0
    %1616 = vmatpush1.msra.mxu0 %v1534
    %1617 = vmatprep.subr.mxu0 0.0
    %1618 = vmatpush1.msra.mxu0 %v1535
    %1619 = vmatprep.mubr.f32.mxu0 %v1502
    %1620 = vmatmul.mubr.f32.gmra.mrb[0].mxu0 %v1501
    %v1621 = vpop.f32.mrb[0].mxu0
    %v1622 = vadd.f32 %v1549, %v1621
    %v1623 = vpop.f32.mrb[0].mxu0
    %1624 = vdwg.mxu0
    %1625 = vmatprep.subr.mxu0 0.0
    %1626 = vmatpush1.msra.mxu0 %v1536
    %1627 = vmatprep.subr.mxu0 0.0
    %1628 = vmatpush1.msra.mxu0 %v1537
    %1629 = vmatprep.subr.mxu0 0.0
    %1630 = vmatpush1.msra.mxu0 %v1538
    %1631 = vmatprep.subr.mxu0 0.0
    %1632 = vmatpush1.msra.mxu0 %v1539
    %1633 = vmatprep.subr.mxu0 0.0
    %1634 = vmatpush1.msra.mxu0 %v1540
    %1635 = vmatprep.subr.mxu0 0.0
    %1636 = vmatpush1.msra.mxu0 %v1541
    %1637 = vmatprep.subr.mxu0 0.0
    %1638 = vmatpush1.msra.mxu0 %v1542
    %1639 = vmatprep.subr.mxu0 0.0
    %1640 = vmatpush1.msra.mxu0 %v1543
    %1641 = vmatprep.subr.mxu0 0.0
    %1642 = vmatpush1.msra.mxu0 0.0
    %1643 = vmatprep.subr.mxu0 0.0
    %1644 = vmatpush1.msra.mxu0 0.0
    %1645 = vmatprep.subr.mxu0 0.0
    %1646 = vmatpush1.msra.mxu0 0.0
    %1647 = vmatprep.subr.mxu0 0.0
    %1648 = vmatpush1.msra.mxu0 0.0
    %1649 = vmatprep.subr.mxu0 0.0
    %1650 = vmatpush1.msra.mxu0 0.0
    %1651 = vmatprep.subr.mxu0 0.0
    %1652 = vmatpush1.msra.mxu0 0.0
    %1653 = vmatprep.subr.mxu0 0.0
    %1654 = vmatpush1.msra.mxu0 0.0
    %1655 = vmatprep.subr.mxu0 0.0
    %1656 = vmatpush1.msra.mxu0 0.0
    %1657 = vmatprep.subr.mxu0 0.0
    %1658 = vmatpush1.msra.mxu0 0.0
    %1659 = vmatprep.subr.mxu0 0.0
    %1660 = vmatpush1.msra.mxu0 0.0
    %1661 = vmatprep.subr.mxu0 0.0
    %1662 = vmatpush1.msra.mxu0 0.0
    %1663 = vmatprep.subr.mxu0 0.0
    %1664 = vmatpush1.msra.mxu0 0.0
    %1665 = vmatprep.subr.mxu0 0.0
    %1666 = vmatpush1.msra.mxu0 0.0
    %1667 = vmatprep.subr.mxu0 0.0
    %1668 = vmatpush1.msra.mxu0 0.0
    %1669 = vmatprep.subr.mxu0 0.0
    %1670 = vmatpush1.msra.mxu0 0.0
    %1671 = vmatprep.subr.mxu0 0.0
    %1672 = vmatpush1.msra.mxu0 0.0
    %1673 = vmatprep.subr.mxu0 0.0
    %1674 = vmatpush1.msra.mxu0 0.0
    %1675 = vmatprep.subr.mxu0 0.0
    %1676 = vmatpush1.msra.mxu0 0.0
    %1677 = vmatprep.subr.mxu0 0.0
    %1678 = vmatpush1.msra.mxu0 0.0
    %1679 = vmatprep.subr.mxu0 0.0
    %1680 = vmatpush1.msra.mxu0 0.0
    %1681 = vmatprep.subr.mxu0 0.0
    %1682 = vmatpush1.msra.mxu0 0.0
    %1683 = vmatprep.subr.mxu0 0.0
    %1684 = vmatpush1.msra.mxu0 0.0
    %1685 = vmatprep.subr.mxu0 0.0
    %1686 = vmatpush1.msra.mxu0 0.0
    %1687 = vmatprep.subr.mxu0 0.0
    %1688 = vmatpush1.msra.mxu0 0.0
    %1689 = vmatprep.mubr.f32.mxu0 0.0
    %1690 = vmatmul.mubr.f32.gmra.mrb[0].mxu0 %v1553
    %v1691 = vpop.f32.mrb[0].mxu0
    %v1692 = vadd.f32 %v1622, %v1691
    %v1693 = vpop.f32.mrb[0].mxu0
    %1694 = vdwg.mxu0
    %v1695 = vmax.f32 %v1692, 0.0
    %v1696 = vld [vmem:[%s5] sm:$0xff]
    %v1697 = vld [vmem:[%s5 + $0x8] sm:$0xff]
    %v1698 = vld [vmem:[%s5 + $0x10] sm:$0xff]
    %v1699 = vld [vmem:[%s5 + $0x18] sm:$0xff]
    %v1700 = vld [vmem:[%s5 + $0x20] sm:$0xff]
    %v1701 = vld [vmem:[%s5 + $0x28] sm:$0xff]
    %v1702 = vld [vmem:[%s5 + $0x30] sm:$0x3]
    %v1703 = vld [vmem:[%s6] sm:$0x1]
    %v1705 = vlaneseq
    %v1706 = vshrl.u32 %v1705, 7
    %v1707 = vsub.s32 0, %v1706
    %v1708 = vrot.slane %v1703, %v1707
    %vm1710 = vcmask 408576
    %v1712 = vsel %vm1710, %v1695, 0
    %vm1714 = vcmask 1041408
    %v1716 = vsel %vm1714, %v1702, 0
    %1718 = vmatprep.subr.mxu0 0.0
    %1719 = vmatpush1.msra.mxu0 %v1696
    %1720 = vmatprep.subr.mxu0 0.0
    %1721 = vmatpush1.msra.mxu0 %v1697
    %1722 = vmatprep.subr.mxu0 0.0
    %1723 = vmatpush1.msra.mxu0 %v1698
    %1724 = vmatprep.subr.mxu0 0.0
    %1725 = vmatpush1.msra.mxu0 %v1699
    %1726 = vmatprep.subr.mxu0 0.0
    %1727 = vmatpush1.msra.mxu0 %v1700
    %1728 = vmatprep.subr.mxu0 0.0
    %1729 = vmatpush1.msra.mxu0 %v1701
    %1730 = vmatprep.subr.mxu0 0.0
    %1731 = vmatpush1.msra.mxu0 %v1716
    %1732 = vmatprep.subr.mxu0 0.0
    %1733 = vmatpush1.msra.mxu0 0.0
    %1734 = vmatprep.subr.mxu0 0.0
    %1735 = vmatpush1.msra.mxu0 0.0
    %1736 = vmatprep.subr.mxu0 0.0
    %1737 = vmatpush1.msra.mxu0 0.0
    %1738 = vmatprep.subr.mxu0 0.0
    %1739 = vmatpush1.msra.mxu0 0.0
    %1740 = vmatprep.subr.mxu0 0.0
    %1741 = vmatpush1.msra.mxu0 0.0
    %1742 = vmatprep.subr.mxu0 0.0
    %1743 = vmatpush1.msra.mxu0 0.0
    %1744 = vmatprep.subr.mxu0 0.0
    %1745 = vmatpush1.msra.mxu0 0.0
    %1746 = vmatprep.subr.mxu0 0.0
    %1747 = vmatpush1.msra.mxu0 0.0
    %1748 = vmatprep.subr.mxu0 0.0
    %1749 = vmatpush1.msra.mxu0 0.0
    %1750 = vmatprep.subr.mxu0 0.0
    %1751 = vmatpush1.msra.mxu0 0.0
    %1752 = vmatprep.subr.mxu0 0.0
    %1753 = vmatpush1.msra.mxu0 0.0
    %1754 = vmatprep.subr.mxu0 0.0
    %1755 = vmatpush1.msra.mxu0 0.0
    %1756 = vmatprep.subr.mxu0 0.0
    %1757 = vmatpush1.msra.mxu0 0.0
    %1758 = vmatprep.subr.mxu0 0.0
    %1759 = vmatpush1.msra.mxu0 0.0
    %1760 = vmatprep.subr.mxu0 0.0
    %1761 = vmatpush1.msra.mxu0 0.0
    %1762 = vmatprep.subr.mxu0 0.0
    %1763 = vmatpush1.msra.mxu0 0.0
    %1764 = vmatprep.subr.mxu0 0.0
    %1765 = vmatpush1.msra.mxu0 0.0
    %1766 = vmatprep.subr.mxu0 0.0
    %1767 = vmatpush1.msra.mxu0 0.0
    %1768 = vmatprep.subr.mxu0 0.0
    %1769 = vmatpush1.msra.mxu0 0.0
    %1770 = vmatprep.subr.mxu0 0.0
    %1771 = vmatpush1.msra.mxu0 0.0
    %1772 = vmatprep.subr.mxu0 0.0
    %1773 = vmatpush1.msra.mxu0 0.0
    %1774 = vmatprep.subr.mxu0 0.0
    %1775 = vmatpush1.msra.mxu0 0.0
    %1776 = vmatprep.subr.mxu0 0.0
    %1777 = vmatpush1.msra.mxu0 0.0
    %1778 = vmatprep.subr.mxu0 0.0
    %1779 = vmatpush1.msra.mxu0 0.0
    %1780 = vmatprep.subr.mxu0 0.0
    %1781 = vmatpush1.msra.mxu0 0.0
    %1782 = vmatprep.mubr.f32.mxu0 0.0
    %1783 = vmatmul.mubr.f32.gmra.mrb[0].mxu0 %v1712
    %v1784 = vpop.f32.mrb[0].mxu0
    %v1785 = vadd.f32 %v1708, %v1784
    %v1786 = vpop.f32.mrb[0].mxu0
    %1787 = vdwg.mxu0
    %v1788 = vsel %vm1714, %v1785, -inf
    %1789 = vmax.xlane.f32.xlu0 %v1788
    %v1790 = vpop.xlane.xlu0 %1789
    %v1791 = vsub.f32 %v1785, %v1790
    %v1792 = vmul.f32 %v1791, 1.442695
    %v1793 = vpow.pop %v1792
    %v1794 = vsel %vm1714, %v1793, 0.0
    %1795 = vadd.xlane.f32.xlu0 %v1794
    %v1796 = vpop.xlane.xlu0 %1795
    %v1797 = vlog2.pop %v1796
    %v1798 = vmul.f32 %v1797, 0.6931472
    %v1799 = vsub.f32 %v1791, %v1798
    %1800 = vst [vmem:[#allocation2] sm:$0x3] %v1799
    // Predicated region
    $region30: #{net1_forward.3} parent=1 // pred_check
      _
    $region31: #{net1_forward.3} parent=1 // pred_check_branch
      %1802 = sbr.rel (0) target = $region33
    $region32: #{net1_forward.3} parent=1 // pred_region
      %s1804 = ssub.s32 32, 32
      %1805 = vsyncadd [#allocation3], %s1804
      %s1807 = sshll.u32 [#allocation2], 4
      %s1808 = int_to_ptr.vmem [resolvable:$true] %s1807
      %1810 = dma.vmem_to_hbm [thread:$0]  %s1808, 32, %s7, [#allocation3]
    $region33: #{net1_forward.3} parent=1 // pred_fallthru
      _
    // Predicated region
    $region34: #{net1_forward.3} parent=1 // pred_check
      _
    $region35: #{net1_forward.3} parent=1 // pred_check_branch
      %1812 = sbr.rel (0) target = $region37
    $region36: #{net1_forward.3} parent=1 // pred_region
      %1813 = dma.done [#allocation3], 32
    $region37: #{net1_forward.3} parent=1 // pred_fallthru
      _
    %1814 = vsyncpa [#allocation3], 1

</llo_original>
